<compile_context>
chip_gen: v5e
topology: v5e:2x2
jax: 0.10.0
libtpu: 0.0.40
codegen_flags: <defaults>
</compile_context>

<pallas_src>
from functools import partial

import jax
import jax.numpy as jnp
from jax.experimental import pallas as pl
from jax.experimental.pallas import tpu as pltpu

NUM_STRIPES = 6
BN_EPS = 1e-5


def pcb_head_kernel(x_ref, wconv_ref, scale_ref, shift_ref, wlin_ref, blin_ref,
                    out1_ref, logits_ref, pooled_ref, *, sx, kx, W, tn, F, nc_pad):
    """Fused PCB head for one batch tile.

    x_ref      : [tn, H*W, C_in]   backbone feature map tile (NHWC flattened), bf16/f32
    wconv_ref  : [C_in, F]         local_conv weight * 1/(kx*W)  (1x1 conv == matmul)
    scale_ref  : [1, F]            BN eval-mode scale = gamma / sqrt(var + eps)  (f32)
    shift_ref  : [1, F]            BN eval-mode shift = beta - mean * scale      (f32)
    wlin_ref   : [6, F, nc_pad]    stacked per-stripe Linear weights (lane-padded)
    blin_ref   : [6, nc_pad]       stacked per-stripe Linear biases  (lane-padded, f32)
    out1_ref   : [tn, 6*F]         L2-normalized stripe features, lane-dense slab (f32)
    logits_ref : [tn, 6*nc_pad]    per-stripe class logits, lane-dense slab      (f32)
    pooled_ref : [6*tn, C_in]      VMEM scratch, MXU dtype
    """
    # 1) Stripe average pooling: f32 sum over contiguous row windows of the H*W axis,
    #    written stripe-major into the scratch (1/(kx*W) folded into wconv).
    for s in range(NUM_STRIPES):
        lo = s * sx * W
        pooled_ref[s * tn:(s + 1) * tn, :] = jnp.sum(
            x_ref[:, lo:lo + kx * W, :], axis=1, dtype=jnp.float32
        ).astype(pooled_ref.dtype)

    # 2) local_conv (1x1 conv, no bias) as ONE MXU matmul with M = 6*tn
    #    (bf16 operands, f32 accumulation).
    feat = jnp.dot(pooled_ref[...], wconv_ref[...],
                   preferred_element_type=jnp.float32)              # [6*tn, F]

    # 3) out1 = feat / ||feat||_2 over channels (rsqrt on EUP).
    #    No epsilon, matching PyTorch's raw divide (zero stripes -> inf/NaN there too).
    inv_nrm = jax.lax.rsqrt(jnp.sum(feat * feat, axis=-1, keepdims=True))
    out1 = feat * inv_nrm                                           # [6*tn, F]

    # 4) feat_bn2d (eval, pre-folded) + ReLU; cast to the classifier MXU dtype.
    act = jnp.maximum(feat * scale_ref[...] + shift_ref[...], 0.0)  # [6*tn, F] f32
    act = act.astype(wlin_ref.dtype)

    # 5) Lane-dense slab stores + per-stripe classifier (static unroll over stripes).
    for s in range(NUM_STRIPES):
        rows = slice(s * tn, (s + 1) * tn)
        out1_ref[:, s * F:(s + 1) * F] = out1[rows]                 # [tn, F] chunk
        logits_ref[:, s * nc_pad:(s + 1) * nc_pad] = (
            jnp.dot(act[rows], wlin_ref[s], preferred_element_type=jnp.float32)
            + blin_ref[s:s + 1, :])                                 # [tn, nc_pad] chunk


def _round_up(v, m):
    return ((v + m - 1) // m) * m


def _physical_vmem_bytes():
    """Per-core VMEM capacity; conservative 64 MiB (v7x-sized) fallback."""
    try:
        info = pltpu.get_tpu_info()
        cap = getattr(info, "vmem_capacity_bytes", None)
        if cap:
            return int(cap)
    except Exception:
        pass
    return 64 * 1024 * 1024


def _estimate_vmem_bytes(tn, hw, c_in, F, nc_pad, x_bytes, w_bytes):
    x_tile = 2 * tn * hw * c_in * x_bytes                         # double-buffered x
    outs = 2 * tn * NUM_STRIPES * (F + nc_pad) * 4                # double-buffered f32 outs
    weights = (c_in * F + NUM_STRIPES * F * nc_pad
               + NUM_STRIPES * nc_pad) * w_bytes + 2 * F * 4      # single-buffered weights
    scratch = NUM_STRIPES * tn * c_in * w_bytes                   # pooled scratch
    return x_tile + outs + weights + scratch


def _pick_batch_tile(n, budget, hw, c_in, F, nc_pad, x_bytes, w_bytes, max_tile):
    """Largest 8-aligned batch tile that fits the VMEM budget; also caps the tile so
    the grid has >= ~4 steps when the batch allows (pipelining / megacore balance)."""
    grid_cap = max(8, _round_up(-(-n // 4), 8))
    cap = max(8, min(_round_up(max_tile, 8), _round_up(n, 8), grid_cap))
    tn = 8
    for cand in range(cap, 7, -8):
        if _estimate_vmem_bytes(cand, hw, c_in, F, nc_pad, x_bytes, w_bytes) <= budget:
            tn = cand
            break
    return tn


def pcb_forward(x_nhwc, params, *, max_batch_tile=32,
                x_dtype=jnp.bfloat16, mxu_dtype=jnp.bfloat16):
    """Mirrors PCB_model.forward (post-backbone part).

    Takes the backbone feature map in NHWC layout [N, H, W, C] (JAX backbones are
    NHWC-native, so there is no host-side repack of x).
    Returns (out1 [N, F, 6, 1], (c0..c5) each [N, num_classes])."""
    N, H, W, C = x_nhwc.shape
    sx = H // NUM_STRIPES
    kx = H - sx * (NUM_STRIPES - 1)
    F = params["wconv"].shape[1]
    nc = params["wlin"].shape[2]
    nc_pad = _round_up(max(nc, 1), 128)      # lane-dense classifier output width

    x_bytes = jnp.dtype(x_dtype).itemsize
    w_bytes = jnp.dtype(mxu_dtype).itemsize

    # Per-generation VMEM sizing: <= ~52 MiB on 64 MiB parts (v7x), up to 100 MiB on
    # 128 MiB parts (v5e/v6e); size the batch tile against ~85% of that limit.
    phys_vmem = _physical_vmem_bytes()
    vmem_limit = max(min(phys_vmem - 12 * 1024 * 1024, 100 * 1024 * 1024),
                     32 * 1024 * 1024)
    budget = int(vmem_limit * 0.85)

    tn = _pick_batch_tile(N, budget, H * W, C, F, nc_pad, x_bytes, w_bytes,
                          max_batch_tile)

    # NHWC -> [N, H*W, C] merges contiguous dims: metadata-only, no HBM pass over x.
    x_flat = x_nhwc.astype(x_dtype).reshape(N, H * W, C)

    # Pad batch to a multiple of the tile (never a single giant unpipelined block).
    n_pad = _round_up(N, tn)
    if n_pad != N:
        x_flat = jnp.pad(x_flat, ((0, n_pad - N), (0, 0), (0, 0)))
    nb = n_pad // tn

    # Host-side weight prep (all tiny vs. x traffic).
    wconv = (params["wconv"] * (1.0 / float(kx * W))).astype(mxu_dtype)  # fold avg-pool
    scale = (params["gamma"] * jax.lax.rsqrt(params["rvar"] + BN_EPS)).astype(jnp.float32)
    shift = (params["beta"] - params["rmean"] * scale).astype(jnp.float32)
    wlin = params["wlin"].astype(mxu_dtype)
    blin = params["blin"].astype(jnp.float32)
    if nc_pad != nc:
        wlin = jnp.pad(wlin, ((0, 0), (0, 0), (0, nc_pad - nc)))
        blin = jnp.pad(blin, ((0, 0), (0, nc_pad - nc)))

    kernel = partial(pcb_head_kernel, sx=sx, kx=kx, W=W, tn=tn, F=F, nc_pad=nc_pad)

    def _build_in_specs(single_buffer_weights):
        def wspec(shape, imap):
            if single_buffer_weights:
                return pl.BlockSpec(shape, imap, pipeline_mode=pl.Buffered(1))
            return pl.BlockSpec(shape, imap)
        return [
            pl.BlockSpec((tn, H * W, C), lambda i: (i, 0, 0)),        # x: pipelined
            wspec((C, F), lambda i: (0, 0)),                          # grid-invariant
            wspec((1, F), lambda i: (0, 0)),
            wspec((1, F), lambda i: (0, 0)),
            wspec((NUM_STRIPES, F, nc_pad), lambda i: (0, 0, 0)),
            wspec((NUM_STRIPES, nc_pad), lambda i: (0, 0)),
        ]

    def _run(single_buffer_weights):
        return pl.pallas_call(
            kernel,
            grid=(nb,),
            in_specs=_build_in_specs(single_buffer_weights),
            out_specs=(
                pl.BlockSpec((tn, NUM_STRIPES * F), lambda i: (i, 0)),
                pl.BlockSpec((tn, NUM_STRIPES * nc_pad), lambda i: (i, 0)),
            ),
            out_shape=(
                jax.ShapeDtypeStruct((n_pad, NUM_STRIPES * F), jnp.float32),
                jax.ShapeDtypeStruct((n_pad, NUM_STRIPES * nc_pad), jnp.float32),
            ),
            scratch_shapes=[pltpu.VMEM((NUM_STRIPES * tn, C), mxu_dtype)],
            compiler_params=pltpu.CompilerParams(
                dimension_semantics=("parallel",),      # megacore sharding on v7x
                vmem_limit_bytes=int(vmem_limit),
            ),
        )(x_flat, wconv, scale, shift, wlin, blin)

    try:
        out1_slab, logits_slab = _run(single_buffer_weights=True)
    except Exception:
        # TODO(synk): pl.Buffered(1) single-buffering of grid-invariant weights is
        # best-effort; fall back to default double-buffering if unsupported.
        out1_slab, logits_slab = _run(single_buffer_weights=False)

    out1_slab = out1_slab[:N]                                        # [N, 6*F]
    logits_slab = logits_slab[:N]                                    # [N, 6*nc_pad]

    # PyTorch out1 is [N, F, 6, 1]; slab is [N, stripe-major 6*F].
    out1 = jnp.transpose(out1_slab.reshape(N, NUM_STRIPES, F), (0, 2, 1))[:, :, :, None]
    preds = tuple(logits_slab[:, s * nc_pad:s * nc_pad + nc] for s in range(NUM_STRIPES))
    return out1, preds


def init_params(key, c_in, num_features, num_classes):
    k_conv, k_lin = jax.random.split(key)
    # local_conv: kaiming_normal, mode='fan_out' -> std = sqrt(2 / (num_features*1*1))
    std_conv = (2.0 / num_features) ** 0.5
    wconv = std_conv * jax.random.normal(k_conv, (c_in, num_features), jnp.float32)
    # feat_bn2d: weight=1, bias=0; running stats at init: mean=0, var=1
    gamma = jnp.ones((1, num_features), jnp.float32)
    beta = jnp.zeros((1, num_features), jnp.float32)
    rmean = jnp.zeros((1, num_features), jnp.float32)
    rvar = jnp.ones((1, num_features), jnp.float32)
    # instance0..5: normal(std=0.001) weights, zero bias; stored as [6, F, num_classes]
    wlin = 0.001 * jax.random.normal(
        k_lin, (NUM_STRIPES, num_features, num_classes), jnp.float32)
    blin = jnp.zeros((NUM_STRIPES, num_classes), jnp.float32)
    return dict(wconv=wconv, gamma=gamma, beta=beta, rmean=rmean, rvar=rvar,
                wlin=wlin, blin=blin)


def reference_forward(x_nhwc, params):
    """Plain-JAX (f32) reference of the same head, for correctness check."""
    N, H, W, C = x_nhwc.shape
    sx = H // NUM_STRIPES
    kx = H - sx * (NUM_STRIPES - 1)
    scale = params["gamma"] * jax.lax.rsqrt(params["rvar"] + BN_EPS)
    shift = params["beta"] - params["rmean"] * scale
    out1_list, pred_list = [], []
    for s in range(NUM_STRIPES):
        pooled = jnp.mean(x_nhwc[:, s * sx:s * sx + kx, :, :], axis=(1, 2))  # [N, C]
        feat = pooled @ params["wconv"]
        out1_list.append(feat / jnp.linalg.norm(feat, axis=-1, keepdims=True))
        act = jnp.maximum(feat * scale + shift, 0.0)
        pred_list.append(act @ params["wlin"][s] + params["blin"][s])
    out1 = jnp.stack(out1_list, axis=2)[:, :, :, None]  # [N, F, 6, 1]
    return out1, tuple(pred_list)


if __name__ == "__main__":
    # Small synthetic shapes consistent with the module (real model: C_in=2048, F=256).
    # N=32 with a batch tile of 8 gives a 4-step pipelined ("parallel") grid.
    N, C_IN, H, W = 32, 256, 12, 4
    NUM_FEATURES, NUM_CLASSES = 128, 16

    key = jax.random.PRNGKey(0)
    k_x, k_p = jax.random.split(key)
    # Post-backbone feature map in NHWC (JAX-native layout; no host repack of x).
    x = jax.random.normal(k_x, (N, H, W, C_IN), jnp.float32)
    params = init_params(k_p, C_IN, NUM_FEATURES, NUM_CLASSES)

    out1, preds = pcb_forward(x, params)          # bf16 x + bf16 MXU path by default
    out1 = jax.block_until_ready(out1)
    preds = jax.block_until_ready(preds)

    # Correctness check vs. plain-JAX f32 reference (tolerance loosened for bf16).
    out1_ref, preds_ref = reference_forward(x, params)
    assert out1.shape == (N, NUM_FEATURES, NUM_STRIPES, 1)
    assert all(p.shape == (N, NUM_CLASSES) for p in preds)
    assert jnp.allclose(out1, out1_ref, atol=3e-2, rtol=3e-2)
    for p, pr in zip(preds, preds_ref):
        assert jnp.allclose(p, pr, atol=3e-2, rtol=3e-2)

    print("KERNEL_OK")
</pallas_src>

<mosaic_0001>
module attributes {stable_mosaic.version = 11 : i64} {
  func.func @pcb_head_kernel(%arg0: i32, %arg1: memref<8x48x256xbf16, #tpu.memory_space<vmem>>, %arg2: memref<256x128xbf16, #tpu.memory_space<vmem>>, %arg3: memref<1x128xf32, #tpu.memory_space<vmem>>, %arg4: memref<1x128xf32, #tpu.memory_space<vmem>>, %arg5: memref<6x128x128xbf16, #tpu.memory_space<vmem>>, %arg6: memref<6x128xf32, #tpu.memory_space<vmem>>, %arg7: memref<8x768xf32, #tpu.memory_space<vmem>>, %arg8: memref<8x768xf32, #tpu.memory_space<vmem>>, %arg9: memref<48x256xbf16, #tpu.memory_space<vmem>>) attributes {dimension_semantics = [#tpu.dimension_semantics<parallel>], iteration_bounds = array<i64: 4>, scalar_prefetch = 0 : i64, scratch_operands = 1 : i64, tpu.core_type = #tpu.core_type<tc>, window_params = [{transform_indices = @transform_0, window_bounds = array<i64: 8, 48, 256>}, {pipeline_mode = #tpu.pipeline_mode<synchronous>, transform_indices = @transform_1, window_bounds = array<i64: 256, 128>}, {pipeline_mode = #tpu.pipeline_mode<synchronous>, transform_indices = @transform_2, window_bounds = array<i64: 1, 128>}, {pipeline_mode = #tpu.pipeline_mode<synchronous>, transform_indices = @transform_3, window_bounds = array<i64: 1, 128>}, {pipeline_mode = #tpu.pipeline_mode<synchronous>, transform_indices = @transform_4, window_bounds = array<i64: 6, 128, 128>}, {pipeline_mode = #tpu.pipeline_mode<synchronous>, transform_indices = @transform_5, window_bounds = array<i64: 6, 128>}, {transform_indices = @transform_6, window_bounds = array<i64: 8, 768>}, {transform_indices = @transform_7, window_bounds = array<i64: 8, 768>}]} {
    %c0 = arith.constant 0 : index
    %c0_0 = arith.constant 0 : index
    %c0_1 = arith.constant 0 : index
    %0 = vector.load %arg1[%c0, %c0_0, %c0_1] : memref<8x48x256xbf16, #tpu.memory_space<vmem>>, vector<8x8x256xbf16>
    %1 = arith.extf %0 : vector<8x8x256xbf16> to vector<8x8x256xf32>
    %cst = arith.constant dense<0.000000e+00> : vector<8x256xf32>
    %2 = vector.multi_reduction <add>, %1, %cst [1] : vector<8x8x256xf32> to vector<8x256xf32>
    %3 = arith.truncf %2 : vector<8x256xf32> to vector<8x256xbf16>
    %c0_2 = arith.constant 0 : index
    %c0_3 = arith.constant 0 : index
    %4 = vector.load %arg9[%c0_2, %c0_3] : memref<48x256xbf16, #tpu.memory_space<vmem>>, vector<8x256xbf16>
    tpu.vector_store %arg9[%c0_2, %c0_3], %3 {strides = array<i32>} : memref<48x256xbf16, #tpu.memory_space<vmem>>, vector<8x256xbf16>,
    %c0_4 = arith.constant 0 : index
    %c8 = arith.constant 8 : index
    %c0_5 = arith.constant 0 : index
    %5 = vector.load %arg1[%c0_4, %c8, %c0_5] : memref<8x48x256xbf16, #tpu.memory_space<vmem>>, vector<8x8x256xbf16>
    %6 = arith.extf %5 : vector<8x8x256xbf16> to vector<8x8x256xf32>
    %cst_6 = arith.constant dense<0.000000e+00> : vector<8x256xf32>
    %7 = vector.multi_reduction <add>, %6, %cst_6 [1] : vector<8x8x256xf32> to vector<8x256xf32>
    %8 = arith.truncf %7 : vector<8x256xf32> to vector<8x256xbf16>
    %c8_7 = arith.constant 8 : index
    %c0_8 = arith.constant 0 : index
    %9 = vector.load %arg9[%c8_7, %c0_8] : memref<48x256xbf16, #tpu.memory_space<vmem>>, vector<8x256xbf16>
    tpu.vector_store %arg9[%c8_7, %c0_8], %8 {strides = array<i32>} : memref<48x256xbf16, #tpu.memory_space<vmem>>, vector<8x256xbf16>,
    %c0_9 = arith.constant 0 : index
    %c16 = arith.constant 16 : index
    %c0_10 = arith.constant 0 : index
    %10 = vector.load %arg1[%c0_9, %c16, %c0_10] : memref<8x48x256xbf16, #tpu.memory_space<vmem>>, vector<8x8x256xbf16>
    %11 = arith.extf %10 : vector<8x8x256xbf16> to vector<8x8x256xf32>
    %cst_11 = arith.constant dense<0.000000e+00> : vector<8x256xf32>
    %12 = vector.multi_reduction <add>, %11, %cst_11 [1] : vector<8x8x256xf32> to vector<8x256xf32>
    %13 = arith.truncf %12 : vector<8x256xf32> to vector<8x256xbf16>
    %c16_12 = arith.constant 16 : index
    %c0_13 = arith.constant 0 : index
    %14 = vector.load %arg9[%c16_12, %c0_13] : memref<48x256xbf16, #tpu.memory_space<vmem>>, vector<8x256xbf16>
    tpu.vector_store %arg9[%c16_12, %c0_13], %13 {strides = array<i32>} : memref<48x256xbf16, #tpu.memory_space<vmem>>, vector<8x256xbf16>,
    %c0_14 = arith.constant 0 : index
    %c24 = arith.constant 24 : index
    %c0_15 = arith.constant 0 : index
    %15 = vector.load %arg1[%c0_14, %c24, %c0_15] : memref<8x48x256xbf16, #tpu.memory_space<vmem>>, vector<8x8x256xbf16>
    %16 = arith.extf %15 : vector<8x8x256xbf16> to vector<8x8x256xf32>
    %cst_16 = arith.constant dense<0.000000e+00> : vector<8x256xf32>
    %17 = vector.multi_reduction <add>, %16, %cst_16 [1] : vector<8x8x256xf32> to vector<8x256xf32>
    %18 = arith.truncf %17 : vector<8x256xf32> to vector<8x256xbf16>
    %c24_17 = arith.constant 24 : index
    %c0_18 = arith.constant 0 : index
    %19 = vector.load %arg9[%c24_17, %c0_18] : memref<48x256xbf16, #tpu.memory_space<vmem>>, vector<8x256xbf16>
    tpu.vector_store %arg9[%c24_17, %c0_18], %18 {strides = array<i32>} : memref<48x256xbf16, #tpu.memory_space<vmem>>, vector<8x256xbf16>,
    %c0_19 = arith.constant 0 : index
    %c32 = arith.constant 32 : index
    %c0_20 = arith.constant 0 : index
    %20 = vector.load %arg1[%c0_19, %c32, %c0_20] : memref<8x48x256xbf16, #tpu.memory_space<vmem>>, vector<8x8x256xbf16>
    %21 = arith.extf %20 : vector<8x8x256xbf16> to vector<8x8x256xf32>
    %cst_21 = arith.constant dense<0.000000e+00> : vector<8x256xf32>
    %22 = vector.multi_reduction <add>, %21, %cst_21 [1] : vector<8x8x256xf32> to vector<8x256xf32>
    %23 = arith.truncf %22 : vector<8x256xf32> to vector<8x256xbf16>
    %c32_22 = arith.constant 32 : index
    %c0_23 = arith.constant 0 : index
    %24 = vector.load %arg9[%c32_22, %c0_23] : memref<48x256xbf16, #tpu.memory_space<vmem>>, vector<8x256xbf16>
    tpu.vector_store %arg9[%c32_22, %c0_23], %23 {strides = array<i32>} : memref<48x256xbf16, #tpu.memory_space<vmem>>, vector<8x256xbf16>,
    %c0_24 = arith.constant 0 : index
    %c40 = arith.constant 40 : index
    %c0_25 = arith.constant 0 : index
    %25 = vector.load %arg1[%c0_24, %c40, %c0_25] : memref<8x48x256xbf16, #tpu.memory_space<vmem>>, vector<8x8x256xbf16>
    %26 = arith.extf %25 : vector<8x8x256xbf16> to vector<8x8x256xf32>
    %cst_26 = arith.constant dense<0.000000e+00> : vector<8x256xf32>
    %27 = vector.multi_reduction <add>, %26, %cst_26 [1] : vector<8x8x256xf32> to vector<8x256xf32>
    %28 = arith.truncf %27 : vector<8x256xf32> to vector<8x256xbf16>
    %c40_27 = arith.constant 40 : index
    %c0_28 = arith.constant 0 : index
    %29 = vector.load %arg9[%c40_27, %c0_28] : memref<48x256xbf16, #tpu.memory_space<vmem>>, vector<8x256xbf16>
    tpu.vector_store %arg9[%c40_27, %c0_28], %28 {strides = array<i32>} : memref<48x256xbf16, #tpu.memory_space<vmem>>, vector<8x256xbf16>,
    %c0_29 = arith.constant 0 : index
    %c0_30 = arith.constant 0 : index
    %30 = vector.load %arg9[%c0_29, %c0_30] : memref<48x256xbf16, #tpu.memory_space<vmem>>, vector<48x256xbf16>
    %c0_31 = arith.constant 0 : index
    %c0_32 = arith.constant 0 : index
    %31 = vector.load %arg2[%c0_31, %c0_32] : memref<256x128xbf16, #tpu.memory_space<vmem>>, vector<256x128xbf16>
    %cst_33 = arith.constant dense<0.000000e+00> : vector<48x128xf32>
    %32 = tpu.matmul %30, %31, %cst_33 {dimension_numbers = #tpu.dot_dimension_numbers<[1], [0], [0], [1], [0, 0, 1, 1], [], []>} : vector<48x256xbf16>, vector<256x128xbf16>, vector<48x128xf32> -> vector<48x128xf32>
    %33 = arith.mulf %32, %32 : vector<48x128xf32>
    %cst_34 = arith.constant dense<0.000000e+00> : vector<48xf32>
    %34 = vector.multi_reduction <add>, %33, %cst_34 [1] : vector<48x128xf32> to vector<48xf32>
    %35 = vector.shape_cast %34 : vector<48xf32> to vector<48x1xf32>
    %36 = math.rsqrt %35 : vector<48x1xf32>
    %37 = vector.broadcast %36 : vector<48x1xf32> to vector<48x128xf32>
    %38 = arith.mulf %32, %37 : vector<48x128xf32>
    %c0_35 = arith.constant 0 : index
    %c0_36 = arith.constant 0 : index
    %39 = vector.load %arg3[%c0_35, %c0_36] : memref<1x128xf32, #tpu.memory_space<vmem>>, vector<1x128xf32>
    %40 = vector.broadcast %39 : vector<1x128xf32> to vector<48x128xf32>
    %41 = arith.mulf %32, %40 : vector<48x128xf32>
    %c0_37 = arith.constant 0 : index
    %c0_38 = arith.constant 0 : index
    %42 = vector.load %arg4[%c0_37, %c0_38] : memref<1x128xf32, #tpu.memory_space<vmem>>, vector<1x128xf32>
    %43 = vector.broadcast %42 : vector<1x128xf32> to vector<48x128xf32>
    %44 = arith.addf %41, %43 : vector<48x128xf32>
    %cst_39 = arith.constant 0.000000e+00 : f32
    %45 = vector.broadcast %cst_39 : f32 to vector<48x128xf32>
    %46 = arith.maximumf %44, %45 : vector<48x128xf32>
    %47 = arith.truncf %46 : vector<48x128xf32> to vector<48x128xbf16>
    %48 = vector.extract_strided_slice %38 {offsets = [0, 0], sizes = [8, 128], strides = [1, 1]} : vector<48x128xf32> to vector<8x128xf32>
    %c0_40 = arith.constant 0 : index
    %c0_41 = arith.constant 0 : index
    %49 = vector.load %arg7[%c0_40, %c0_41] : memref<8x768xf32, #tpu.memory_space<vmem>>, vector<8x128xf32>
    tpu.vector_store %arg7[%c0_40, %c0_41], %48 {strides = array<i32>} : memref<8x768xf32, #tpu.memory_space<vmem>>, vector<8x128xf32>,
    %50 = vector.extract_strided_slice %47 {offsets = [0, 0], sizes = [8, 128], strides = [1, 1]} : vector<48x128xbf16> to vector<8x128xbf16>
    %c0_42 = arith.constant 0 : index
    %c0_43 = arith.constant 0 : index
    %c0_44 = arith.constant 0 : index
    %51 = vector.load %arg5[%c0_42, %c0_43, %c0_44] : memref<6x128x128xbf16, #tpu.memory_space<vmem>>, vector<1x128x128xbf16>
    %52 = vector.shape_cast %51 : vector<1x128x128xbf16> to vector<128x128xbf16>
    %cst_45 = arith.constant dense<0.000000e+00> : vector<8x128xf32>
    %53 = tpu.matmul %50, %52, %cst_45 {dimension_numbers = #tpu.dot_dimension_numbers<[1], [0], [0], [1], [0, 0, 1, 1], [], []>} : vector<8x128xbf16>, vector<128x128xbf16>, vector<8x128xf32> -> vector<8x128xf32>
    %c0_46 = arith.constant 0 : index
    %c0_47 = arith.constant 0 : index
    %54 = vector.load %arg6[%c0_46, %c0_47] : memref<6x128xf32, #tpu.memory_space<vmem>>, vector<1x128xf32>
    %55 = vector.broadcast %54 : vector<1x128xf32> to vector<8x128xf32>
    %56 = arith.addf %53, %55 : vector<8x128xf32>
    %c0_48 = arith.constant 0 : index
    %c0_49 = arith.constant 0 : index
    %57 = vector.load %arg8[%c0_48, %c0_49] : memref<8x768xf32, #tpu.memory_space<vmem>>, vector<8x128xf32>
    tpu.vector_store %arg8[%c0_48, %c0_49], %56 {strides = array<i32>} : memref<8x768xf32, #tpu.memory_space<vmem>>, vector<8x128xf32>,
    %58 = vector.extract_strided_slice %38 {offsets = [8, 0], sizes = [8, 128], strides = [1, 1]} : vector<48x128xf32> to vector<8x128xf32>
    %c0_50 = arith.constant 0 : index
    %c128 = arith.constant 128 : index
    %59 = vector.load %arg7[%c0_50, %c128] : memref<8x768xf32, #tpu.memory_space<vmem>>, vector<8x128xf32>
    tpu.vector_store %arg7[%c0_50, %c128], %58 {strides = array<i32>} : memref<8x768xf32, #tpu.memory_space<vmem>>, vector<8x128xf32>,
    %60 = vector.extract_strided_slice %47 {offsets = [8, 0], sizes = [8, 128], strides = [1, 1]} : vector<48x128xbf16> to vector<8x128xbf16>
    %c1 = arith.constant 1 : index
    %c0_51 = arith.constant 0 : index
    %c0_52 = arith.constant 0 : index
    %61 = vector.load %arg5[%c1, %c0_51, %c0_52] : memref<6x128x128xbf16, #tpu.memory_space<vmem>>, vector<1x128x128xbf16>
    %62 = vector.shape_cast %61 : vector<1x128x128xbf16> to vector<128x128xbf16>
    %cst_53 = arith.constant dense<0.000000e+00> : vector<8x128xf32>
    %63 = tpu.matmul %60, %62, %cst_53 {dimension_numbers = #tpu.dot_dimension_numbers<[1], [0], [0], [1], [0, 0, 1, 1], [], []>} : vector<8x128xbf16>, vector<128x128xbf16>, vector<8x128xf32> -> vector<8x128xf32>
    %c1_54 = arith.constant 1 : index
    %c0_55 = arith.constant 0 : index
    %64 = vector.load %arg6[%c1_54, %c0_55] : memref<6x128xf32, #tpu.memory_space<vmem>>, vector<1x128xf32>
    %65 = vector.broadcast %64 : vector<1x128xf32> to vector<8x128xf32>
    %66 = arith.addf %63, %65 : vector<8x128xf32>
    %c0_56 = arith.constant 0 : index
    %c128_57 = arith.constant 128 : index
    %67 = vector.load %arg8[%c0_56, %c128_57] : memref<8x768xf32, #tpu.memory_space<vmem>>, vector<8x128xf32>
    tpu.vector_store %arg8[%c0_56, %c128_57], %66 {strides = array<i32>} : memref<8x768xf32, #tpu.memory_space<vmem>>, vector<8x128xf32>,
    %68 = vector.extract_strided_slice %38 {offsets = [16, 0], sizes = [8, 128], strides = [1, 1]} : vector<48x128xf32> to vector<8x128xf32>
    %c0_58 = arith.constant 0 : index
    %c256 = arith.constant 256 : index
    %69 = vector.load %arg7[%c0_58, %c256] : memref<8x768xf32, #tpu.memory_space<vmem>>, vector<8x128xf32>
    tpu.vector_store %arg7[%c0_58, %c256], %68 {strides = array<i32>} : memref<8x768xf32, #tpu.memory_space<vmem>>, vector<8x128xf32>,
    %70 = vector.extract_strided_slice %47 {offsets = [16, 0], sizes = [8, 128], strides = [1, 1]} : vector<48x128xbf16> to vector<8x128xbf16>
    %c2 = arith.constant 2 : index
    %c0_59 = arith.constant 0 : index
    %c0_60 = arith.constant 0 : index
    %71 = vector.load %arg5[%c2, %c0_59, %c0_60] : memref<6x128x128xbf16, #tpu.memory_space<vmem>>, vector<1x128x128xbf16>
    %72 = vector.shape_cast %71 : vector<1x128x128xbf16> to vector<128x128xbf16>
    %cst_61 = arith.constant dense<0.000000e+00> : vector<8x128xf32>
    %73 = tpu.matmul %70, %72, %cst_61 {dimension_numbers = #tpu.dot_dimension_numbers<[1], [0], [0], [1], [0, 0, 1, 1], [], []>} : vector<8x128xbf16>, vector<128x128xbf16>, vector<8x128xf32> -> vector<8x128xf32>
    %c2_62 = arith.constant 2 : index
    %c0_63 = arith.constant 0 : index
    %74 = vector.load %arg6[%c2_62, %c0_63] : memref<6x128xf32, #tpu.memory_space<vmem>>, vector<1x128xf32>
    %75 = vector.broadcast %74 : vector<1x128xf32> to vector<8x128xf32>
    %76 = arith.addf %73, %75 : vector<8x128xf32>
    %c0_64 = arith.constant 0 : index
    %c256_65 = arith.constant 256 : index
    %77 = vector.load %arg8[%c0_64, %c256_65] : memref<8x768xf32, #tpu.memory_space<vmem>>, vector<8x128xf32>
    tpu.vector_store %arg8[%c0_64, %c256_65], %76 {strides = array<i32>} : memref<8x768xf32, #tpu.memory_space<vmem>>, vector<8x128xf32>,
    %78 = vector.extract_strided_slice %38 {offsets = [24, 0], sizes = [8, 128], strides = [1, 1]} : vector<48x128xf32> to vector<8x128xf32>
    %c0_66 = arith.constant 0 : index
    %c384 = arith.constant 384 : index
    %79 = vector.load %arg7[%c0_66, %c384] : memref<8x768xf32, #tpu.memory_space<vmem>>, vector<8x128xf32>
    tpu.vector_store %arg7[%c0_66, %c384], %78 {strides = array<i32>} : memref<8x768xf32, #tpu.memory_space<vmem>>, vector<8x128xf32>,
    %80 = vector.extract_strided_slice %47 {offsets = [24, 0], sizes = [8, 128], strides = [1, 1]} : vector<48x128xbf16> to vector<8x128xbf16>
    %c3 = arith.constant 3 : index
    %c0_67 = arith.constant 0 : index
    %c0_68 = arith.constant 0 : index
    %81 = vector.load %arg5[%c3, %c0_67, %c0_68] : memref<6x128x128xbf16, #tpu.memory_space<vmem>>, vector<1x128x128xbf16>
    %82 = vector.shape_cast %81 : vector<1x128x128xbf16> to vector<128x128xbf16>
    %cst_69 = arith.constant dense<0.000000e+00> : vector<8x128xf32>
    %83 = tpu.matmul %80, %82, %cst_69 {dimension_numbers = #tpu.dot_dimension_numbers<[1], [0], [0], [1], [0, 0, 1, 1], [], []>} : vector<8x128xbf16>, vector<128x128xbf16>, vector<8x128xf32> -> vector<8x128xf32>
    %c3_70 = arith.constant 3 : index
    %c0_71 = arith.constant 0 : index
    %84 = vector.load %arg6[%c3_70, %c0_71] : memref<6x128xf32, #tpu.memory_space<vmem>>, vector<1x128xf32>
    %85 = vector.broadcast %84 : vector<1x128xf32> to vector<8x128xf32>
    %86 = arith.addf %83, %85 : vector<8x128xf32>
    %c0_72 = arith.constant 0 : index
    %c384_73 = arith.constant 384 : index
    %87 = vector.load %arg8[%c0_72, %c384_73] : memref<8x768xf32, #tpu.memory_space<vmem>>, vector<8x128xf32>
    tpu.vector_store %arg8[%c0_72, %c384_73], %86 {strides = array<i32>} : memref<8x768xf32, #tpu.memory_space<vmem>>, vector<8x128xf32>,
    %88 = vector.extract_strided_slice %38 {offsets = [32, 0], sizes = [8, 128], strides = [1, 1]} : vector<48x128xf32> to vector<8x128xf32>
    %c0_74 = arith.constant 0 : index
    %c512 = arith.constant 512 : index
    %89 = vector.load %arg7[%c0_74, %c512] : memref<8x768xf32, #tpu.memory_space<vmem>>, vector<8x128xf32>
    tpu.vector_store %arg7[%c0_74, %c512], %88 {strides = array<i32>} : memref<8x768xf32, #tpu.memory_space<vmem>>, vector<8x128xf32>,
    %90 = vector.extract_strided_slice %47 {offsets = [32, 0], sizes = [8, 128], strides = [1, 1]} : vector<48x128xbf16> to vector<8x128xbf16>
    %c4 = arith.constant 4 : index
    %c0_75 = arith.constant 0 : index
    %c0_76 = arith.constant 0 : index
    %91 = vector.load %arg5[%c4, %c0_75, %c0_76] : memref<6x128x128xbf16, #tpu.memory_space<vmem>>, vector<1x128x128xbf16>
    %92 = vector.shape_cast %91 : vector<1x128x128xbf16> to vector<128x128xbf16>
    %cst_77 = arith.constant dense<0.000000e+00> : vector<8x128xf32>
    %93 = tpu.matmul %90, %92, %cst_77 {dimension_numbers = #tpu.dot_dimension_numbers<[1], [0], [0], [1], [0, 0, 1, 1], [], []>} : vector<8x128xbf16>, vector<128x128xbf16>, vector<8x128xf32> -> vector<8x128xf32>
    %c4_78 = arith.constant 4 : index
    %c0_79 = arith.constant 0 : index
    %94 = vector.load %arg6[%c4_78, %c0_79] : memref<6x128xf32, #tpu.memory_space<vmem>>, vector<1x128xf32>
    %95 = vector.broadcast %94 : vector<1x128xf32> to vector<8x128xf32>
    %96 = arith.addf %93, %95 : vector<8x128xf32>
    %c0_80 = arith.constant 0 : index
    %c512_81 = arith.constant 512 : index
    %97 = vector.load %arg8[%c0_80, %c512_81] : memref<8x768xf32, #tpu.memory_space<vmem>>, vector<8x128xf32>
    tpu.vector_store %arg8[%c0_80, %c512_81], %96 {strides = array<i32>} : memref<8x768xf32, #tpu.memory_space<vmem>>, vector<8x128xf32>,
    %98 = vector.extract_strided_slice %38 {offsets = [40, 0], sizes = [8, 128], strides = [1, 1]} : vector<48x128xf32> to vector<8x128xf32>
    %c0_82 = arith.constant 0 : index
    %c640 = arith.constant 640 : index
    %99 = vector.load %arg7[%c0_82, %c640] : memref<8x768xf32, #tpu.memory_space<vmem>>, vector<8x128xf32>
    tpu.vector_store %arg7[%c0_82, %c640], %98 {strides = array<i32>} : memref<8x768xf32, #tpu.memory_space<vmem>>, vector<8x128xf32>,
    %100 = vector.extract_strided_slice %47 {offsets = [40, 0], sizes = [8, 128], strides = [1, 1]} : vector<48x128xbf16> to vector<8x128xbf16>
    %c5 = arith.constant 5 : index
    %c0_83 = arith.constant 0 : index
    %c0_84 = arith.constant 0 : index
    %101 = vector.load %arg5[%c5, %c0_83, %c0_84] : memref<6x128x128xbf16, #tpu.memory_space<vmem>>, vector<1x128x128xbf16>
    %102 = vector.shape_cast %101 : vector<1x128x128xbf16> to vector<128x128xbf16>
    %cst_85 = arith.constant dense<0.000000e+00> : vector<8x128xf32>
    %103 = tpu.matmul %100, %102, %cst_85 {dimension_numbers = #tpu.dot_dimension_numbers<[1], [0], [0], [1], [0, 0, 1, 1], [], []>} : vector<8x128xbf16>, vector<128x128xbf16>, vector<8x128xf32> -> vector<8x128xf32>
    %c5_86 = arith.constant 5 : index
    %c0_87 = arith.constant 0 : index
    %104 = vector.load %arg6[%c5_86, %c0_87] : memref<6x128xf32, #tpu.memory_space<vmem>>, vector<1x128xf32>
    %105 = vector.broadcast %104 : vector<1x128xf32> to vector<8x128xf32>
    %106 = arith.addf %103, %105 : vector<8x128xf32>
    %c0_88 = arith.constant 0 : index
    %c640_89 = arith.constant 640 : index
    %107 = vector.load %arg8[%c0_88, %c640_89] : memref<8x768xf32, #tpu.memory_space<vmem>>, vector<8x128xf32>
    tpu.vector_store %arg8[%c0_88, %c640_89], %106 {strides = array<i32>} : memref<8x768xf32, #tpu.memory_space<vmem>>, vector<8x128xf32>,
    return
  }
  func.func @transform_0(%arg0: i32) -> (i32, i32, i32) {
    %c0_i32 = arith.constant 0 : i32
    %c0_i32_0 = arith.constant 0 : i32
    %c0_i32_1 = arith.constant 0 : i32
    return %arg0, %c0_i32, %c0_i32_0 : i32, i32, i32
  }
  func.func @transform_1(%arg0: i32) -> (i32, i32) {
    %c0_i32 = arith.constant 0 : i32
    %c0_i32_0 = arith.constant 0 : i32
    %c0_i32_1 = arith.constant 0 : i32
    return %c0_i32, %c0_i32_0 : i32, i32
  }
  func.func @transform_2(%arg0: i32) -> (i32, i32) {
    %c0_i32 = arith.constant 0 : i32
    %c0_i32_0 = arith.constant 0 : i32
    %c0_i32_1 = arith.constant 0 : i32
    return %c0_i32, %c0_i32_0 : i32, i32
  }
  func.func @transform_3(%arg0: i32) -> (i32, i32) {
    %c0_i32 = arith.constant 0 : i32
    %c0_i32_0 = arith.constant 0 : i32
    %c0_i32_1 = arith.constant 0 : i32
    return %c0_i32, %c0_i32_0 : i32, i32
  }
  func.func @transform_4(%arg0: i32) -> (i32, i32, i32) {
    %c0_i32 = arith.constant 0 : i32
    %c0_i32_0 = arith.constant 0 : i32
    %c0_i32_1 = arith.constant 0 : i32
    %c0_i32_2 = arith.constant 0 : i32
    return %c0_i32, %c0_i32_0, %c0_i32_1 : i32, i32, i32
  }
  func.func @transform_5(%arg0: i32) -> (i32, i32) {
    %c0_i32 = arith.constant 0 : i32
    %c0_i32_0 = arith.constant 0 : i32
    %c0_i32_1 = arith.constant 0 : i32
    return %c0_i32, %c0_i32_0 : i32, i32
  }
  func.func @transform_6(%arg0: i32) -> (i32, i32) {
    %c0_i32 = arith.constant 0 : i32
    %c0_i32_0 = arith.constant 0 : i32
    return %arg0, %c0_i32 : i32, i32
  }
  func.func @transform_7(%arg0: i32) -> (i32, i32) {
    %c0_i32 = arith.constant 0 : i32
    %c0_i32_0 = arith.constant 0 : i32
    return %arg0, %c0_i32 : i32, i32
  }
}

module attributes {stable_mosaic.version = 11 : i64} {
  func.func @pcb_head_kernel(%arg0: i32, %arg1: memref<8x48x256xbf16, #tpu.memory_space<vmem>>, %arg2: memref<256x128xbf16, #tpu.memory_space<vmem>>, %arg3: memref<1x128xf32, #tpu.memory_space<vmem>>, %arg4: memref<1x128xf32, #tpu.memory_space<vmem>>, %arg5: memref<6x128x128xbf16, #tpu.memory_space<vmem>>, %arg6: memref<6x128xf32, #tpu.memory_space<vmem>>, %arg7: memref<8x768xf32, #tpu.memory_space<vmem>>, %arg8: memref<8x768xf32, #tpu.memory_space<vmem>>, %arg9: memref<48x256xbf16, #tpu.memory_space<vmem>>) attributes {dimension_semantics = [#tpu.dimension_semantics<parallel>], iteration_bounds = array<i64: 4>, scalar_prefetch = 0 : i64, scratch_operands = 1 : i64, tpu.core_type = #tpu.core_type<tc>, window_params = [{transform_indices = @transform_0, window_bounds = array<i64: 8, 48, 256>}, {pipeline_mode = #tpu.pipeline_mode<synchronous>, transform_indices = @transform_1, window_bounds = array<i64: 256, 128>}, {pipeline_mode = #tpu.pipeline_mode<synchronous>, transform_indices = @transform_2, window_bounds = array<i64: 1, 128>}, {pipeline_mode = #tpu.pipeline_mode<synchronous>, transform_indices = @transform_3, window_bounds = array<i64: 1, 128>}, {pipeline_mode = #tpu.pipeline_mode<synchronous>, transform_indices = @transform_4, window_bounds = array<i64: 6, 128, 128>}, {pipeline_mode = #tpu.pipeline_mode<synchronous>, transform_indices = @transform_5, window_bounds = array<i64: 6, 128>}, {transform_indices = @transform_6, window_bounds = array<i64: 8, 768>}, {transform_indices = @transform_7, window_bounds = array<i64: 8, 768>}]} {
    %c0 = arith.constant 0 : index
    %c0_0 = arith.constant 0 : index
    %c0_1 = arith.constant 0 : index
    %0 = vector.load %arg1[%c0, %c0_0, %c0_1] : memref<8x48x256xbf16, #tpu.memory_space<vmem>>, vector<8x8x256xbf16>
    %1 = arith.extf %0 : vector<8x8x256xbf16> to vector<8x8x256xf32>
    %cst = arith.constant dense<0.000000e+00> : vector<8x256xf32>
    %2 = vector.multi_reduction <add>, %1, %cst [1] : vector<8x8x256xf32> to vector<8x256xf32>
    %3 = arith.truncf %2 : vector<8x256xf32> to vector<8x256xbf16>
    %c0_2 = arith.constant 0 : index
    %c0_3 = arith.constant 0 : index
    %4 = vector.load %arg9[%c0_2, %c0_3] : memref<48x256xbf16, #tpu.memory_space<vmem>>, vector<8x256xbf16>
    tpu.vector_store %arg9[%c0_2, %c0_3], %3 {strides = array<i32>} : memref<48x256xbf16, #tpu.memory_space<vmem>>, vector<8x256xbf16>,
    %c0_4 = arith.constant 0 : index
    %c8 = arith.constant 8 : index
    %c0_5 = arith.constant 0 : index
    %5 = vector.load %arg1[%c0_4, %c8, %c0_5] : memref<8x48x256xbf16, #tpu.memory_space<vmem>>, vector<8x8x256xbf16>
    %6 = arith.extf %5 : vector<8x8x256xbf16> to vector<8x8x256xf32>
    %cst_6 = arith.constant dense<0.000000e+00> : vector<8x256xf32>
    %7 = vector.multi_reduction <add>, %6, %cst_6 [1] : vector<8x8x256xf32> to vector<8x256xf32>
    %8 = arith.truncf %7 : vector<8x256xf32> to vector<8x256xbf16>
    %c8_7 = arith.constant 8 : index
    %c0_8 = arith.constant 0 : index
    %9 = vector.load %arg9[%c8_7, %c0_8] : memref<48x256xbf16, #tpu.memory_space<vmem>>, vector<8x256xbf16>
    tpu.vector_store %arg9[%c8_7, %c0_8], %8 {strides = array<i32>} : memref<48x256xbf16, #tpu.memory_space<vmem>>, vector<8x256xbf16>,
    %c0_9 = arith.constant 0 : index
    %c16 = arith.constant 16 : index
    %c0_10 = arith.constant 0 : index
    %10 = vector.load %arg1[%c0_9, %c16, %c0_10] : memref<8x48x256xbf16, #tpu.memory_space<vmem>>, vector<8x8x256xbf16>
    %11 = arith.extf %10 : vector<8x8x256xbf16> to vector<8x8x256xf32>
    %cst_11 = arith.constant dense<0.000000e+00> : vector<8x256xf32>
    %12 = vector.multi_reduction <add>, %11, %cst_11 [1] : vector<8x8x256xf32> to vector<8x256xf32>
    %13 = arith.truncf %12 : vector<8x256xf32> to vector<8x256xbf16>
    %c16_12 = arith.constant 16 : index
    %c0_13 = arith.constant 0 : index
    %14 = vector.load %arg9[%c16_12, %c0_13] : memref<48x256xbf16, #tpu.memory_space<vmem>>, vector<8x256xbf16>
    tpu.vector_store %arg9[%c16_12, %c0_13], %13 {strides = array<i32>} : memref<48x256xbf16, #tpu.memory_space<vmem>>, vector<8x256xbf16>,
    %c0_14 = arith.constant 0 : index
    %c24 = arith.constant 24 : index
    %c0_15 = arith.constant 0 : index
    %15 = vector.load %arg1[%c0_14, %c24, %c0_15] : memref<8x48x256xbf16, #tpu.memory_space<vmem>>, vector<8x8x256xbf16>
    %16 = arith.extf %15 : vector<8x8x256xbf16> to vector<8x8x256xf32>
    %cst_16 = arith.constant dense<0.000000e+00> : vector<8x256xf32>
    %17 = vector.multi_reduction <add>, %16, %cst_16 [1] : vector<8x8x256xf32> to vector<8x256xf32>
    %18 = arith.truncf %17 : vector<8x256xf32> to vector<8x256xbf16>
    %c24_17 = arith.constant 24 : index
    %c0_18 = arith.constant 0 : index
    %19 = vector.load %arg9[%c24_17, %c0_18] : memref<48x256xbf16, #tpu.memory_space<vmem>>, vector<8x256xbf16>
    tpu.vector_store %arg9[%c24_17, %c0_18], %18 {strides = array<i32>} : memref<48x256xbf16, #tpu.memory_space<vmem>>, vector<8x256xbf16>,
    %c0_19 = arith.constant 0 : index
    %c32 = arith.constant 32 : index
    %c0_20 = arith.constant 0 : index
    %20 = vector.load %arg1[%c0_19, %c32, %c0_20] : memref<8x48x256xbf16, #tpu.memory_space<vmem>>, vector<8x8x256xbf16>
    %21 = arith.extf %20 : vector<8x8x256xbf16> to vector<8x8x256xf32>
    %cst_21 = arith.constant dense<0.000000e+00> : vector<8x256xf32>
    %22 = vector.multi_reduction <add>, %21, %cst_21 [1] : vector<8x8x256xf32> to vector<8x256xf32>
    %23 = arith.truncf %22 : vector<8x256xf32> to vector<8x256xbf16>
    %c32_22 = arith.constant 32 : index
    %c0_23 = arith.constant 0 : index
    %24 = vector.load %arg9[%c32_22, %c0_23] : memref<48x256xbf16, #tpu.memory_space<vmem>>, vector<8x256xbf16>
    tpu.vector_store %arg9[%c32_22, %c0_23], %23 {strides = array<i32>} : memref<48x256xbf16, #tpu.memory_space<vmem>>, vector<8x256xbf16>,
    %c0_24 = arith.constant 0 : index
    %c40 = arith.constant 40 : index
    %c0_25 = arith.constant 0 : index
    %25 = vector.load %arg1[%c0_24, %c40, %c0_25] : memref<8x48x256xbf16, #tpu.memory_space<vmem>>, vector<8x8x256xbf16>
    %26 = arith.extf %25 : vector<8x8x256xbf16> to vector<8x8x256xf32>
    %cst_26 = arith.constant dense<0.000000e+00> : vector<8x256xf32>
    %27 = vector.multi_reduction <add>, %26, %cst_26 [1] : vector<8x8x256xf32> to vector<8x256xf32>
    %28 = arith.truncf %27 : vector<8x256xf32> to vector<8x256xbf16>
    %c40_27 = arith.constant 40 : index
    %c0_28 = arith.constant 0 : index
    %29 = vector.load %arg9[%c40_27, %c0_28] : memref<48x256xbf16, #tpu.memory_space<vmem>>, vector<8x256xbf16>
    tpu.vector_store %arg9[%c40_27, %c0_28], %28 {strides = array<i32>} : memref<48x256xbf16, #tpu.memory_space<vmem>>, vector<8x256xbf16>,
    %c0_29 = arith.constant 0 : index
    %c0_30 = arith.constant 0 : index
    %30 = vector.load %arg9[%c0_29, %c0_30] : memref<48x256xbf16, #tpu.memory_space<vmem>>, vector<48x256xbf16>
    %c0_31 = arith.constant 0 : index
    %c0_32 = arith.constant 0 : index
    %31 = vector.load %arg2[%c0_31, %c0_32] : memref<256x128xbf16, #tpu.memory_space<vmem>>, vector<256x128xbf16>
    %cst_33 = arith.constant dense<0.000000e+00> : vector<48x128xf32>
    %32 = tpu.matmul %30, %31, %cst_33 {dimension_numbers = #tpu.dot_dimension_numbers<[1], [0], [0], [1], [0, 0, 1, 1], [], []>} : vector<48x256xbf16>, vector<256x128xbf16>, vector<48x128xf32> -> vector<48x128xf32>
    %33 = arith.mulf %32, %32 : vector<48x128xf32>
    %cst_34 = arith.constant dense<0.000000e+00> : vector<48xf32>
    %34 = vector.multi_reduction <add>, %33, %cst_34 [1] : vector<48x128xf32> to vector<48xf32>
    %35 = vector.shape_cast %34 : vector<48xf32> to vector<48x1xf32>
    %36 = math.rsqrt %35 : vector<48x1xf32>
    %37 = vector.broadcast %36 : vector<48x1xf32> to vector<48x128xf32>
    %38 = arith.mulf %32, %37 : vector<48x128xf32>
    %c0_35 = arith.constant 0 : index
    %c0_36 = arith.constant 0 : index
    %39 = vector.load %arg3[%c0_35, %c0_36] : memref<1x128xf32, #tpu.memory_space<vmem>>, vector<1x128xf32>
    %40 = vector.broadcast %39 : vector<1x128xf32> to vector<48x128xf32>
    %41 = arith.mulf %32, %40 : vector<48x128xf32>
    %c0_37 = arith.constant 0 : index
    %c0_38 = arith.constant 0 : index
    %42 = vector.load %arg4[%c0_37, %c0_38] : memref<1x128xf32, #tpu.memory_space<vmem>>, vector<1x128xf32>
    %43 = vector.broadcast %42 : vector<1x128xf32> to vector<48x128xf32>
    %44 = arith.addf %41, %43 : vector<48x128xf32>
    %cst_39 = arith.constant 0.000000e+00 : f32
    %45 = vector.broadcast %cst_39 : f32 to vector<48x128xf32>
    %46 = arith.maximumf %44, %45 : vector<48x128xf32>
    %47 = arith.truncf %46 : vector<48x128xf32> to vector<48x128xbf16>
    %48 = vector.extract_strided_slice %38 {offsets = [0, 0], sizes = [8, 128], strides = [1, 1]} : vector<48x128xf32> to vector<8x128xf32>
    %c0_40 = arith.constant 0 : index
    %c0_41 = arith.constant 0 : index
    %49 = vector.load %arg7[%c0_40, %c0_41] : memref<8x768xf32, #tpu.memory_space<vmem>>, vector<8x128xf32>
    tpu.vector_store %arg7[%c0_40, %c0_41], %48 {strides = array<i32>} : memref<8x768xf32, #tpu.memory_space<vmem>>, vector<8x128xf32>,
    %50 = vector.extract_strided_slice %47 {offsets = [0, 0], sizes = [8, 128], strides = [1, 1]} : vector<48x128xbf16> to vector<8x128xbf16>
    %c0_42 = arith.constant 0 : index
    %c0_43 = arith.constant 0 : index
    %c0_44 = arith.constant 0 : index
    %51 = vector.load %arg5[%c0_42, %c0_43, %c0_44] : memref<6x128x128xbf16, #tpu.memory_space<vmem>>, vector<1x128x128xbf16>
    %52 = vector.shape_cast %51 : vector<1x128x128xbf16> to vector<128x128xbf16>
    %cst_45 = arith.constant dense<0.000000e+00> : vector<8x128xf32>
    %53 = tpu.matmul %50, %52, %cst_45 {dimension_numbers = #tpu.dot_dimension_numbers<[1], [0], [0], [1], [0, 0, 1, 1], [], []>} : vector<8x128xbf16>, vector<128x128xbf16>, vector<8x128xf32> -> vector<8x128xf32>
    %c0_46 = arith.constant 0 : index
    %c0_47 = arith.constant 0 : index
    %54 = vector.load %arg6[%c0_46, %c0_47] : memref<6x128xf32, #tpu.memory_space<vmem>>, vector<1x128xf32>
    %55 = vector.broadcast %54 : vector<1x128xf32> to vector<8x128xf32>
    %56 = arith.addf %53, %55 : vector<8x128xf32>
    %c0_48 = arith.constant 0 : index
    %c0_49 = arith.constant 0 : index
    %57 = vector.load %arg8[%c0_48, %c0_49] : memref<8x768xf32, #tpu.memory_space<vmem>>, vector<8x128xf32>
    tpu.vector_store %arg8[%c0_48, %c0_49], %56 {strides = array<i32>} : memref<8x768xf32, #tpu.memory_space<vmem>>, vector<8x128xf32>,
    %58 = vector.extract_strided_slice %38 {offsets = [8, 0], sizes = [8, 128], strides = [1, 1]} : vector<48x128xf32> to vector<8x128xf32>
    %c0_50 = arith.constant 0 : index
    %c128 = arith.constant 128 : index
    %59 = vector.load %arg7[%c0_50, %c128] : memref<8x768xf32, #tpu.memory_space<vmem>>, vector<8x128xf32>
    tpu.vector_store %arg7[%c0_50, %c128], %58 {strides = array<i32>} : memref<8x768xf32, #tpu.memory_space<vmem>>, vector<8x128xf32>,
    %60 = vector.extract_strided_slice %47 {offsets = [8, 0], sizes = [8, 128], strides = [1, 1]} : vector<48x128xbf16> to vector<8x128xbf16>
    %c1 = arith.constant 1 : index
    %c0_51 = arith.constant 0 : index
    %c0_52 = arith.constant 0 : index
    %61 = vector.load %arg5[%c1, %c0_51, %c0_52] : memref<6x128x128xbf16, #tpu.memory_space<vmem>>, vector<1x128x128xbf16>
    %62 = vector.shape_cast %61 : vector<1x128x128xbf16> to vector<128x128xbf16>
    %cst_53 = arith.constant dense<0.000000e+00> : vector<8x128xf32>
    %63 = tpu.matmul %60, %62, %cst_53 {dimension_numbers = #tpu.dot_dimension_numbers<[1], [0], [0], [1], [0, 0, 1, 1], [], []>} : vector<8x128xbf16>, vector<128x128xbf16>, vector<8x128xf32> -> vector<8x128xf32>
    %c1_54 = arith.constant 1 : index
    %c0_55 = arith.constant 0 : index
    %64 = vector.load %arg6[%c1_54, %c0_55] : memref<6x128xf32, #tpu.memory_space<vmem>>, vector<1x128xf32>
    %65 = vector.broadcast %64 : vector<1x128xf32> to vector<8x128xf32>
    %66 = arith.addf %63, %65 : vector<8x128xf32>
    %c0_56 = arith.constant 0 : index
    %c128_57 = arith.constant 128 : index
    %67 = vector.load %arg8[%c0_56, %c128_57] : memref<8x768xf32, #tpu.memory_space<vmem>>, vector<8x128xf32>
    tpu.vector_store %arg8[%c0_56, %c128_57], %66 {strides = array<i32>} : memref<8x768xf32, #tpu.memory_space<vmem>>, vector<8x128xf32>,
    %68 = vector.extract_strided_slice %38 {offsets = [16, 0], sizes = [8, 128], strides = [1, 1]} : vector<48x128xf32> to vector<8x128xf32>
    %c0_58 = arith.constant 0 : index
    %c256 = arith.constant 256 : index
    %69 = vector.load %arg7[%c0_58, %c256] : memref<8x768xf32, #tpu.memory_space<vmem>>, vector<8x128xf32>
    tpu.vector_store %arg7[%c0_58, %c256], %68 {strides = array<i32>} : memref<8x768xf32, #tpu.memory_space<vmem>>, vector<8x128xf32>,
    %70 = vector.extract_strided_slice %47 {offsets = [16, 0], sizes = [8, 128], strides = [1, 1]} : vector<48x128xbf16> to vector<8x128xbf16>
    %c2 = arith.constant 2 : index
    %c0_59 = arith.constant 0 : index
    %c0_60 = arith.constant 0 : index
    %71 = vector.load %arg5[%c2, %c0_59, %c0_60] : memref<6x128x128xbf16, #tpu.memory_space<vmem>>, vector<1x128x128xbf16>
    %72 = vector.shape_cast %71 : vector<1x128x128xbf16> to vector<128x128xbf16>
    %cst_61 = arith.constant dense<0.000000e+00> : vector<8x128xf32>
    %73 = tpu.matmul %70, %72, %cst_61 {dimension_numbers = #tpu.dot_dimension_numbers<[1], [0], [0], [1], [0, 0, 1, 1], [], []>} : vector<8x128xbf16>, vector<128x128xbf16>, vector<8x128xf32> -> vector<8x128xf32>
    %c2_62 = arith.constant 2 : index
    %c0_63 = arith.constant 0 : index
    %74 = vector.load %arg6[%c2_62, %c0_63] : memref<6x128xf32, #tpu.memory_space<vmem>>, vector<1x128xf32>
    %75 = vector.broadcast %74 : vector<1x128xf32> to vector<8x128xf32>
    %76 = arith.addf %73, %75 : vector<8x128xf32>
    %c0_64 = arith.constant 0 : index
    %c256_65 = arith.constant 256 : index
    %77 = vector.load %arg8[%c0_64, %c256_65] : memref<8x768xf32, #tpu.memory_space<vmem>>, vector<8x128xf32>
    tpu.vector_store %arg8[%c0_64, %c256_65], %76 {strides = array<i32>} : memref<8x768xf32, #tpu.memory_space<vmem>>, vector<8x128xf32>,
    %78 = vector.extract_strided_slice %38 {offsets = [24, 0], sizes = [8, 128], strides = [1, 1]} : vector<48x128xf32> to vector<8x128xf32>
    %c0_66 = arith.constant 0 : index
    %c384 = arith.constant 384 : index
    %79 = vector.load %arg7[%c0_66, %c384] : memref<8x768xf32, #tpu.memory_space<vmem>>, vector<8x128xf32>
    tpu.vector_store %arg7[%c0_66, %c384], %78 {strides = array<i32>} : memref<8x768xf32, #tpu.memory_space<vmem>>, vector<8x128xf32>,
    %80 = vector.extract_strided_slice %47 {offsets = [24, 0], sizes = [8, 128], strides = [1, 1]} : vector<48x128xbf16> to vector<8x128xbf16>
    %c3 = arith.constant 3 : index
    %c0_67 = arith.constant 0 : index
    %c0_68 = arith.constant 0 : index
    %81 = vector.load %arg5[%c3, %c0_67, %c0_68] : memref<6x128x128xbf16, #tpu.memory_space<vmem>>, vector<1x128x128xbf16>
    %82 = vector.shape_cast %81 : vector<1x128x128xbf16> to vector<128x128xbf16>
    %cst_69 = arith.constant dense<0.000000e+00> : vector<8x128xf32>
    %83 = tpu.matmul %80, %82, %cst_69 {dimension_numbers = #tpu.dot_dimension_numbers<[1], [0], [0], [1], [0, 0, 1, 1], [], []>} : vector<8x128xbf16>, vector<128x128xbf16>, vector<8x128xf32> -> vector<8x128xf32>
    %c3_70 = arith.constant 3 : index
    %c0_71 = arith.constant 0 : index
    %84 = vector.load %arg6[%c3_70, %c0_71] : memref<6x128xf32, #tpu.memory_space<vmem>>, vector<1x128xf32>
    %85 = vector.broadcast %84 : vector<1x128xf32> to vector<8x128xf32>
    %86 = arith.addf %83, %85 : vector<8x128xf32>
    %c0_72 = arith.constant 0 : index
    %c384_73 = arith.constant 384 : index
    %87 = vector.load %arg8[%c0_72, %c384_73] : memref<8x768xf32, #tpu.memory_space<vmem>>, vector<8x128xf32>
    tpu.vector_store %arg8[%c0_72, %c384_73], %86 {strides = array<i32>} : memref<8x768xf32, #tpu.memory_space<vmem>>, vector<8x128xf32>,
    %88 = vector.extract_strided_slice %38 {offsets = [32, 0], sizes = [8, 128], strides = [1, 1]} : vector<48x128xf32> to vector<8x128xf32>
    %c0_74 = arith.constant 0 : index
    %c512 = arith.constant 512 : index
    %89 = vector.load %arg7[%c0_74, %c512] : memref<8x768xf32, #tpu.memory_space<vmem>>, vector<8x128xf32>
    tpu.vector_store %arg7[%c0_74, %c512], %88 {strides = array<i32>} : memref<8x768xf32, #tpu.memory_space<vmem>>, vector<8x128xf32>,
    %90 = vector.extract_strided_slice %47 {offsets = [32, 0], sizes = [8, 128], strides = [1, 1]} : vector<48x128xbf16> to vector<8x128xbf16>
    %c4 = arith.constant 4 : index
    %c0_75 = arith.constant 0 : index
    %c0_76 = arith.constant 0 : index
    %91 = vector.load %arg5[%c4, %c0_75, %c0_76] : memref<6x128x128xbf16, #tpu.memory_space<vmem>>, vector<1x128x128xbf16>
    %92 = vector.shape_cast %91 : vector<1x128x128xbf16> to vector<128x128xbf16>
    %cst_77 = arith.constant dense<0.000000e+00> : vector<8x128xf32>
    %93 = tpu.matmul %90, %92, %cst_77 {dimension_numbers = #tpu.dot_dimension_numbers<[1], [0], [0], [1], [0, 0, 1, 1], [], []>} : vector<8x128xbf16>, vector<128x128xbf16>, vector<8x128xf32> -> vector<8x128xf32>
    %c4_78 = arith.constant 4 : index
    %c0_79 = arith.constant 0 : index
    %94 = vector.load %arg6[%c4_78, %c0_79] : memref<6x128xf32, #tpu.memory_space<vmem>>, vector<1x128xf32>
    %95 = vector.broadcast %94 : vector<1x128xf32> to vector<8x128xf32>
    %96 = arith.addf %93, %95 : vector<8x128xf32>
    %c0_80 = arith.constant 0 : index
    %c512_81 = arith.constant 512 : index
    %97 = vector.load %arg8[%c0_80, %c512_81] : memref<8x768xf32, #tpu.memory_space<vmem>>, vector<8x128xf32>
    tpu.vector_store %arg8[%c0_80, %c512_81], %96 {strides = array<i32>} : memref<8x768xf32, #tpu.memory_space<vmem>>, vector<8x128xf32>,
    %98 = vector.extract_strided_slice %38 {offsets = [40, 0], sizes = [8, 128], strides = [1, 1]} : vector<48x128xf32> to vector<8x128xf32>
    %c0_82 = arith.constant 0 : index
    %c640 = arith.constant 640 : index
    %99 = vector.load %arg7[%c0_82, %c640] : memref<8x768xf32, #tpu.memory_space<vmem>>, vector<8x128xf32>
    tpu.vector_store %arg7[%c0_82, %c640], %98 {strides = array<i32>} : memref<8x768xf32, #tpu.memory_space<vmem>>, vector<8x128xf32>,
    %100 = vector.extract_strided_slice %47 {offsets = [40, 0], sizes = [8, 128], strides = [1, 1]} : vector<48x128xbf16> to vector<8x128xbf16>
    %c5 = arith.constant 5 : index
    %c0_83 = arith.constant 0 : index
    %c0_84 = arith.constant 0 : index
    %101 = vector.load %arg5[%c5, %c0_83, %c0_84] : memref<6x128x128xbf16, #tpu.memory_space<vmem>>, vector<1x128x128xbf16>
    %102 = vector.shape_cast %101 : vector<1x128x128xbf16> to vector<128x128xbf16>
    %cst_85 = arith.constant dense<0.000000e+00> : vector<8x128xf32>
    %103 = tpu.matmul %100, %102, %cst_85 {dimension_numbers = #tpu.dot_dimension_numbers<[1], [0], [0], [1], [0, 0, 1, 1], [], []>} : vector<8x128xbf16>, vector<128x128xbf16>, vector<8x128xf32> -> vector<8x128xf32>
    %c5_86 = arith.constant 5 : index
    %c0_87 = arith.constant 0 : index
    %104 = vector.load %arg6[%c5_86, %c0_87] : memref<6x128xf32, #tpu.memory_space<vmem>>, vector<1x128xf32>
    %105 = vector.broadcast %104 : vector<1x128xf32> to vector<8x128xf32>
    %106 = arith.addf %103, %105 : vector<8x128xf32>
    %c0_88 = arith.constant 0 : index
    %c640_89 = arith.constant 640 : index
    %107 = vector.load %arg8[%c0_88, %c640_89] : memref<8x768xf32, #tpu.memory_space<vmem>>, vector<8x128xf32>
    tpu.vector_store %arg8[%c0_88, %c640_89], %106 {strides = array<i32>} : memref<8x768xf32, #tpu.memory_space<vmem>>, vector<8x128xf32>,
    return
  }
  func.func @transform_0(%arg0: i32) -> (i32, i32, i32) {
    %c0_i32 = arith.constant 0 : i32
    %c0_i32_0 = arith.constant 0 : i32
    %c0_i32_1 = arith.constant 0 : i32
    return %arg0, %c0_i32, %c0_i32_0 : i32, i32, i32
  }
  func.func @transform_1(%arg0: i32) -> (i32, i32) {
    %c0_i32 = arith.constant 0 : i32
    %c0_i32_0 = arith.constant 0 : i32
    %c0_i32_1 = arith.constant 0 : i32
    return %c0_i32, %c0_i32_0 : i32, i32
  }
  func.func @transform_2(%arg0: i32) -> (i32, i32) {
    %c0_i32 = arith.constant 0 : i32
    %c0_i32_0 = arith.constant 0 : i32
    %c0_i32_1 = arith.constant 0 : i32
    return %c0_i32, %c0_i32_0 : i32, i32
  }
  func.func @transform_3(%arg0: i32) -> (i32, i32) {
    %c0_i32 = arith.constant 0 : i32
    %c0_i32_0 = arith.constant 0 : i32
    %c0_i32_1 = arith.constant 0 : i32
    return %c0_i32, %c0_i32_0 : i32, i32
  }
  func.func @transform_4(%arg0: i32) -> (i32, i32, i32) {
    %c0_i32 = arith.constant 0 : i32
    %c0_i32_0 = arith.constant 0 : i32
    %c0_i32_1 = arith.constant 0 : i32
    %c0_i32_2 = arith.constant 0 : i32
    return %c0_i32, %c0_i32_0, %c0_i32_1 : i32, i32, i32
  }
  func.func @transform_5(%arg0: i32) -> (i32, i32) {
    %c0_i32 = arith.constant 0 : i32
    %c0_i32_0 = arith.constant 0 : i32
    %c0_i32_1 = arith.constant 0 : i32
    return %c0_i32, %c0_i32_0 : i32, i32
  }
  func.func @transform_6(%arg0: i32) -> (i32, i32) {
    %c0_i32 = arith.constant 0 : i32
    %c0_i32_0 = arith.constant 0 : i32
    return %arg0, %c0_i32 : i32, i32
  }
  func.func @transform_7(%arg0: i32) -> (i32, i32) {
    %c0_i32 = arith.constant 0 : i32
    %c0_i32_0 = arith.constant 0 : i32
    return %arg0, %c0_i32 : i32, i32
  }
}

</mosaic_0001>

<llo_original>
// kernel: tpu_custom_call.1
$region0: #{tpu_custom_call.1}
  #allocation0 [shape = 'u32[]', space=smem, size = 0x4, offset = 0x4, fixed_abs, tag = 'smem constant byte address 0x4 - core index']
  #allocation1 [shape = 'u32[72,128]{1,0:T(1,128)}', space=vmem, size = 0x9000, scoped, tag = 'internal scratch']
  #allocation2 [shape = 'bf16[48,256]{1,0:T(8,128)(2,1)}', space=vmem, size = 0x6000, scoped, tag = 'scratch operand']
  %s0 = inlined_call_operand.hbm [shape: bf16[32,48,256], index: 0, kind: input, shape index: {}]
  %s1 = inlined_call_operand.hbm [shape: bf16[256,128], index: 1, kind: input, shape index: {}]
  %s2 = inlined_call_operand.vmem [shape: f32[1,128], index: 2, kind: input, shape index: {}]
  %s3 = inlined_call_operand.vmem [shape: f32[1,128], index: 3, kind: input, shape index: {}]
  %s4 = inlined_call_operand.hbm [shape: bf16[6,128,128], index: 4, kind: input, shape index: {}]
  %s5 = inlined_call_operand.hbm [shape: f32[6,128], index: 5, kind: input, shape index: {}]
  %s6 = inlined_call_operand.hbm [shape: f32[32,768], index: 6, kind: output, shape index: {0}]
  %s7 = inlined_call_operand.hbm [shape: f32[32,768], index: 7, kind: output, shape index: {1}]
  %8 = xla_tuple %s6, %s7
  %s9 = sld [smem:[#allocation0]]
  $region81: #{tpu_custom_call.1} parent=0
    _
  %s11 = ssub.s32 1, %s9
  %s12 = scalar_select 0, %s11, %s9
  $region1: #{tpu_custom_call.1} parent=0
    #allocation3 [shape = 'u8[393216]{0}', space=vmem, size = 0x60000, scoped, tag = 'input window, operand 0']
    #allocation4 [shape = 's32[2]{0}', space=sflag, size = 0x8, scoped, tag = 'scoped memory for tpu_custom_call.1']
    #allocation5 [shape = 's32[2]{0}', space=sflag, size = 0x8, scoped, tag = 'scoped memory for tpu_custom_call.1']
    #allocation6 [shape = 'u8[65536]{0}', space=vmem, size = 0x10000, scoped, tag = 'input window, operand 1, single buffered']
    #allocation7 [shape = 's32[1]{0}', space=sflag, size = 0x4, scoped, tag = 'scoped memory for tpu_custom_call.1']
    #allocation8 [shape = 'u8[196608]{0}', space=vmem, size = 0x30000, scoped, tag = 'input window, operand 4, single buffered']
    #allocation9 [shape = 'u8[4096]{0}', space=vmem, size = 0x1000, scoped, tag = 'input window, operand 5, single buffered']
    #allocation10 [shape = 's32[1]{0}', space=sflag, size = 0x4, scoped, tag = 'scoped memory for tpu_custom_call.1']
    #allocation11 [shape = 'u8[49152]{0}', space=vmem, size = 0xc000, scoped, tag = 'output window, operand 0']
    #allocation12 [shape = 'u8[49152]{0}', space=vmem, size = 0xc000, scoped, tag = 'output window, operand 1']
    #allocation13 [shape = 's32[2]{0}', space=sflag, size = 0x8, scoped, tag = 'scoped memory for tpu_custom_call.1']
    %13 = vsyncpa [#allocation4], 0
    %s14 = scalar_lea.sflag [#allocation4], 1
    %15 = vsyncpa %s14, 0
    %16 = vsyncpa [#allocation7], 0
    %17 = vsyncpa [#allocation10], 0
    %18 = vsyncpa [#allocation5], 0
    %s19 = scalar_lea.sflag [#allocation5], 1
    %20 = vsyncpa %s19, 0
    %21 = vsyncpa [#allocation13], 0
    %s22 = scalar_lea.sflag [#allocation13], 1
    %23 = vsyncpa %s22, 0
    loop: start=0, step=1, limit=6
    $region2: #{tpu_custom_call.1} parent=1 // loop_pre_header
      _
    $region3: #{tpu_custom_call.1} parent=1 // loop_header
      %s25 = sphi 0, %s29
      %p26 = scmp.ge.s32.totalorder %s25, 6
      %s35 = sphi 0, %s37
      %s38 = sphi 0, %s35
      %s39 = sphi 0, %s38
      %s55 = sphi 0, %s39
      %s59 = sphi 0, %s59
      %s61 = sphi 0, %s59
      %s62 = sphi 0, %s61
      %s76 = sphi 0, %s62
      %s80 = sphi 0, %s80
      %s82 = sphi 0, %s80
      %s83 = sphi 0, %s82
      %s97 = sphi 0, %s83
      %s101 = sphi 0, %s101
      %s103 = sphi 0, %s101
      %s104 = sphi 0, %s103
      %s118 = sphi 0, %s104
      %s122 = sphi 0, %s122
      %s124 = sphi 0, %s122
      %s125 = sphi 0, %s124
      %s139 = sphi 0, %s125
      %s143 = sphi 0, %s143
      %s145 = sphi 0, %s143
      %s146 = sphi 0, %s145
      %s160 = sphi 0, %s146
      %s166 = sphi 0, %s168
      %s169 = sphi 0, %s166
      %s170 = sphi 0, %s169
      %s186 = sphi 0, %s170
      %s192 = sphi 0, %s194
      %s195 = sphi 0, %s192
      %s196 = sphi 0, %s195
      %s212 = sphi 0, %s196
    $region4: #{tpu_custom_call.1} parent=1 // loop_header_branch
      %28 = sbr.rel (%p26) target = $region8
    $region5: #{tpu_custom_call.1} parent=1 // loop_body
      %s30 = ssub.s32 %s25, 1
      %s31 = ssub.s32 %s25, 2
      %s32 = sadd.s32 %s25, 1
      %s33 = ssub.s32 %s25, %s32
      %p34 = scmp.eq.s32.totalorder %s33, 0
      %s36 = sadd.s32 %s35, 1
      %s37 = scalar_select %p34, %s35, %s36
      %p40 = pneg %p34
      %p41 = scmp.eq.s32.totalorder %s25, 3
      %p42 = por %p40, %p41
      %p43 = scmp.ne.s32.totalorder %s35, %s38
      %p44 = scmp.eq.s32.totalorder %s25, 0
      %p45 = por %p43, %p44
      %p46 = scmp.ne.s32.totalorder %s35, %s38
      %p47 = scmp.eq.s32.totalorder %s30, 3
      %p48 = por %p46, %p47
      %p49 = scmp.ne.s32.totalorder %s38, %s39
      %p50 = scmp.eq.s32.totalorder %s30, 0
      %p51 = por %p49, %p50
      %p52 = scmp.ne.s32.totalorder %s38, %s39
      %p53 = scmp.eq.s32.totalorder %s31, 3
      %p54 = por %p52, %p53
      %p56 = scmp.ne.s32.totalorder %s39, %s55
      %p57 = scmp.eq.s32.totalorder %s31, 0
      %p58 = por %p56, %p57
      %s60 = sadd.s32 %s59, 1
      %p63 = scmp.eq.s32.totalorder %s25, 3
      %p64 = scmp.ne.s32.totalorder %s59, %s61
      %p65 = scmp.eq.s32.totalorder %s25, 0
      %p66 = por %p64, %p65
      %p67 = scmp.ne.s32.totalorder %s59, %s61
      %p68 = scmp.eq.s32.totalorder %s30, 3
      %p69 = por %p67, %p68
      %p70 = scmp.ne.s32.totalorder %s61, %s62
      %p71 = scmp.eq.s32.totalorder %s30, 0
      %p72 = por %p70, %p71
      %p73 = scmp.ne.s32.totalorder %s61, %s62
      %p74 = scmp.eq.s32.totalorder %s31, 3
      %p75 = por %p73, %p74
      %p77 = scmp.ne.s32.totalorder %s62, %s76
      %p78 = scmp.eq.s32.totalorder %s31, 0
      %p79 = por %p77, %p78
      %s81 = sadd.s32 %s80, 1
      %p84 = scmp.eq.s32.totalorder %s25, 3
      %p85 = scmp.ne.s32.totalorder %s80, %s82
      %p86 = scmp.eq.s32.totalorder %s25, 0
      %p87 = por %p85, %p86
      %p88 = scmp.ne.s32.totalorder %s80, %s82
      %p89 = scmp.eq.s32.totalorder %s30, 3
      %p90 = por %p88, %p89
      %p91 = scmp.ne.s32.totalorder %s82, %s83
      %p92 = scmp.eq.s32.totalorder %s30, 0
      %p93 = por %p91, %p92
      %p94 = scmp.ne.s32.totalorder %s82, %s83
      %p95 = scmp.eq.s32.totalorder %s31, 3
      %p96 = por %p94, %p95
      %p98 = scmp.ne.s32.totalorder %s83, %s97
      %p99 = scmp.eq.s32.totalorder %s31, 0
      %p100 = por %p98, %p99
      %s102 = sadd.s32 %s101, 1
      %p105 = scmp.eq.s32.totalorder %s25, 3
      %p106 = scmp.ne.s32.totalorder %s101, %s103
      %p107 = scmp.eq.s32.totalorder %s25, 0
      %p108 = por %p106, %p107
      %p109 = scmp.ne.s32.totalorder %s101, %s103
      %p110 = scmp.eq.s32.totalorder %s30, 3
      %p111 = por %p109, %p110
      %p112 = scmp.ne.s32.totalorder %s103, %s104
      %p113 = scmp.eq.s32.totalorder %s30, 0
      %p114 = por %p112, %p113
      %p115 = scmp.ne.s32.totalorder %s103, %s104
      %p116 = scmp.eq.s32.totalorder %s31, 3
      %p117 = por %p115, %p116
      %p119 = scmp.ne.s32.totalorder %s104, %s118
      %p120 = scmp.eq.s32.totalorder %s31, 0
      %p121 = por %p119, %p120
      %s123 = sadd.s32 %s122, 1
      %p126 = scmp.eq.s32.totalorder %s25, 3
      %p127 = scmp.ne.s32.totalorder %s122, %s124
      %p128 = scmp.eq.s32.totalorder %s25, 0
      %p129 = por %p127, %p128
      %p130 = scmp.ne.s32.totalorder %s122, %s124
      %p131 = scmp.eq.s32.totalorder %s30, 3
      %p132 = por %p130, %p131
      %p133 = scmp.ne.s32.totalorder %s124, %s125
      %p134 = scmp.eq.s32.totalorder %s30, 0
      %p135 = por %p133, %p134
      %p136 = scmp.ne.s32.totalorder %s124, %s125
      %p137 = scmp.eq.s32.totalorder %s31, 3
      %p138 = por %p136, %p137
      %p140 = scmp.ne.s32.totalorder %s125, %s139
      %p141 = scmp.eq.s32.totalorder %s31, 0
      %p142 = por %p140, %p141
      %s144 = sadd.s32 %s143, 1
      %p147 = scmp.eq.s32.totalorder %s25, 3
      %p148 = scmp.ne.s32.totalorder %s143, %s145
      %p149 = scmp.eq.s32.totalorder %s25, 0
      %p150 = por %p148, %p149
      %p151 = scmp.ne.s32.totalorder %s143, %s145
      %p152 = scmp.eq.s32.totalorder %s30, 3
      %p153 = por %p151, %p152
      %p154 = scmp.ne.s32.totalorder %s145, %s146
      %p155 = scmp.eq.s32.totalorder %s30, 0
      %p156 = por %p154, %p155
      %p157 = scmp.ne.s32.totalorder %s145, %s146
      %p158 = scmp.eq.s32.totalorder %s31, 3
      %p159 = por %p157, %p158
      %p161 = scmp.ne.s32.totalorder %s146, %s160
      %p162 = scmp.eq.s32.totalorder %s31, 0
      %p163 = por %p161, %p162
      %s164 = ssub.s32 %s25, %s32
      %p165 = scmp.eq.s32.totalorder %s164, 0
      %s167 = sadd.s32 %s166, 1
      %s168 = scalar_select %p165, %s166, %s167
      %p171 = pneg %p165
      %p172 = scmp.eq.s32.totalorder %s25, 3
      %p173 = por %p171, %p172
      %p174 = scmp.ne.s32.totalorder %s166, %s169
      %p175 = scmp.eq.s32.totalorder %s25, 0
      %p176 = por %p174, %p175
      %p177 = scmp.ne.s32.totalorder %s166, %s169
      %p178 = scmp.eq.s32.totalorder %s30, 3
      %p179 = por %p177, %p178
      %p180 = scmp.ne.s32.totalorder %s169, %s170
      %p181 = scmp.eq.s32.totalorder %s30, 0
      %p182 = por %p180, %p181
      %p183 = scmp.ne.s32.totalorder %s169, %s170
      %p184 = scmp.eq.s32.totalorder %s31, 3
      %p185 = por %p183, %p184
      %p187 = scmp.ne.s32.totalorder %s170, %s186
      %p188 = scmp.eq.s32.totalorder %s31, 0
      %p189 = por %p187, %p188
      %s190 = ssub.s32 %s25, %s32
      %p191 = scmp.eq.s32.totalorder %s190, 0
      %s193 = sadd.s32 %s192, 1
      %s194 = scalar_select %p191, %s192, %s193
      %p197 = pneg %p191
      %p198 = scmp.eq.s32.totalorder %s25, 3
      %p199 = por %p197, %p198
      %p200 = scmp.ne.s32.totalorder %s192, %s195
      %p201 = scmp.eq.s32.totalorder %s25, 0
      %p202 = por %p200, %p201
      %p203 = scmp.ne.s32.totalorder %s192, %s195
      %p204 = scmp.eq.s32.totalorder %s30, 3
      %p205 = por %p203, %p204
      %p206 = scmp.ne.s32.totalorder %s195, %s196
      %p207 = scmp.eq.s32.totalorder %s30, 0
      %p208 = por %p206, %p207
      %p209 = scmp.ne.s32.totalorder %s195, %s196
      %p210 = scmp.eq.s32.totalorder %s31, 3
      %p211 = por %p209, %p210
      %p213 = scmp.ne.s32.totalorder %s196, %s212
      %p214 = scmp.eq.s32.totalorder %s31, 0
      %p215 = por %p213, %p214
      %p216 = scmp.le.s32.totalorder 1, %s25
      %p217 = scmp.lt.s32.totalorder %s25, 5
      %p218 = pnand %p216, %p217
      %p219 = pneg %p218
      // Predicated region
      $region9: #{tpu_custom_call.1} parent=5 // pred_check
        _
      $region10: #{tpu_custom_call.1} parent=5 // pred_check_branch
        %221 = sbr.rel (%p218) target = $region12
      $region11: #{tpu_custom_call.1} parent=5 // pred_region
        %s222 = ssub.s32 %s25, 1
        // Predicated region
        $region13: #{tpu_custom_call.1} parent=11 // pred_check
          %p223 = pneg %p72
        $region14: #{tpu_custom_call.1} parent=11 // pred_check_branch
          %225 = sbr.rel (%p223) target = $region16
        $region15: #{tpu_custom_call.1} parent=11 // pred_region
          %227 = vsyncadd [#allocation7], 0
          %s228 = sshll.u32 %s1, 4
          %s229 = int_to_ptr.hbm [resolvable:$true] %s228
          %s230 = sshll.u32 [#allocation6], 4
          %s231 = int_to_ptr.vmem [resolvable:$true] %s230
          %236 = dma.hbm_to_vmem [thread:$0]  %s229, 2048, %s231, [#allocation7], 64, 64, 4
        $region16: #{tpu_custom_call.1} parent=11 // pred_fallthru
          _
        // Predicated region
        $region17: #{tpu_custom_call.1} parent=11 // pred_check
          %p237 = pneg %p93
        $region18: #{tpu_custom_call.1} parent=11 // pred_check_branch
          %239 = sbr.rel (%p237) target = $region20
        $region19: #{tpu_custom_call.1} parent=11 // pred_region
          _
        $region20: #{tpu_custom_call.1} parent=11 // pred_fallthru
          _
        // Predicated region
        $region21: #{tpu_custom_call.1} parent=11 // pred_check
          %p240 = pneg %p114
        $region22: #{tpu_custom_call.1} parent=11 // pred_check_branch
          %242 = sbr.rel (%p240) target = $region24
        $region23: #{tpu_custom_call.1} parent=11 // pred_region
          _
        $region24: #{tpu_custom_call.1} parent=11 // pred_fallthru
          _
        // Predicated region
        $region25: #{tpu_custom_call.1} parent=11 // pred_check
          %p243 = pneg %p135
        $region26: #{tpu_custom_call.1} parent=11 // pred_check_branch
          %245 = sbr.rel (%p243) target = $region28
        $region27: #{tpu_custom_call.1} parent=11 // pred_region
          %247 = vsyncadd [#allocation7], 0
          %s248 = sshll.u32 %s4, 4
          %s249 = int_to_ptr.hbm [resolvable:$true] %s248
          %s250 = sshll.u32 [#allocation8], 4
          %s251 = int_to_ptr.vmem [resolvable:$true] %s250
          %256 = dma.hbm_to_vmem [thread:$0]  %s249, 6144, %s251, [#allocation7], 64, 64, 4
        $region28: #{tpu_custom_call.1} parent=11 // pred_fallthru
          _
        // Predicated region
        $region29: #{tpu_custom_call.1} parent=11 // pred_check
          %p257 = pneg %p156
        $region30: #{tpu_custom_call.1} parent=11 // pred_check_branch
          %259 = sbr.rel (%p257) target = $region32
        $region31: #{tpu_custom_call.1} parent=11 // pred_region
          %261 = vsyncadd [#allocation10], 0
          %s263 = sshll.u32 %s5, 4
          %s264 = int_to_ptr.hbm [resolvable:$true] %s263
          %s265 = sshll.u32 [#allocation9], 4
          %s266 = int_to_ptr.vmem [resolvable:$true] %s265
          %268 = dma.hbm_to_vmem [thread:$0]  %s264, 128, %s266, [#allocation10]
        $region32: #{tpu_custom_call.1} parent=11 // pred_fallthru
          _
      $region12: #{tpu_custom_call.1} parent=5 // pred_fallthru
        _
      %p269 = scmp.lt.s32.totalorder %s25, 4
      // Predicated region
      $region33: #{tpu_custom_call.1} parent=5 // pred_check
        %p270 = pneg %p269
      $region34: #{tpu_custom_call.1} parent=5 // pred_check_branch
        %272 = sbr.rel (%p270) target = $region36
      $region35: #{tpu_custom_call.1} parent=5 // pred_region
        // Predicated region
        $region37: #{tpu_custom_call.1} parent=35 // pred_check
          %p273 = pneg %p45
        $region38: #{tpu_custom_call.1} parent=35 // pred_check_branch
          %275 = sbr.rel (%p273) target = $region40
        $region39: #{tpu_custom_call.1} parent=35 // pred_region
          %s276 = sand.u32 %s35, 1
          %s277 = scalar_lea.sflag [#allocation4], %s276
          %s278 = sand.u32 %s35, 1
          %s279 = smul.addr %s278, 384
          %s280 = scalar_lea.vmem [#allocation3], %s279
          %s281 = smul.u32 8, %s25
          %283 = vsyncadd %s277, 0
          %s284 = smul.addr %s281, 12
          %s285 = smul.addr %s284, 4
          %s286 = scalar_lea.hbm %s0, %s285
          %s287 = sshll.u32 %s286, 4
          %s288 = int_to_ptr.hbm [resolvable:$true] %s287
          %s289 = sshll.u32 %s280, 4
          %s290 = int_to_ptr.vmem [resolvable:$true] %s289
          %295 = dma.hbm_to_vmem [thread:$0]  %s288, 6144, %s290, %s277, 128, 128, 8
        $region40: #{tpu_custom_call.1} parent=35 // pred_fallthru
          _
      $region36: #{tpu_custom_call.1} parent=5 // pred_fallthru
        _
      %p296 = scmp.le.s32.totalorder 1, %s25
      %p297 = scmp.lt.s32.totalorder %s25, 5
      %p298 = pnand %p296, %p297
      %p299 = pneg %p298
      // Predicated region
      $region41: #{tpu_custom_call.1} parent=5 // pred_check
        _
      $region42: #{tpu_custom_call.1} parent=5 // pred_check_branch
        %301 = sbr.rel (%p298) target = $region44
      $region43: #{tpu_custom_call.1} parent=5 // pred_region
        %s302 = ssub.s32 %s25, 1
        %s303 = sand.u32 %s38, 1
        %s304 = scalar_lea.sflag [#allocation4], %s303
        %s305 = sand.u32 %s38, 1
        %s306 = smul.addr %s305, 384
        %s307 = scalar_lea.vmem [#allocation3], %s306
        // Predicated region
        $region45: #{tpu_custom_call.1} parent=43 // pred_check
          %p308 = pneg %p51
        $region46: #{tpu_custom_call.1} parent=43 // pred_check_branch
          %310 = sbr.rel (%p308) target = $region48
        $region47: #{tpu_custom_call.1} parent=43 // pred_region
          %312 = dma.done %s304, 6144
        $region48: #{tpu_custom_call.1} parent=43 // pred_fallthru
          _
        // Predicated region
        $region49: #{tpu_custom_call.1} parent=43 // pred_check
          %p313 = pneg %p72
        $region50: #{tpu_custom_call.1} parent=43 // pred_check_branch
          %315 = sbr.rel (%p313) target = $region52
        $region51: #{tpu_custom_call.1} parent=43 // pred_region
          %317 = dma.done [#allocation7], 2048
        $region52: #{tpu_custom_call.1} parent=43 // pred_fallthru
          _
        // Predicated region
        $region53: #{tpu_custom_call.1} parent=43 // pred_check
          %p318 = pneg %p135
        $region54: #{tpu_custom_call.1} parent=43 // pred_check_branch
          %320 = sbr.rel (%p318) target = $region56
        $region55: #{tpu_custom_call.1} parent=43 // pred_region
          %322 = dma.done [#allocation7], 6144
        $region56: #{tpu_custom_call.1} parent=43 // pred_fallthru
          _
        // Predicated region
        $region57: #{tpu_custom_call.1} parent=43 // pred_check
          %p323 = pneg %p156
        $region58: #{tpu_custom_call.1} parent=43 // pred_check_branch
          %325 = sbr.rel (%p323) target = $region60
        $region59: #{tpu_custom_call.1} parent=43 // pred_region
          %327 = dma.done [#allocation10], 128
        $region60: #{tpu_custom_call.1} parent=43 // pred_fallthru
          _
        %s328 = sand.u32 %s38, 1
        %s329 = scalar_lea.sflag [#allocation4], %s328
        %s330 = sand.u32 %s38, 1
        %s331 = smul.addr %s330, 384
        %s332 = scalar_lea.vmem [#allocation3], %s331
        %p333 = pneg %p51
        %p334 = pneg %p48
        %p335 = pneg %p72
        %p336 = pneg %p69
        %p337 = pneg %p93
        %p338 = pneg %p90
        %p339 = pneg %p114
        %p340 = pneg %p111
        %p341 = pneg %p135
        %p342 = pneg %p132
        %p343 = pneg %p156
        %p344 = pneg %p153
        %p345 = pneg %p182
        %p346 = pneg %p179
        %s347 = sand.u32 %s169, 1
        %s348 = scalar_lea.sflag [#allocation5], %s347
        %s349 = sand.u32 %s169, 1
        %s350 = smul.addr %s349, 48
        %s351 = scalar_lea.vmem [#allocation11], %s350
        %p352 = pneg %p208
        %p353 = pneg %p205
        %s354 = sand.u32 %s195, 1
        %s355 = scalar_lea.sflag [#allocation13], %s354
        %s356 = sand.u32 %s195, 1
        %s357 = smul.addr %s356, 48
        %s358 = scalar_lea.vmem [#allocation12], %s357
        %s359 = smul.u32 8, %s30
        %v360 = vld [vmem:[%s307] sm:$0xff]
        %v361 = vld [vmem:[%s307 + $0x30] sm:$0xff]
        %v362 = vld [vmem:[%s307 + $0x60] sm:$0xff]
        %v363 = vld [vmem:[%s307 + $0x90] sm:$0xff]
        %v364 = vld [vmem:[%s307 + $0xc0] sm:$0xff]
        %v365 = vld [vmem:[%s307 + $0xf0] sm:$0xff]
        %v366 = vld [vmem:[%s307 + $0x120] sm:$0xff]
        %v367 = vld [vmem:[%s307 + $0x150] sm:$0xff]
        %v368 = vunpack.c.l.bf16 %v360
        %v369 = vunpack.c.h.bf16 %v360
        %v370 = vunpack.c.l.bf16 %v361
        %v371 = vunpack.c.h.bf16 %v361
        %v372 = vunpack.c.l.bf16 %v362
        %v373 = vunpack.c.h.bf16 %v362
        %v374 = vunpack.c.l.bf16 %v363
        %v375 = vunpack.c.h.bf16 %v363
        %v376 = vunpack.c.l.bf16 %v364
        %v377 = vunpack.c.h.bf16 %v364
        %v378 = vunpack.c.l.bf16 %v365
        %v379 = vunpack.c.h.bf16 %v365
        %v380 = vunpack.c.l.bf16 %v366
        %v381 = vunpack.c.h.bf16 %v366
        %v382 = vunpack.c.l.bf16 %v367
        %v383 = vunpack.c.h.bf16 %v367
        %v384 = vrot.slane %v368, 4
        %v385 = vadd.f32 %v368, %v384
        %v386 = vrot.slane %v385, 2
        %v387 = vadd.f32 %v385, %v386
        %v388 = vrot.slane %v387, 1
        %v389 = vadd.f32 %v387, %v388
        %v390 = vrot.slane %v369, 4
        %v391 = vadd.f32 %v369, %v390
        %v392 = vrot.slane %v391, 2
        %v393 = vadd.f32 %v391, %v392
        %v394 = vrot.slane %v393, 1
        %v395 = vadd.f32 %v393, %v394
        %v396 = vrot.slane %v370, 4
        %v397 = vadd.f32 %v370, %v396
        %v398 = vrot.slane %v397, 2
        %v399 = vadd.f32 %v397, %v398
        %v400 = vrot.slane %v399, 1
        %v401 = vadd.f32 %v399, %v400
        %v402 = vrot.slane %v371, 4
        %v403 = vadd.f32 %v371, %v402
        %v404 = vrot.slane %v403, 2
        %v405 = vadd.f32 %v403, %v404
        %v406 = vrot.slane %v405, 1
        %v407 = vadd.f32 %v405, %v406
        %v408 = vrot.slane %v372, 4
        %v409 = vadd.f32 %v372, %v408
        %v410 = vrot.slane %v409, 2
        %v411 = vadd.f32 %v409, %v410
        %v412 = vrot.slane %v411, 1
        %v413 = vadd.f32 %v411, %v412
        %v414 = vrot.slane %v373, 4
        %v415 = vadd.f32 %v373, %v414
        %v416 = vrot.slane %v415, 2
        %v417 = vadd.f32 %v415, %v416
        %v418 = vrot.slane %v417, 1
        %v419 = vadd.f32 %v417, %v418
        %v420 = vrot.slane %v374, 4
        %v421 = vadd.f32 %v374, %v420
        %v422 = vrot.slane %v421, 2
        %v423 = vadd.f32 %v421, %v422
        %v424 = vrot.slane %v423, 1
        %v425 = vadd.f32 %v423, %v424
        %v426 = vrot.slane %v375, 4
        %v427 = vadd.f32 %v375, %v426
        %v428 = vrot.slane %v427, 2
        %v429 = vadd.f32 %v427, %v428
        %v430 = vrot.slane %v429, 1
        %v431 = vadd.f32 %v429, %v430
        %v432 = vrot.slane %v376, 4
        %v433 = vadd.f32 %v376, %v432
        %v434 = vrot.slane %v433, 2
        %v435 = vadd.f32 %v433, %v434
        %v436 = vrot.slane %v435, 1
        %v437 = vadd.f32 %v435, %v436
        %v438 = vrot.slane %v377, 4
        %v439 = vadd.f32 %v377, %v438
        %v440 = vrot.slane %v439, 2
        %v441 = vadd.f32 %v439, %v440
        %v442 = vrot.slane %v441, 1
        %v443 = vadd.f32 %v441, %v442
        %v444 = vrot.slane %v378, 4
        %v445 = vadd.f32 %v378, %v444
        %v446 = vrot.slane %v445, 2
        %v447 = vadd.f32 %v445, %v446
        %v448 = vrot.slane %v447, 1
        %v449 = vadd.f32 %v447, %v448
        %v450 = vrot.slane %v379, 4
        %v451 = vadd.f32 %v379, %v450
        %v452 = vrot.slane %v451, 2
        %v453 = vadd.f32 %v451, %v452
        %v454 = vrot.slane %v453, 1
        %v455 = vadd.f32 %v453, %v454
        %v456 = vrot.slane %v380, 4
        %v457 = vadd.f32 %v380, %v456
        %v458 = vrot.slane %v457, 2
        %v459 = vadd.f32 %v457, %v458
        %v460 = vrot.slane %v459, 1
        %v461 = vadd.f32 %v459, %v460
        %v462 = vrot.slane %v381, 4
        %v463 = vadd.f32 %v381, %v462
        %v464 = vrot.slane %v463, 2
        %v465 = vadd.f32 %v463, %v464
        %v466 = vrot.slane %v465, 1
        %v467 = vadd.f32 %v465, %v466
        %v468 = vrot.slane %v382, 4
        %v469 = vadd.f32 %v382, %v468
        %v470 = vrot.slane %v469, 2
        %v471 = vadd.f32 %v469, %v470
        %v472 = vrot.slane %v471, 1
        %v473 = vadd.f32 %v471, %v472
        %v474 = vrot.slane %v383, 4
        %v475 = vadd.f32 %v383, %v474
        %v476 = vrot.slane %v475, 2
        %v477 = vadd.f32 %v475, %v476
        %v478 = vrot.slane %v477, 1
        %v479 = vadd.f32 %v477, %v478
        %v480 = vpack.c.bf16 %v395, %v389
        %v481 = vpack.c.bf16 %v407, %v401
        %v482 = vpack.c.bf16 %v419, %v413
        %v483 = vpack.c.bf16 %v431, %v425
        %v484 = vpack.c.bf16 %v443, %v437
        %v485 = vpack.c.bf16 %v455, %v449
        %v486 = vpack.c.bf16 %v467, %v461
        %v487 = vpack.c.bf16 %v479, %v473
        %v496 = vunpack.c.l.b16 %v480
        %v497 = vunpack.c.h.b16 %v480
        %v498 = vunpack.c.l.b16 %v481
        %v499 = vunpack.c.h.b16 %v481
        %v500 = vunpack.c.l.b16 %v482
        %v501 = vunpack.c.h.b16 %v482
        %v502 = vunpack.c.l.b16 %v483
        %v503 = vunpack.c.h.b16 %v483
        %v504 = vunpack.c.l.b16 %v484
        %v505 = vunpack.c.h.b16 %v484
        %v506 = vunpack.c.l.b16 %v485
        %v507 = vunpack.c.h.b16 %v485
        %v508 = vunpack.c.l.b16 %v486
        %v509 = vunpack.c.h.b16 %v486
        %v510 = vunpack.c.l.b16 %v487
        %v511 = vunpack.c.h.b16 %v487
        %vm512 = vcmask 1041409
        %v513 = vsel %vm512, %v498, %v496
        %vm514 = vcmask 1042434
        %v515 = vsel %vm514, %v500, %v513
        %vm516 = vcmask 1043459
        %v517 = vsel %vm516, %v502, %v515
        %vm518 = vcmask 1044484
        %v519 = vsel %vm518, %v504, %v517
        %vm520 = vcmask 1045509
        %v521 = vsel %vm520, %v506, %v519
        %vm522 = vcmask 1046534
        %v523 = vsel %vm522, %v508, %v521
        %vm524 = vcmask 1047559
        %v525 = vsel %vm524, %v510, %v523
        %v526 = vsel %vm512, %v499, %v497
        %v527 = vsel %vm514, %v501, %v526
        %v528 = vsel %vm516, %v503, %v527
        %v529 = vsel %vm518, %v505, %v528
        %v530 = vsel %vm520, %v507, %v529
        %v531 = vsel %vm522, %v509, %v530
        %v532 = vsel %vm524, %v511, %v531
        %v533 = vpack.c.b16 %v532, %v525
        %535 = vst [vmem:[#allocation2] sm:$0xff] %v533
        %v536 = vld [vmem:[%s307 + $0x8] sm:$0xff]
        %v537 = vld [vmem:[%s307 + $0x38] sm:$0xff]
        %v538 = vld [vmem:[%s307 + $0x68] sm:$0xff]
        %v539 = vld [vmem:[%s307 + $0x98] sm:$0xff]
        %v540 = vld [vmem:[%s307 + $0xc8] sm:$0xff]
        %v541 = vld [vmem:[%s307 + $0xf8] sm:$0xff]
        %v542 = vld [vmem:[%s307 + $0x128] sm:$0xff]
        %v543 = vld [vmem:[%s307 + $0x158] sm:$0xff]
        %v544 = vunpack.c.l.bf16 %v536
        %v545 = vunpack.c.h.bf16 %v536
        %v546 = vunpack.c.l.bf16 %v537
        %v547 = vunpack.c.h.bf16 %v537
        %v548 = vunpack.c.l.bf16 %v538
        %v549 = vunpack.c.h.bf16 %v538
        %v550 = vunpack.c.l.bf16 %v539
        %v551 = vunpack.c.h.bf16 %v539
        %v552 = vunpack.c.l.bf16 %v540
        %v553 = vunpack.c.h.bf16 %v540
        %v554 = vunpack.c.l.bf16 %v541
        %v555 = vunpack.c.h.bf16 %v541
        %v556 = vunpack.c.l.bf16 %v542
        %v557 = vunpack.c.h.bf16 %v542
        %v558 = vunpack.c.l.bf16 %v543
        %v559 = vunpack.c.h.bf16 %v543
        %v560 = vrot.slane %v544, 4
        %v561 = vadd.f32 %v544, %v560
        %v562 = vrot.slane %v561, 2
        %v563 = vadd.f32 %v561, %v562
        %v564 = vrot.slane %v563, 1
        %v565 = vadd.f32 %v563, %v564
        %v566 = vrot.slane %v545, 4
        %v567 = vadd.f32 %v545, %v566
        %v568 = vrot.slane %v567, 2
        %v569 = vadd.f32 %v567, %v568
        %v570 = vrot.slane %v569, 1
        %v571 = vadd.f32 %v569, %v570
        %v572 = vrot.slane %v546, 4
        %v573 = vadd.f32 %v546, %v572
        %v574 = vrot.slane %v573, 2
        %v575 = vadd.f32 %v573, %v574
        %v576 = vrot.slane %v575, 1
        %v577 = vadd.f32 %v575, %v576
        %v578 = vrot.slane %v547, 4
        %v579 = vadd.f32 %v547, %v578
        %v580 = vrot.slane %v579, 2
        %v581 = vadd.f32 %v579, %v580
        %v582 = vrot.slane %v581, 1
        %v583 = vadd.f32 %v581, %v582
        %v584 = vrot.slane %v548, 4
        %v585 = vadd.f32 %v548, %v584
        %v586 = vrot.slane %v585, 2
        %v587 = vadd.f32 %v585, %v586
        %v588 = vrot.slane %v587, 1
        %v589 = vadd.f32 %v587, %v588
        %v590 = vrot.slane %v549, 4
        %v591 = vadd.f32 %v549, %v590
        %v592 = vrot.slane %v591, 2
        %v593 = vadd.f32 %v591, %v592
        %v594 = vrot.slane %v593, 1
        %v595 = vadd.f32 %v593, %v594
        %v596 = vrot.slane %v550, 4
        %v597 = vadd.f32 %v550, %v596
        %v598 = vrot.slane %v597, 2
        %v599 = vadd.f32 %v597, %v598
        %v600 = vrot.slane %v599, 1
        %v601 = vadd.f32 %v599, %v600
        %v602 = vrot.slane %v551, 4
        %v603 = vadd.f32 %v551, %v602
        %v604 = vrot.slane %v603, 2
        %v605 = vadd.f32 %v603, %v604
        %v606 = vrot.slane %v605, 1
        %v607 = vadd.f32 %v605, %v606
        %v608 = vrot.slane %v552, 4
        %v609 = vadd.f32 %v552, %v608
        %v610 = vrot.slane %v609, 2
        %v611 = vadd.f32 %v609, %v610
        %v612 = vrot.slane %v611, 1
        %v613 = vadd.f32 %v611, %v612
        %v614 = vrot.slane %v553, 4
        %v615 = vadd.f32 %v553, %v614
        %v616 = vrot.slane %v615, 2
        %v617 = vadd.f32 %v615, %v616
        %v618 = vrot.slane %v617, 1
        %v619 = vadd.f32 %v617, %v618
        %v620 = vrot.slane %v554, 4
        %v621 = vadd.f32 %v554, %v620
        %v622 = vrot.slane %v621, 2
        %v623 = vadd.f32 %v621, %v622
        %v624 = vrot.slane %v623, 1
        %v625 = vadd.f32 %v623, %v624
        %v626 = vrot.slane %v555, 4
        %v627 = vadd.f32 %v555, %v626
        %v628 = vrot.slane %v627, 2
        %v629 = vadd.f32 %v627, %v628
        %v630 = vrot.slane %v629, 1
        %v631 = vadd.f32 %v629, %v630
        %v632 = vrot.slane %v556, 4
        %v633 = vadd.f32 %v556, %v632
        %v634 = vrot.slane %v633, 2
        %v635 = vadd.f32 %v633, %v634
        %v636 = vrot.slane %v635, 1
        %v637 = vadd.f32 %v635, %v636
        %v638 = vrot.slane %v557, 4
        %v639 = vadd.f32 %v557, %v638
        %v640 = vrot.slane %v639, 2
        %v641 = vadd.f32 %v639, %v640
        %v642 = vrot.slane %v641, 1
        %v643 = vadd.f32 %v641, %v642
        %v644 = vrot.slane %v558, 4
        %v645 = vadd.f32 %v558, %v644
        %v646 = vrot.slane %v645, 2
        %v647 = vadd.f32 %v645, %v646
        %v648 = vrot.slane %v647, 1
        %v649 = vadd.f32 %v647, %v648
        %v650 = vrot.slane %v559, 4
        %v651 = vadd.f32 %v559, %v650
        %v652 = vrot.slane %v651, 2
        %v653 = vadd.f32 %v651, %v652
        %v654 = vrot.slane %v653, 1
        %v655 = vadd.f32 %v653, %v654
        %v656 = vpack.c.bf16 %v571, %v565
        %v657 = vpack.c.bf16 %v583, %v577
        %v658 = vpack.c.bf16 %v595, %v589
        %v659 = vpack.c.bf16 %v607, %v601
        %v660 = vpack.c.bf16 %v619, %v613
        %v661 = vpack.c.bf16 %v631, %v625
        %v662 = vpack.c.bf16 %v643, %v637
        %v663 = vpack.c.bf16 %v655, %v649
        %v672 = vunpack.c.l.b16 %v656
        %v673 = vunpack.c.h.b16 %v656
        %v674 = vunpack.c.l.b16 %v657
        %v675 = vunpack.c.h.b16 %v657
        %v676 = vunpack.c.l.b16 %v658
        %v677 = vunpack.c.h.b16 %v658
        %v678 = vunpack.c.l.b16 %v659
        %v679 = vunpack.c.h.b16 %v659
        %v680 = vunpack.c.l.b16 %v660
        %v681 = vunpack.c.h.b16 %v660
        %v682 = vunpack.c.l.b16 %v661
        %v683 = vunpack.c.h.b16 %v661
        %v684 = vunpack.c.l.b16 %v662
        %v685 = vunpack.c.h.b16 %v662
        %v686 = vunpack.c.l.b16 %v663
        %v687 = vunpack.c.h.b16 %v663
        %v688 = vsel %vm512, %v674, %v672
        %v689 = vsel %vm514, %v676, %v688
        %v690 = vsel %vm516, %v678, %v689
        %v691 = vsel %vm518, %v680, %v690
        %v692 = vsel %vm520, %v682, %v691
        %v693 = vsel %vm522, %v684, %v692
        %v694 = vsel %vm524, %v686, %v693
        %v695 = vsel %vm512, %v675, %v673
        %v696 = vsel %vm514, %v677, %v695
        %v697 = vsel %vm516, %v679, %v696
        %v698 = vsel %vm518, %v681, %v697
        %v699 = vsel %vm520, %v683, %v698
        %v700 = vsel %vm522, %v685, %v699
        %v701 = vsel %vm524, %v687, %v700
        %v702 = vpack.c.b16 %v701, %v694
        %704 = vst [vmem:[#allocation2 + $0x8] sm:$0xff] %v702
        %v705 = vld [vmem:[%s307 + $0x10] sm:$0xff]
        %v706 = vld [vmem:[%s307 + $0x40] sm:$0xff]
        %v707 = vld [vmem:[%s307 + $0x70] sm:$0xff]
        %v708 = vld [vmem:[%s307 + $0xa0] sm:$0xff]
        %v709 = vld [vmem:[%s307 + $0xd0] sm:$0xff]
        %v710 = vld [vmem:[%s307 + $0x100] sm:$0xff]
        %v711 = vld [vmem:[%s307 + $0x130] sm:$0xff]
        %v712 = vld [vmem:[%s307 + $0x160] sm:$0xff]
        %v713 = vunpack.c.l.bf16 %v705
        %v714 = vunpack.c.h.bf16 %v705
        %v715 = vunpack.c.l.bf16 %v706
        %v716 = vunpack.c.h.bf16 %v706
        %v717 = vunpack.c.l.bf16 %v707
        %v718 = vunpack.c.h.bf16 %v707
        %v719 = vunpack.c.l.bf16 %v708
        %v720 = vunpack.c.h.bf16 %v708
        %v721 = vunpack.c.l.bf16 %v709
        %v722 = vunpack.c.h.bf16 %v709
        %v723 = vunpack.c.l.bf16 %v710
        %v724 = vunpack.c.h.bf16 %v710
        %v725 = vunpack.c.l.bf16 %v711
        %v726 = vunpack.c.h.bf16 %v711
        %v727 = vunpack.c.l.bf16 %v712
        %v728 = vunpack.c.h.bf16 %v712
        %v729 = vrot.slane %v713, 4
        %v730 = vadd.f32 %v713, %v729
        %v731 = vrot.slane %v730, 2
        %v732 = vadd.f32 %v730, %v731
        %v733 = vrot.slane %v732, 1
        %v734 = vadd.f32 %v732, %v733
        %v735 = vrot.slane %v714, 4
        %v736 = vadd.f32 %v714, %v735
        %v737 = vrot.slane %v736, 2
        %v738 = vadd.f32 %v736, %v737
        %v739 = vrot.slane %v738, 1
        %v740 = vadd.f32 %v738, %v739
        %v741 = vrot.slane %v715, 4
        %v742 = vadd.f32 %v715, %v741
        %v743 = vrot.slane %v742, 2
        %v744 = vadd.f32 %v742, %v743
        %v745 = vrot.slane %v744, 1
        %v746 = vadd.f32 %v744, %v745
        %v747 = vrot.slane %v716, 4
        %v748 = vadd.f32 %v716, %v747
        %v749 = vrot.slane %v748, 2
        %v750 = vadd.f32 %v748, %v749
        %v751 = vrot.slane %v750, 1
        %v752 = vadd.f32 %v750, %v751
        %v753 = vrot.slane %v717, 4
        %v754 = vadd.f32 %v717, %v753
        %v755 = vrot.slane %v754, 2
        %v756 = vadd.f32 %v754, %v755
        %v757 = vrot.slane %v756, 1
        %v758 = vadd.f32 %v756, %v757
        %v759 = vrot.slane %v718, 4
        %v760 = vadd.f32 %v718, %v759
        %v761 = vrot.slane %v760, 2
        %v762 = vadd.f32 %v760, %v761
        %v763 = vrot.slane %v762, 1
        %v764 = vadd.f32 %v762, %v763
        %v765 = vrot.slane %v719, 4
        %v766 = vadd.f32 %v719, %v765
        %v767 = vrot.slane %v766, 2
        %v768 = vadd.f32 %v766, %v767
        %v769 = vrot.slane %v768, 1
        %v770 = vadd.f32 %v768, %v769
        %v771 = vrot.slane %v720, 4
        %v772 = vadd.f32 %v720, %v771
        %v773 = vrot.slane %v772, 2
        %v774 = vadd.f32 %v772, %v773
        %v775 = vrot.slane %v774, 1
        %v776 = vadd.f32 %v774, %v775
        %v777 = vrot.slane %v721, 4
        %v778 = vadd.f32 %v721, %v777
        %v779 = vrot.slane %v778, 2
        %v780 = vadd.f32 %v778, %v779
        %v781 = vrot.slane %v780, 1
        %v782 = vadd.f32 %v780, %v781
        %v783 = vrot.slane %v722, 4
        %v784 = vadd.f32 %v722, %v783
        %v785 = vrot.slane %v784, 2
        %v786 = vadd.f32 %v784, %v785
        %v787 = vrot.slane %v786, 1
        %v788 = vadd.f32 %v786, %v787
        %v789 = vrot.slane %v723, 4
        %v790 = vadd.f32 %v723, %v789
        %v791 = vrot.slane %v790, 2
        %v792 = vadd.f32 %v790, %v791
        %v793 = vrot.slane %v792, 1
        %v794 = vadd.f32 %v792, %v793
        %v795 = vrot.slane %v724, 4
        %v796 = vadd.f32 %v724, %v795
        %v797 = vrot.slane %v796, 2
        %v798 = vadd.f32 %v796, %v797
        %v799 = vrot.slane %v798, 1
        %v800 = vadd.f32 %v798, %v799
        %v801 = vrot.slane %v725, 4
        %v802 = vadd.f32 %v725, %v801
        %v803 = vrot.slane %v802, 2
        %v804 = vadd.f32 %v802, %v803
        %v805 = vrot.slane %v804, 1
        %v806 = vadd.f32 %v804, %v805
        %v807 = vrot.slane %v726, 4
        %v808 = vadd.f32 %v726, %v807
        %v809 = vrot.slane %v808, 2
        %v810 = vadd.f32 %v808, %v809
        %v811 = vrot.slane %v810, 1
        %v812 = vadd.f32 %v810, %v811
        %v813 = vrot.slane %v727, 4
        %v814 = vadd.f32 %v727, %v813
        %v815 = vrot.slane %v814, 2
        %v816 = vadd.f32 %v814, %v815
        %v817 = vrot.slane %v816, 1
        %v818 = vadd.f32 %v816, %v817
        %v819 = vrot.slane %v728, 4
        %v820 = vadd.f32 %v728, %v819
        %v821 = vrot.slane %v820, 2
        %v822 = vadd.f32 %v820, %v821
        %v823 = vrot.slane %v822, 1
        %v824 = vadd.f32 %v822, %v823
        %v825 = vpack.c.bf16 %v740, %v734
        %v826 = vpack.c.bf16 %v752, %v746
        %v827 = vpack.c.bf16 %v764, %v758
        %v828 = vpack.c.bf16 %v776, %v770
        %v829 = vpack.c.bf16 %v788, %v782
        %v830 = vpack.c.bf16 %v800, %v794
        %v831 = vpack.c.bf16 %v812, %v806
        %v832 = vpack.c.bf16 %v824, %v818
        %v841 = vunpack.c.l.b16 %v825
        %v842 = vunpack.c.h.b16 %v825
        %v843 = vunpack.c.l.b16 %v826
        %v844 = vunpack.c.h.b16 %v826
        %v845 = vunpack.c.l.b16 %v827
        %v846 = vunpack.c.h.b16 %v827
        %v847 = vunpack.c.l.b16 %v828
        %v848 = vunpack.c.h.b16 %v828
        %v849 = vunpack.c.l.b16 %v829
        %v850 = vunpack.c.h.b16 %v829
        %v851 = vunpack.c.l.b16 %v830
        %v852 = vunpack.c.h.b16 %v830
        %v853 = vunpack.c.l.b16 %v831
        %v854 = vunpack.c.h.b16 %v831
        %v855 = vunpack.c.l.b16 %v832
        %v856 = vunpack.c.h.b16 %v832
        %v857 = vsel %vm512, %v843, %v841
        %v858 = vsel %vm514, %v845, %v857
        %v859 = vsel %vm516, %v847, %v858
        %v860 = vsel %vm518, %v849, %v859
        %v861 = vsel %vm520, %v851, %v860
        %v862 = vsel %vm522, %v853, %v861
        %v863 = vsel %vm524, %v855, %v862
        %v864 = vsel %vm512, %v844, %v842
        %v865 = vsel %vm514, %v846, %v864
        %v866 = vsel %vm516, %v848, %v865
        %v867 = vsel %vm518, %v850, %v866
        %v868 = vsel %vm520, %v852, %v867
        %v869 = vsel %vm522, %v854, %v868
        %v870 = vsel %vm524, %v856, %v869
        %v871 = vpack.c.b16 %v870, %v863
        %873 = vst [vmem:[#allocation2 + $0x10] sm:$0xff] %v871
        %v874 = vld [vmem:[%s307 + $0x18] sm:$0xff]
        %v875 = vld [vmem:[%s307 + $0x48] sm:$0xff]
        %v876 = vld [vmem:[%s307 + $0x78] sm:$0xff]
        %v877 = vld [vmem:[%s307 + $0xa8] sm:$0xff]
        %v878 = vld [vmem:[%s307 + $0xd8] sm:$0xff]
        %v879 = vld [vmem:[%s307 + $0x108] sm:$0xff]
        %v880 = vld [vmem:[%s307 + $0x138] sm:$0xff]
        %v881 = vld [vmem:[%s307 + $0x168] sm:$0xff]
        %v882 = vunpack.c.l.bf16 %v874
        %v883 = vunpack.c.h.bf16 %v874
        %v884 = vunpack.c.l.bf16 %v875
        %v885 = vunpack.c.h.bf16 %v875
        %v886 = vunpack.c.l.bf16 %v876
        %v887 = vunpack.c.h.bf16 %v876
        %v888 = vunpack.c.l.bf16 %v877
        %v889 = vunpack.c.h.bf16 %v877
        %v890 = vunpack.c.l.bf16 %v878
        %v891 = vunpack.c.h.bf16 %v878
        %v892 = vunpack.c.l.bf16 %v879
        %v893 = vunpack.c.h.bf16 %v879
        %v894 = vunpack.c.l.bf16 %v880
        %v895 = vunpack.c.h.bf16 %v880
        %v896 = vunpack.c.l.bf16 %v881
        %v897 = vunpack.c.h.bf16 %v881
        %v898 = vrot.slane %v882, 4
        %v899 = vadd.f32 %v882, %v898
        %v900 = vrot.slane %v899, 2
        %v901 = vadd.f32 %v899, %v900
        %v902 = vrot.slane %v901, 1
        %v903 = vadd.f32 %v901, %v902
        %v904 = vrot.slane %v883, 4
        %v905 = vadd.f32 %v883, %v904
        %v906 = vrot.slane %v905, 2
        %v907 = vadd.f32 %v905, %v906
        %v908 = vrot.slane %v907, 1
        %v909 = vadd.f32 %v907, %v908
        %v910 = vrot.slane %v884, 4
        %v911 = vadd.f32 %v884, %v910
        %v912 = vrot.slane %v911, 2
        %v913 = vadd.f32 %v911, %v912
        %v914 = vrot.slane %v913, 1
        %v915 = vadd.f32 %v913, %v914
        %v916 = vrot.slane %v885, 4
        %v917 = vadd.f32 %v885, %v916
        %v918 = vrot.slane %v917, 2
        %v919 = vadd.f32 %v917, %v918
        %v920 = vrot.slane %v919, 1
        %v921 = vadd.f32 %v919, %v920
        %v922 = vrot.slane %v886, 4
        %v923 = vadd.f32 %v886, %v922
        %v924 = vrot.slane %v923, 2
        %v925 = vadd.f32 %v923, %v924
        %v926 = vrot.slane %v925, 1
        %v927 = vadd.f32 %v925, %v926
        %v928 = vrot.slane %v887, 4
        %v929 = vadd.f32 %v887, %v928
        %v930 = vrot.slane %v929, 2
        %v931 = vadd.f32 %v929, %v930
        %v932 = vrot.slane %v931, 1
        %v933 = vadd.f32 %v931, %v932
        %v934 = vrot.slane %v888, 4
        %v935 = vadd.f32 %v888, %v934
        %v936 = vrot.slane %v935, 2
        %v937 = vadd.f32 %v935, %v936
        %v938 = vrot.slane %v937, 1
        %v939 = vadd.f32 %v937, %v938
        %v940 = vrot.slane %v889, 4
        %v941 = vadd.f32 %v889, %v940
        %v942 = vrot.slane %v941, 2
        %v943 = vadd.f32 %v941, %v942
        %v944 = vrot.slane %v943, 1
        %v945 = vadd.f32 %v943, %v944
        %v946 = vrot.slane %v890, 4
        %v947 = vadd.f32 %v890, %v946
        %v948 = vrot.slane %v947, 2
        %v949 = vadd.f32 %v947, %v948
        %v950 = vrot.slane %v949, 1
        %v951 = vadd.f32 %v949, %v950
        %v952 = vrot.slane %v891, 4
        %v953 = vadd.f32 %v891, %v952
        %v954 = vrot.slane %v953, 2
        %v955 = vadd.f32 %v953, %v954
        %v956 = vrot.slane %v955, 1
        %v957 = vadd.f32 %v955, %v956
        %v958 = vrot.slane %v892, 4
        %v959 = vadd.f32 %v892, %v958
        %v960 = vrot.slane %v959, 2
        %v961 = vadd.f32 %v959, %v960
        %v962 = vrot.slane %v961, 1
        %v963 = vadd.f32 %v961, %v962
        %v964 = vrot.slane %v893, 4
        %v965 = vadd.f32 %v893, %v964
        %v966 = vrot.slane %v965, 2
        %v967 = vadd.f32 %v965, %v966
        %v968 = vrot.slane %v967, 1
        %v969 = vadd.f32 %v967, %v968
        %v970 = vrot.slane %v894, 4
        %v971 = vadd.f32 %v894, %v970
        %v972 = vrot.slane %v971, 2
        %v973 = vadd.f32 %v971, %v972
        %v974 = vrot.slane %v973, 1
        %v975 = vadd.f32 %v973, %v974
        %v976 = vrot.slane %v895, 4
        %v977 = vadd.f32 %v895, %v976
        %v978 = vrot.slane %v977, 2
        %v979 = vadd.f32 %v977, %v978
        %v980 = vrot.slane %v979, 1
        %v981 = vadd.f32 %v979, %v980
        %v982 = vrot.slane %v896, 4
        %v983 = vadd.f32 %v896, %v982
        %v984 = vrot.slane %v983, 2
        %v985 = vadd.f32 %v983, %v984
        %v986 = vrot.slane %v985, 1
        %v987 = vadd.f32 %v985, %v986
        %v988 = vrot.slane %v897, 4
        %v989 = vadd.f32 %v897, %v988
        %v990 = vrot.slane %v989, 2
        %v991 = vadd.f32 %v989, %v990
        %v992 = vrot.slane %v991, 1
        %v993 = vadd.f32 %v991, %v992
        %v994 = vpack.c.bf16 %v909, %v903
        %v995 = vpack.c.bf16 %v921, %v915
        %v996 = vpack.c.bf16 %v933, %v927
        %v997 = vpack.c.bf16 %v945, %v939
        %v998 = vpack.c.bf16 %v957, %v951
        %v999 = vpack.c.bf16 %v969, %v963
        %v1000 = vpack.c.bf16 %v981, %v975
        %v1001 = vpack.c.bf16 %v993, %v987
        %v1010 = vunpack.c.l.b16 %v994
        %v1011 = vunpack.c.h.b16 %v994
        %v1012 = vunpack.c.l.b16 %v995
        %v1013 = vunpack.c.h.b16 %v995
        %v1014 = vunpack.c.l.b16 %v996
        %v1015 = vunpack.c.h.b16 %v996
        %v1016 = vunpack.c.l.b16 %v997
        %v1017 = vunpack.c.h.b16 %v997
        %v1018 = vunpack.c.l.b16 %v998
        %v1019 = vunpack.c.h.b16 %v998
        %v1020 = vunpack.c.l.b16 %v999
        %v1021 = vunpack.c.h.b16 %v999
        %v1022 = vunpack.c.l.b16 %v1000
        %v1023 = vunpack.c.h.b16 %v1000
        %v1024 = vunpack.c.l.b16 %v1001
        %v1025 = vunpack.c.h.b16 %v1001
        %v1026 = vsel %vm512, %v1012, %v1010
        %v1027 = vsel %vm514, %v1014, %v1026
        %v1028 = vsel %vm516, %v1016, %v1027
        %v1029 = vsel %vm518, %v1018, %v1028
        %v1030 = vsel %vm520, %v1020, %v1029
        %v1031 = vsel %vm522, %v1022, %v1030
        %v1032 = vsel %vm524, %v1024, %v1031
        %v1033 = vsel %vm512, %v1013, %v1011
        %v1034 = vsel %vm514, %v1015, %v1033
        %v1035 = vsel %vm516, %v1017, %v1034
        %v1036 = vsel %vm518, %v1019, %v1035
        %v1037 = vsel %vm520, %v1021, %v1036
        %v1038 = vsel %vm522, %v1023, %v1037
        %v1039 = vsel %vm524, %v1025, %v1038
        %v1040 = vpack.c.b16 %v1039, %v1032
        %1042 = vst [vmem:[#allocation2 + $0x18] sm:$0xff] %v1040
        %v1043 = vld [vmem:[%s307 + $0x20] sm:$0xff]
        %v1044 = vld [vmem:[%s307 + $0x50] sm:$0xff]
        %v1045 = vld [vmem:[%s307 + $0x80] sm:$0xff]
        %v1046 = vld [vmem:[%s307 + $0xb0] sm:$0xff]
        %v1047 = vld [vmem:[%s307 + $0xe0] sm:$0xff]
        %v1048 = vld [vmem:[%s307 + $0x110] sm:$0xff]
        %v1049 = vld [vmem:[%s307 + $0x140] sm:$0xff]
        %v1050 = vld [vmem:[%s307 + $0x170] sm:$0xff]
        %v1051 = vunpack.c.l.bf16 %v1043
        %v1052 = vunpack.c.h.bf16 %v1043
        %v1053 = vunpack.c.l.bf16 %v1044
        %v1054 = vunpack.c.h.bf16 %v1044
        %v1055 = vunpack.c.l.bf16 %v1045
        %v1056 = vunpack.c.h.bf16 %v1045
        %v1057 = vunpack.c.l.bf16 %v1046
        %v1058 = vunpack.c.h.bf16 %v1046
        %v1059 = vunpack.c.l.bf16 %v1047
        %v1060 = vunpack.c.h.bf16 %v1047
        %v1061 = vunpack.c.l.bf16 %v1048
        %v1062 = vunpack.c.h.bf16 %v1048
        %v1063 = vunpack.c.l.bf16 %v1049
        %v1064 = vunpack.c.h.bf16 %v1049
        %v1065 = vunpack.c.l.bf16 %v1050
        %v1066 = vunpack.c.h.bf16 %v1050
        %v1067 = vrot.slane %v1051, 4
        %v1068 = vadd.f32 %v1051, %v1067
        %v1069 = vrot.slane %v1068, 2
        %v1070 = vadd.f32 %v1068, %v1069
        %v1071 = vrot.slane %v1070, 1
        %v1072 = vadd.f32 %v1070, %v1071
        %v1073 = vrot.slane %v1052, 4
        %v1074 = vadd.f32 %v1052, %v1073
        %v1075 = vrot.slane %v1074, 2
        %v1076 = vadd.f32 %v1074, %v1075
        %v1077 = vrot.slane %v1076, 1
        %v1078 = vadd.f32 %v1076, %v1077
        %v1079 = vrot.slane %v1053, 4
        %v1080 = vadd.f32 %v1053, %v1079
        %v1081 = vrot.slane %v1080, 2
        %v1082 = vadd.f32 %v1080, %v1081
        %v1083 = vrot.slane %v1082, 1
        %v1084 = vadd.f32 %v1082, %v1083
        %v1085 = vrot.slane %v1054, 4
        %v1086 = vadd.f32 %v1054, %v1085
        %v1087 = vrot.slane %v1086, 2
        %v1088 = vadd.f32 %v1086, %v1087
        %v1089 = vrot.slane %v1088, 1
        %v1090 = vadd.f32 %v1088, %v1089
        %v1091 = vrot.slane %v1055, 4
        %v1092 = vadd.f32 %v1055, %v1091
        %v1093 = vrot.slane %v1092, 2
        %v1094 = vadd.f32 %v1092, %v1093
        %v1095 = vrot.slane %v1094, 1
        %v1096 = vadd.f32 %v1094, %v1095
        %v1097 = vrot.slane %v1056, 4
        %v1098 = vadd.f32 %v1056, %v1097
        %v1099 = vrot.slane %v1098, 2
        %v1100 = vadd.f32 %v1098, %v1099
        %v1101 = vrot.slane %v1100, 1
        %v1102 = vadd.f32 %v1100, %v1101
        %v1103 = vrot.slane %v1057, 4
        %v1104 = vadd.f32 %v1057, %v1103
        %v1105 = vrot.slane %v1104, 2
        %v1106 = vadd.f32 %v1104, %v1105
        %v1107 = vrot.slane %v1106, 1
        %v1108 = vadd.f32 %v1106, %v1107
        %v1109 = vrot.slane %v1058, 4
        %v1110 = vadd.f32 %v1058, %v1109
        %v1111 = vrot.slane %v1110, 2
        %v1112 = vadd.f32 %v1110, %v1111
        %v1113 = vrot.slane %v1112, 1
        %v1114 = vadd.f32 %v1112, %v1113
        %v1115 = vrot.slane %v1059, 4
        %v1116 = vadd.f32 %v1059, %v1115
        %v1117 = vrot.slane %v1116, 2
        %v1118 = vadd.f32 %v1116, %v1117
        %v1119 = vrot.slane %v1118, 1
        %v1120 = vadd.f32 %v1118, %v1119
        %v1121 = vrot.slane %v1060, 4
        %v1122 = vadd.f32 %v1060, %v1121
        %v1123 = vrot.slane %v1122, 2
        %v1124 = vadd.f32 %v1122, %v1123
        %v1125 = vrot.slane %v1124, 1
        %v1126 = vadd.f32 %v1124, %v1125
        %v1127 = vrot.slane %v1061, 4
        %v1128 = vadd.f32 %v1061, %v1127
        %v1129 = vrot.slane %v1128, 2
        %v1130 = vadd.f32 %v1128, %v1129
        %v1131 = vrot.slane %v1130, 1
        %v1132 = vadd.f32 %v1130, %v1131
        %v1133 = vrot.slane %v1062, 4
        %v1134 = vadd.f32 %v1062, %v1133
        %v1135 = vrot.slane %v1134, 2
        %v1136 = vadd.f32 %v1134, %v1135
        %v1137 = vrot.slane %v1136, 1
        %v1138 = vadd.f32 %v1136, %v1137
        %v1139 = vrot.slane %v1063, 4
        %v1140 = vadd.f32 %v1063, %v1139
        %v1141 = vrot.slane %v1140, 2
        %v1142 = vadd.f32 %v1140, %v1141
        %v1143 = vrot.slane %v1142, 1
        %v1144 = vadd.f32 %v1142, %v1143
        %v1145 = vrot.slane %v1064, 4
        %v1146 = vadd.f32 %v1064, %v1145
        %v1147 = vrot.slane %v1146, 2
        %v1148 = vadd.f32 %v1146, %v1147
        %v1149 = vrot.slane %v1148, 1
        %v1150 = vadd.f32 %v1148, %v1149
        %v1151 = vrot.slane %v1065, 4
        %v1152 = vadd.f32 %v1065, %v1151
        %v1153 = vrot.slane %v1152, 2
        %v1154 = vadd.f32 %v1152, %v1153
        %v1155 = vrot.slane %v1154, 1
        %v1156 = vadd.f32 %v1154, %v1155
        %v1157 = vrot.slane %v1066, 4
        %v1158 = vadd.f32 %v1066, %v1157
        %v1159 = vrot.slane %v1158, 2
        %v1160 = vadd.f32 %v1158, %v1159
        %v1161 = vrot.slane %v1160, 1
        %v1162 = vadd.f32 %v1160, %v1161
        %v1163 = vpack.c.bf16 %v1078, %v1072
        %v1164 = vpack.c.bf16 %v1090, %v1084
        %v1165 = vpack.c.bf16 %v1102, %v1096
        %v1166 = vpack.c.bf16 %v1114, %v1108
        %v1167 = vpack.c.bf16 %v1126, %v1120
        %v1168 = vpack.c.bf16 %v1138, %v1132
        %v1169 = vpack.c.bf16 %v1150, %v1144
        %v1170 = vpack.c.bf16 %v1162, %v1156
        %v1179 = vunpack.c.l.b16 %v1163
        %v1180 = vunpack.c.h.b16 %v1163
        %v1181 = vunpack.c.l.b16 %v1164
        %v1182 = vunpack.c.h.b16 %v1164
        %v1183 = vunpack.c.l.b16 %v1165
        %v1184 = vunpack.c.h.b16 %v1165
        %v1185 = vunpack.c.l.b16 %v1166
        %v1186 = vunpack.c.h.b16 %v1166
        %v1187 = vunpack.c.l.b16 %v1167
        %v1188 = vunpack.c.h.b16 %v1167
        %v1189 = vunpack.c.l.b16 %v1168
        %v1190 = vunpack.c.h.b16 %v1168
        %v1191 = vunpack.c.l.b16 %v1169
        %v1192 = vunpack.c.h.b16 %v1169
        %v1193 = vunpack.c.l.b16 %v1170
        %v1194 = vunpack.c.h.b16 %v1170
        %v1195 = vsel %vm512, %v1181, %v1179
        %v1196 = vsel %vm514, %v1183, %v1195
        %v1197 = vsel %vm516, %v1185, %v1196
        %v1198 = vsel %vm518, %v1187, %v1197
        %v1199 = vsel %vm520, %v1189, %v1198
        %v1200 = vsel %vm522, %v1191, %v1199
        %v1201 = vsel %vm524, %v1193, %v1200
        %v1202 = vsel %vm512, %v1182, %v1180
        %v1203 = vsel %vm514, %v1184, %v1202
        %v1204 = vsel %vm516, %v1186, %v1203
        %v1205 = vsel %vm518, %v1188, %v1204
        %v1206 = vsel %vm520, %v1190, %v1205
        %v1207 = vsel %vm522, %v1192, %v1206
        %v1208 = vsel %vm524, %v1194, %v1207
        %v1209 = vpack.c.b16 %v1208, %v1201
        %1211 = vst [vmem:[#allocation2 + $0x20] sm:$0xff] %v1209
        %v1212 = vld [vmem:[%s307 + $0x28] sm:$0xff]
        %v1213 = vld [vmem:[%s307 + $0x58] sm:$0xff]
        %v1214 = vld [vmem:[%s307 + $0x88] sm:$0xff]
        %v1215 = vld [vmem:[%s307 + $0xb8] sm:$0xff]
        %v1216 = vld [vmem:[%s307 + $0xe8] sm:$0xff]
        %v1217 = vld [vmem:[%s307 + $0x118] sm:$0xff]
        %v1218 = vld [vmem:[%s307 + $0x148] sm:$0xff]
        %v1219 = vld [vmem:[%s307 + $0x178] sm:$0xff]
        %v1220 = vunpack.c.l.bf16 %v1212
        %v1221 = vunpack.c.h.bf16 %v1212
        %v1222 = vunpack.c.l.bf16 %v1213
        %v1223 = vunpack.c.h.bf16 %v1213
        %v1224 = vunpack.c.l.bf16 %v1214
        %v1225 = vunpack.c.h.bf16 %v1214
        %v1226 = vunpack.c.l.bf16 %v1215
        %v1227 = vunpack.c.h.bf16 %v1215
        %v1228 = vunpack.c.l.bf16 %v1216
        %v1229 = vunpack.c.h.bf16 %v1216
        %v1230 = vunpack.c.l.bf16 %v1217
        %v1231 = vunpack.c.h.bf16 %v1217
        %v1232 = vunpack.c.l.bf16 %v1218
        %v1233 = vunpack.c.h.bf16 %v1218
        %v1234 = vunpack.c.l.bf16 %v1219
        %v1235 = vunpack.c.h.bf16 %v1219
        %v1236 = vrot.slane %v1220, 4
        %v1237 = vadd.f32 %v1220, %v1236
        %v1238 = vrot.slane %v1237, 2
        %v1239 = vadd.f32 %v1237, %v1238
        %v1240 = vrot.slane %v1239, 1
        %v1241 = vadd.f32 %v1239, %v1240
        %v1242 = vrot.slane %v1221, 4
        %v1243 = vadd.f32 %v1221, %v1242
        %v1244 = vrot.slane %v1243, 2
        %v1245 = vadd.f32 %v1243, %v1244
        %v1246 = vrot.slane %v1245, 1
        %v1247 = vadd.f32 %v1245, %v1246
        %v1248 = vrot.slane %v1222, 4
        %v1249 = vadd.f32 %v1222, %v1248
        %v1250 = vrot.slane %v1249, 2
        %v1251 = vadd.f32 %v1249, %v1250
        %v1252 = vrot.slane %v1251, 1
        %v1253 = vadd.f32 %v1251, %v1252
        %v1254 = vrot.slane %v1223, 4
        %v1255 = vadd.f32 %v1223, %v1254
        %v1256 = vrot.slane %v1255, 2
        %v1257 = vadd.f32 %v1255, %v1256
        %v1258 = vrot.slane %v1257, 1
        %v1259 = vadd.f32 %v1257, %v1258
        %v1260 = vrot.slane %v1224, 4
        %v1261 = vadd.f32 %v1224, %v1260
        %v1262 = vrot.slane %v1261, 2
        %v1263 = vadd.f32 %v1261, %v1262
        %v1264 = vrot.slane %v1263, 1
        %v1265 = vadd.f32 %v1263, %v1264
        %v1266 = vrot.slane %v1225, 4
        %v1267 = vadd.f32 %v1225, %v1266
        %v1268 = vrot.slane %v1267, 2
        %v1269 = vadd.f32 %v1267, %v1268
        %v1270 = vrot.slane %v1269, 1
        %v1271 = vadd.f32 %v1269, %v1270
        %v1272 = vrot.slane %v1226, 4
        %v1273 = vadd.f32 %v1226, %v1272
        %v1274 = vrot.slane %v1273, 2
        %v1275 = vadd.f32 %v1273, %v1274
        %v1276 = vrot.slane %v1275, 1
        %v1277 = vadd.f32 %v1275, %v1276
        %v1278 = vrot.slane %v1227, 4
        %v1279 = vadd.f32 %v1227, %v1278
        %v1280 = vrot.slane %v1279, 2
        %v1281 = vadd.f32 %v1279, %v1280
        %v1282 = vrot.slane %v1281, 1
        %v1283 = vadd.f32 %v1281, %v1282
        %v1284 = vrot.slane %v1228, 4
        %v1285 = vadd.f32 %v1228, %v1284
        %v1286 = vrot.slane %v1285, 2
        %v1287 = vadd.f32 %v1285, %v1286
        %v1288 = vrot.slane %v1287, 1
        %v1289 = vadd.f32 %v1287, %v1288
        %v1290 = vrot.slane %v1229, 4
        %v1291 = vadd.f32 %v1229, %v1290
        %v1292 = vrot.slane %v1291, 2
        %v1293 = vadd.f32 %v1291, %v1292
        %v1294 = vrot.slane %v1293, 1
        %v1295 = vadd.f32 %v1293, %v1294
        %v1296 = vrot.slane %v1230, 4
        %v1297 = vadd.f32 %v1230, %v1296
        %v1298 = vrot.slane %v1297, 2
        %v1299 = vadd.f32 %v1297, %v1298
        %v1300 = vrot.slane %v1299, 1
        %v1301 = vadd.f32 %v1299, %v1300
        %v1302 = vrot.slane %v1231, 4
        %v1303 = vadd.f32 %v1231, %v1302
        %v1304 = vrot.slane %v1303, 2
        %v1305 = vadd.f32 %v1303, %v1304
        %v1306 = vrot.slane %v1305, 1
        %v1307 = vadd.f32 %v1305, %v1306
        %v1308 = vrot.slane %v1232, 4
        %v1309 = vadd.f32 %v1232, %v1308
        %v1310 = vrot.slane %v1309, 2
        %v1311 = vadd.f32 %v1309, %v1310
        %v1312 = vrot.slane %v1311, 1
        %v1313 = vadd.f32 %v1311, %v1312
        %v1314 = vrot.slane %v1233, 4
        %v1315 = vadd.f32 %v1233, %v1314
        %v1316 = vrot.slane %v1315, 2
        %v1317 = vadd.f32 %v1315, %v1316
        %v1318 = vrot.slane %v1317, 1
        %v1319 = vadd.f32 %v1317, %v1318
        %v1320 = vrot.slane %v1234, 4
        %v1321 = vadd.f32 %v1234, %v1320
        %v1322 = vrot.slane %v1321, 2
        %v1323 = vadd.f32 %v1321, %v1322
        %v1324 = vrot.slane %v1323, 1
        %v1325 = vadd.f32 %v1323, %v1324
        %v1326 = vrot.slane %v1235, 4
        %v1327 = vadd.f32 %v1235, %v1326
        %v1328 = vrot.slane %v1327, 2
        %v1329 = vadd.f32 %v1327, %v1328
        %v1330 = vrot.slane %v1329, 1
        %v1331 = vadd.f32 %v1329, %v1330
        %v1332 = vpack.c.bf16 %v1247, %v1241
        %v1333 = vpack.c.bf16 %v1259, %v1253
        %v1334 = vpack.c.bf16 %v1271, %v1265
        %v1335 = vpack.c.bf16 %v1283, %v1277
        %v1336 = vpack.c.bf16 %v1295, %v1289
        %v1337 = vpack.c.bf16 %v1307, %v1301
        %v1338 = vpack.c.bf16 %v1319, %v1313
        %v1339 = vpack.c.bf16 %v1331, %v1325
        %v1348 = vunpack.c.l.b16 %v1332
        %v1349 = vunpack.c.h.b16 %v1332
        %v1350 = vunpack.c.l.b16 %v1333
        %v1351 = vunpack.c.h.b16 %v1333
        %v1352 = vunpack.c.l.b16 %v1334
        %v1353 = vunpack.c.h.b16 %v1334
        %v1354 = vunpack.c.l.b16 %v1335
        %v1355 = vunpack.c.h.b16 %v1335
        %v1356 = vunpack.c.l.b16 %v1336
        %v1357 = vunpack.c.h.b16 %v1336
        %v1358 = vunpack.c.l.b16 %v1337
        %v1359 = vunpack.c.h.b16 %v1337
        %v1360 = vunpack.c.l.b16 %v1338
        %v1361 = vunpack.c.h.b16 %v1338
        %v1362 = vunpack.c.l.b16 %v1339
        %v1363 = vunpack.c.h.b16 %v1339
        %v1364 = vsel %vm512, %v1350, %v1348
        %v1365 = vsel %vm514, %v1352, %v1364
        %v1366 = vsel %vm516, %v1354, %v1365
        %v1367 = vsel %vm518, %v1356, %v1366
        %v1368 = vsel %vm520, %v1358, %v1367
        %v1369 = vsel %vm522, %v1360, %v1368
        %v1370 = vsel %vm524, %v1362, %v1369
        %v1371 = vsel %vm512, %v1351, %v1349
        %v1372 = vsel %vm514, %v1353, %v1371
        %v1373 = vsel %vm516, %v1355, %v1372
        %v1374 = vsel %vm518, %v1357, %v1373
        %v1375 = vsel %vm520, %v1359, %v1374
        %v1376 = vsel %vm522, %v1361, %v1375
        %v1377 = vsel %vm524, %v1363, %v1376
        %v1378 = vpack.c.b16 %v1377, %v1370
        %1380 = vst [vmem:[#allocation2 + $0x28] sm:$0xff] %v1378
        %v1381 = vld [vmem:[#allocation2] sm:$0xff]
        %v1382 = vld [vmem:[#allocation2 + $0x8] sm:$0xff]
        %v1383 = vld [vmem:[#allocation2 + $0x10] sm:$0xff]
        %v1384 = vld [vmem:[#allocation2 + $0x18] sm:$0xff]
        %v1385 = vld [vmem:[#allocation2 + $0x20] sm:$0xff]
        %v1386 = vld [vmem:[#allocation2 + $0x28] sm:$0xff]
        %v1387 = vld [vmem:[#allocation6] sm:$0xf]
        %v1388 = vld [vmem:[#allocation6 + $0x4] sm:$0xf]
        %v1389 = vld [vmem:[#allocation6 + $0x8] sm:$0xf]
        %v1390 = vld [vmem:[#allocation6 + $0xc] sm:$0xf]
        %v1391 = vld [vmem:[#allocation6 + $0x10] sm:$0xf]
        %v1392 = vld [vmem:[#allocation6 + $0x14] sm:$0xf]
        %v1393 = vld [vmem:[#allocation6 + $0x18] sm:$0xf]
        %v1394 = vld [vmem:[#allocation6 + $0x1c] sm:$0xf]
        %v1395 = vld [vmem:[#allocation6 + $0x20] sm:$0xf]
        %v1396 = vld [vmem:[#allocation6 + $0x24] sm:$0xf]
        %v1397 = vld [vmem:[#allocation6 + $0x28] sm:$0xf]
        %v1398 = vld [vmem:[#allocation6 + $0x2c] sm:$0xf]
        %v1399 = vld [vmem:[#allocation6 + $0x30] sm:$0xf]
        %v1400 = vld [vmem:[#allocation6 + $0x34] sm:$0xf]
        %v1401 = vld [vmem:[#allocation6 + $0x38] sm:$0xf]
        %v1402 = vld [vmem:[#allocation6 + $0x3c] sm:$0xf]
        %v1403 = vld [vmem:[#allocation6 + $0x40] sm:$0xf]
        %v1404 = vld [vmem:[#allocation6 + $0x44] sm:$0xf]
        %v1405 = vld [vmem:[#allocation6 + $0x48] sm:$0xf]
        %v1406 = vld [vmem:[#allocation6 + $0x4c] sm:$0xf]
        %v1407 = vld [vmem:[#allocation6 + $0x50] sm:$0xf]
        %v1408 = vld [vmem:[#allocation6 + $0x54] sm:$0xf]
        %v1409 = vld [vmem:[#allocation6 + $0x58] sm:$0xf]
        %v1410 = vld [vmem:[#allocation6 + $0x5c] sm:$0xf]
        %v1411 = vld [vmem:[#allocation6 + $0x60] sm:$0xf]
        %v1412 = vld [vmem:[#allocation6 + $0x64] sm:$0xf]
        %v1413 = vld [vmem:[#allocation6 + $0x68] sm:$0xf]
        %v1414 = vld [vmem:[#allocation6 + $0x6c] sm:$0xf]
        %v1415 = vld [vmem:[#allocation6 + $0x70] sm:$0xf]
        %v1416 = vld [vmem:[#allocation6 + $0x74] sm:$0xf]
        %v1417 = vld [vmem:[#allocation6 + $0x78] sm:$0xf]
        %v1418 = vld [vmem:[#allocation6 + $0x7c] sm:$0xf]
        %v1425 = vunpack.c.l.b16 %v1381
        %v1426 = vunpack.c.h.b16 %v1381
        %v1427 = vunpack.c.l.b16 %v1382
        %v1428 = vunpack.c.h.b16 %v1382
        %v1429 = vunpack.c.l.b16 %v1383
        %v1430 = vunpack.c.h.b16 %v1383
        %v1431 = vunpack.c.l.b16 %v1384
        %v1432 = vunpack.c.h.b16 %v1384
        %v1433 = vunpack.c.l.b16 %v1385
        %v1434 = vunpack.c.h.b16 %v1385
        %v1435 = vunpack.c.l.b16 %v1386
        %v1436 = vunpack.c.h.b16 %v1386
        %v1437 = vpack.c.b16 %v1427, %v1425
        %v1438 = vpack.c.b16 %v1428, %v1426
        %v1439 = vpack.c.b16 %v1431, %v1429
        %v1440 = vpack.c.b16 %v1432, %v1430
        %v1441 = vpack.c.b16 %v1435, %v1433
        %v1442 = vpack.c.b16 %v1436, %v1434
        %v1481 = vunpack.c.l.b16 %v1387
        %v1482 = vunpack.c.l.b16 %v1388
        %v1483 = vunpack.c.l.b16 %v1389
        %v1484 = vunpack.c.l.b16 %v1390
        %v1485 = vunpack.c.l.b16 %v1391
        %v1486 = vunpack.c.l.b16 %v1392
        %v1487 = vunpack.c.l.b16 %v1393
        %v1488 = vunpack.c.l.b16 %v1394
        %v1489 = vunpack.c.l.b16 %v1395
        %v1490 = vunpack.c.l.b16 %v1396
        %v1491 = vunpack.c.l.b16 %v1397
        %v1492 = vunpack.c.l.b16 %v1398
        %v1493 = vunpack.c.l.b16 %v1399
        %v1494 = vunpack.c.l.b16 %v1400
        %v1495 = vunpack.c.l.b16 %v1401
        %v1496 = vunpack.c.l.b16 %v1402
        %v1497 = vunpack.c.l.b16 %v1403
        %v1498 = vunpack.c.l.b16 %v1404
        %v1499 = vunpack.c.l.b16 %v1405
        %v1500 = vunpack.c.l.b16 %v1406
        %v1501 = vunpack.c.l.b16 %v1407
        %v1502 = vunpack.c.l.b16 %v1408
        %v1503 = vunpack.c.l.b16 %v1409
        %v1504 = vunpack.c.l.b16 %v1410
        %v1505 = vunpack.c.l.b16 %v1411
        %v1506 = vunpack.c.l.b16 %v1412
        %v1507 = vunpack.c.l.b16 %v1413
        %v1508 = vunpack.c.l.b16 %v1414
        %v1509 = vunpack.c.l.b16 %v1415
        %v1510 = vunpack.c.l.b16 %v1416
        %v1511 = vunpack.c.l.b16 %v1417
        %v1512 = vunpack.c.l.b16 %v1418
        %v1513 = vpack.c.b16 %v1482, %v1481
        %v1514 = vpack.c.b16 %v1484, %v1483
        %v1515 = vpack.c.b16 %v1486, %v1485
        %v1516 = vpack.c.b16 %v1488, %v1487
        %v1517 = vpack.c.b16 %v1490, %v1489
        %v1518 = vpack.c.b16 %v1492, %v1491
        %v1519 = vpack.c.b16 %v1494, %v1493
        %v1520 = vpack.c.b16 %v1496, %v1495
        %v1521 = vpack.c.b16 %v1498, %v1497
        %v1522 = vpack.c.b16 %v1500, %v1499
        %v1523 = vpack.c.b16 %v1502, %v1501
        %v1524 = vpack.c.b16 %v1504, %v1503
        %v1525 = vpack.c.b16 %v1506, %v1505
        %v1526 = vpack.c.b16 %v1508, %v1507
        %v1527 = vpack.c.b16 %v1510, %v1509
        %v1528 = vpack.c.b16 %v1512, %v1511
        %1545 = vmatpush.bf16.msra.mxu0 %v1520
        %1546 = vmatpush.bf16.msra.mxu0 %v1519
        %1547 = vmatpush.bf16.msra.mxu0 %v1518
        %1548 = vmatpush.bf16.msra.mxu0 %v1517
        %1549 = vmatpush.bf16.msra.mxu0 %v1516
        %1550 = vmatpush.bf16.msra.mxu0 %v1515
        %1551 = vmatpush.bf16.msra.mxu0 %v1514
        %1552 = vmatpush.bf16.msra.mxu0 %v1513
        %1553 = vmatmul.bf16.gmra.mxu0 %v1437
        %v1554 = vpop.f32.mrf.mxu0
        %v1555 = vadd.f32 0.0, %v1554
        %v1556 = vpop.f32.mrf.mxu0
        %v1557 = vadd.f32 0.0, %v1556
        %1558 = vmatmul.bf16.gmra.mxu0 %v1439
        %v1559 = vpop.f32.mrf.mxu0
        %v1560 = vadd.f32 0.0, %v1559
        %v1561 = vpop.f32.mrf.mxu0
        %v1562 = vadd.f32 0.0, %v1561
        %1563 = vmatmul.bf16.gmra.mxu0 %v1441
        %v1564 = vpop.f32.mrf.mxu0
        %v1565 = vadd.f32 0.0, %v1564
        %v1566 = vpop.f32.mrf.mxu0
        %v1567 = vadd.f32 0.0, %v1566
        %1568 = vdwg.mxu0
        %1569 = vmatpush.bf16.msra.mxu0 %v1528
        %1570 = vmatpush.bf16.msra.mxu0 %v1527
        %1571 = vmatpush.bf16.msra.mxu0 %v1526
        %1572 = vmatpush.bf16.msra.mxu0 %v1525
        %1573 = vmatpush.bf16.msra.mxu0 %v1524
        %1574 = vmatpush.bf16.msra.mxu0 %v1523
        %1575 = vmatpush.bf16.msra.mxu0 %v1522
        %1576 = vmatpush.bf16.msra.mxu0 %v1521
        %1577 = vmatmul.bf16.gmra.mxu0 %v1438
        %v1578 = vpop.f32.mrf.mxu0
        %v1579 = vadd.f32 %v1555, %v1578
        %v1580 = vpop.f32.mrf.mxu0
        %v1581 = vadd.f32 %v1557, %v1580
        %1582 = vmatmul.bf16.gmra.mxu0 %v1440
        %v1583 = vpop.f32.mrf.mxu0
        %v1584 = vadd.f32 %v1560, %v1583
        %v1585 = vpop.f32.mrf.mxu0
        %v1586 = vadd.f32 %v1562, %v1585
        %1587 = vmatmul.bf16.gmra.mxu0 %v1442
        %v1588 = vpop.f32.mrf.mxu0
        %v1589 = vadd.f32 %v1565, %v1588
        %v1590 = vpop.f32.mrf.mxu0
        %v1591 = vadd.f32 %v1567, %v1590
        %1592 = vdwg.mxu0
        %v1593 = vmul.f32 %v1579, %v1579
        %v1594 = vmul.f32 %v1581, %v1581
        %v1595 = vmul.f32 %v1584, %v1584
        %v1596 = vmul.f32 %v1586, %v1586
        %v1597 = vmul.f32 %v1589, %v1589
        %v1598 = vmul.f32 %v1591, %v1591
        %1599 = vadd.xlane.f32.xlu0 %v1593
        %v1600 = vpop.xlane.xlu0 %1599
        %1601 = vadd.xlane.f32.xlu0 %v1594
        %v1602 = vpop.xlane.xlu0 %1601
        %1603 = vadd.xlane.f32.xlu0 %v1595
        %v1604 = vpop.xlane.xlu0 %1603
        %1605 = vadd.xlane.f32.xlu0 %v1596
        %v1606 = vpop.xlane.xlu0 %1605
        %1607 = vadd.xlane.f32.xlu0 %v1597
        %v1608 = vpop.xlane.xlu0 %1607
        %1609 = vadd.xlane.f32.xlu0 %v1598
        %v1610 = vpop.xlane.xlu0 %1609
        %v1611 = vrsqrt.pop %v1600
        %v1612 = vmul.f32 %v1611, %v1600
        %v1613 = vmul.f32 %v1612, %v1611
        %v1614 = vmul.f32 0.5, %v1613
        %v1615 = vsub.f32 1.5, %v1614
        %v1616 = vmul.f32 %v1611, %v1615
        %vm1617 = vweird.f32 %v1600
        %vm1618 = vweird.f32 %v1611
        %vm1619 = vmor %vm1617, %vm1618
        %v1620 = vsel %vm1619, %v1611, %v1616
        %v1621 = vrsqrt.pop %v1602
        %v1622 = vmul.f32 %v1621, %v1602
        %v1623 = vmul.f32 %v1622, %v1621
        %v1624 = vmul.f32 0.5, %v1623
        %v1625 = vsub.f32 1.5, %v1624
        %v1626 = vmul.f32 %v1621, %v1625
        %vm1627 = vweird.f32 %v1602
        %vm1628 = vweird.f32 %v1621
        %vm1629 = vmor %vm1627, %vm1628
        %v1630 = vsel %vm1629, %v1621, %v1626
        %v1631 = vrsqrt.pop %v1604
        %v1632 = vmul.f32 %v1631, %v1604
        %v1633 = vmul.f32 %v1632, %v1631
        %v1634 = vmul.f32 0.5, %v1633
        %v1635 = vsub.f32 1.5, %v1634
        %v1636 = vmul.f32 %v1631, %v1635
        %vm1637 = vweird.f32 %v1604
        %vm1638 = vweird.f32 %v1631
        %vm1639 = vmor %vm1637, %vm1638
        %v1640 = vsel %vm1639, %v1631, %v1636
        %v1641 = vrsqrt.pop %v1606
        %v1642 = vmul.f32 %v1641, %v1606
        %v1643 = vmul.f32 %v1642, %v1641
        %v1644 = vmul.f32 0.5, %v1643
        %v1645 = vsub.f32 1.5, %v1644
        %v1646 = vmul.f32 %v1641, %v1645
        %vm1647 = vweird.f32 %v1606
        %vm1648 = vweird.f32 %v1641
        %vm1649 = vmor %vm1647, %vm1648
        %v1650 = vsel %vm1649, %v1641, %v1646
        %v1651 = vrsqrt.pop %v1608
        %v1652 = vmul.f32 %v1651, %v1608
        %v1653 = vmul.f32 %v1652, %v1651
        %v1654 = vmul.f32 0.5, %v1653
        %v1655 = vsub.f32 1.5, %v1654
        %v1656 = vmul.f32 %v1651, %v1655
        %vm1657 = vweird.f32 %v1608
        %vm1658 = vweird.f32 %v1651
        %vm1659 = vmor %vm1657, %vm1658
        %v1660 = vsel %vm1659, %v1651, %v1656
        %v1661 = vrsqrt.pop %v1610
        %v1662 = vmul.f32 %v1661, %v1610
        %v1663 = vmul.f32 %v1662, %v1661
        %v1664 = vmul.f32 0.5, %v1663
        %v1665 = vsub.f32 1.5, %v1664
        %v1666 = vmul.f32 %v1661, %v1665
        %vm1667 = vweird.f32 %v1610
        %vm1668 = vweird.f32 %v1661
        %vm1669 = vmor %vm1667, %vm1668
        %v1670 = vsel %vm1669, %v1661, %v1666
        %v1671 = vmul.f32 %v1579, %v1620
        %v1672 = vmul.f32 %v1581, %v1630
        %v1673 = vmul.f32 %v1584, %v1640
        %v1674 = vmul.f32 %v1586, %v1650
        %v1675 = vmul.f32 %v1589, %v1660
        %v1676 = vmul.f32 %v1591, %v1670
        %v1677 = vld [vmem:[%s2] sm:$0x1]
        %v1679 = vperm.slane %v1677, 0
        %v1681 = vmul.f32 %v1579, %v1679
        %v1682 = vmul.f32 %v1581, %v1679
        %v1683 = vmul.f32 %v1584, %v1679
        %v1684 = vmul.f32 %v1586, %v1679
        %v1685 = vmul.f32 %v1589, %v1679
        %v1686 = vmul.f32 %v1591, %v1679
        %v1687 = vld [vmem:[%s3] sm:$0x1]
        %v1689 = vperm.slane %v1687, 0
        %v1691 = vadd.f32 %v1681, %v1689
        %v1692 = vadd.f32 %v1682, %v1689
        %v1693 = vadd.f32 %v1683, %v1689
        %v1694 = vadd.f32 %v1684, %v1689
        %v1695 = vadd.f32 %v1685, %v1689
        %v1696 = vadd.f32 %v1686, %v1689
        %v1697 = vmax.f32 %v1691, 0.0
        %v1698 = vmax.f32 %v1692, 0.0
        %v1699 = vmax.f32 %v1693, 0.0
        %v1700 = vmax.f32 %v1694, 0.0
        %v1701 = vmax.f32 %v1695, 0.0
        %v1702 = vmax.f32 %v1696, 0.0
        %v1703 = vpack.c.bf16 %v1697, %v1697
        %v1704 = vpack.c.bf16 %v1698, %v1698
        %v1705 = vpack.c.bf16 %v1699, %v1699
        %v1706 = vpack.c.bf16 %v1700, %v1700
        %v1707 = vpack.c.bf16 %v1701, %v1701
        %v1708 = vpack.c.bf16 %v1702, %v1702
        %1709 = vst [vmem:[%s351] sm:$0xff] %v1671
        %v1710 = vld [vmem:[#allocation8] sm:$0xf]
        %v1711 = vld [vmem:[#allocation8 + $0x4] sm:$0xf]
        %v1712 = vld [vmem:[#allocation8 + $0x8] sm:$0xf]
        %v1713 = vld [vmem:[#allocation8 + $0xc] sm:$0xf]
        %v1714 = vld [vmem:[#allocation8 + $0x10] sm:$0xf]
        %v1715 = vld [vmem:[#allocation8 + $0x14] sm:$0xf]
        %v1716 = vld [vmem:[#allocation8 + $0x18] sm:$0xf]
        %v1717 = vld [vmem:[#allocation8 + $0x1c] sm:$0xf]
        %v1718 = vld [vmem:[#allocation8 + $0x20] sm:$0xf]
        %v1719 = vld [vmem:[#allocation8 + $0x24] sm:$0xf]
        %v1720 = vld [vmem:[#allocation8 + $0x28] sm:$0xf]
        %v1721 = vld [vmem:[#allocation8 + $0x2c] sm:$0xf]
        %v1722 = vld [vmem:[#allocation8 + $0x30] sm:$0xf]
        %v1723 = vld [vmem:[#allocation8 + $0x34] sm:$0xf]
        %v1724 = vld [vmem:[#allocation8 + $0x38] sm:$0xf]
        %v1725 = vld [vmem:[#allocation8 + $0x3c] sm:$0xf]
        %v1726 = vld [vmem:[#allocation9] sm:$0x1]
        %v1727 = vperm.slane %v1726, 0
        %v1744 = vunpack.c.l.b16 %v1710
        %v1745 = vunpack.c.l.b16 %v1711
        %v1746 = vunpack.c.l.b16 %v1712
        %v1747 = vunpack.c.l.b16 %v1713
        %v1748 = vunpack.c.l.b16 %v1714
        %v1749 = vunpack.c.l.b16 %v1715
        %v1750 = vunpack.c.l.b16 %v1716
        %v1751 = vunpack.c.l.b16 %v1717
        %v1752 = vunpack.c.l.b16 %v1718
        %v1753 = vunpack.c.l.b16 %v1719
        %v1754 = vunpack.c.l.b16 %v1720
        %v1755 = vunpack.c.l.b16 %v1721
        %v1756 = vunpack.c.l.b16 %v1722
        %v1757 = vunpack.c.l.b16 %v1723
        %v1758 = vunpack.c.l.b16 %v1724
        %v1759 = vunpack.c.l.b16 %v1725
        %v1760 = vpack.c.b16 %v1745, %v1744
        %v1761 = vpack.c.b16 %v1747, %v1746
        %v1762 = vpack.c.b16 %v1749, %v1748
        %v1763 = vpack.c.b16 %v1751, %v1750
        %v1764 = vpack.c.b16 %v1753, %v1752
        %v1765 = vpack.c.b16 %v1755, %v1754
        %v1766 = vpack.c.b16 %v1757, %v1756
        %v1767 = vpack.c.b16 %v1759, %v1758
        %1776 = vmatpush.bf16.msra.mxu0 %v1767
        %1777 = vmatpush.bf16.msra.mxu0 %v1766
        %1778 = vmatpush.bf16.msra.mxu0 %v1765
        %1779 = vmatpush.bf16.msra.mxu0 %v1764
        %1780 = vmatpush.bf16.msra.mxu0 %v1763
        %1781 = vmatpush.bf16.msra.mxu0 %v1762
        %1782 = vmatpush.bf16.msra.mxu0 %v1761
        %1783 = vmatpush.bf16.msra.mxu0 %v1760
        %1784 = vmatmul.bf16.gmra.mxu0 %v1703
        %v1785 = vpop.f32.mrf.mxu0
        %v1786 = vadd.f32 %v1727, %v1785
        %v1787 = vpop.f32.mrf.mxu0
        %1788 = vdwg.mxu0
        %1789 = vst [vmem:[%s358] sm:$0xff] %v1786
        %1790 = vst [vmem:[%s351 + $0x8] sm:$0xff] %v1672
        %s1791 = scalar_lea.vmem [#allocation8], 64
        %v1792 = vld [vmem:[%s1791] sm:$0xf]
        %v1793 = vld [vmem:[%s1791 + $0x4] sm:$0xf]
        %v1794 = vld [vmem:[%s1791 + $0x8] sm:$0xf]
        %v1795 = vld [vmem:[%s1791 + $0xc] sm:$0xf]
        %v1796 = vld [vmem:[%s1791 + $0x10] sm:$0xf]
        %v1797 = vld [vmem:[%s1791 + $0x14] sm:$0xf]
        %v1798 = vld [vmem:[%s1791 + $0x18] sm:$0xf]
        %v1799 = vld [vmem:[%s1791 + $0x1c] sm:$0xf]
        %v1800 = vld [vmem:[%s1791 + $0x20] sm:$0xf]
        %v1801 = vld [vmem:[%s1791 + $0x24] sm:$0xf]
        %v1802 = vld [vmem:[%s1791 + $0x28] sm:$0xf]
        %v1803 = vld [vmem:[%s1791 + $0x2c] sm:$0xf]
        %v1804 = vld [vmem:[%s1791 + $0x30] sm:$0xf]
        %v1805 = vld [vmem:[%s1791 + $0x34] sm:$0xf]
        %v1806 = vld [vmem:[%s1791 + $0x38] sm:$0xf]
        %v1807 = vld [vmem:[%s1791 + $0x3c] sm:$0xf]
        %v1808 = vld [vmem:[#allocation9 + $0x1] sm:$0x1]
        %v1809 = vperm.slane %v1808, 0
        %v1826 = vunpack.c.l.b16 %v1792
        %v1827 = vunpack.c.l.b16 %v1793
        %v1828 = vunpack.c.l.b16 %v1794
        %v1829 = vunpack.c.l.b16 %v1795
        %v1830 = vunpack.c.l.b16 %v1796
        %v1831 = vunpack.c.l.b16 %v1797
        %v1832 = vunpack.c.l.b16 %v1798
        %v1833 = vunpack.c.l.b16 %v1799
        %v1834 = vunpack.c.l.b16 %v1800
        %v1835 = vunpack.c.l.b16 %v1801
        %v1836 = vunpack.c.l.b16 %v1802
        %v1837 = vunpack.c.l.b16 %v1803
        %v1838 = vunpack.c.l.b16 %v1804
        %v1839 = vunpack.c.l.b16 %v1805
        %v1840 = vunpack.c.l.b16 %v1806
        %v1841 = vunpack.c.l.b16 %v1807
        %v1842 = vpack.c.b16 %v1827, %v1826
        %v1843 = vpack.c.b16 %v1829, %v1828
        %v1844 = vpack.c.b16 %v1831, %v1830
        %v1845 = vpack.c.b16 %v1833, %v1832
        %v1846 = vpack.c.b16 %v1835, %v1834
        %v1847 = vpack.c.b16 %v1837, %v1836
        %v1848 = vpack.c.b16 %v1839, %v1838
        %v1849 = vpack.c.b16 %v1841, %v1840
        %1858 = vmatpush.bf16.msra.mxu0 %v1849
        %1859 = vmatpush.bf16.msra.mxu0 %v1848
        %1860 = vmatpush.bf16.msra.mxu0 %v1847
        %1861 = vmatpush.bf16.msra.mxu0 %v1846
        %1862 = vmatpush.bf16.msra.mxu0 %v1845
        %1863 = vmatpush.bf16.msra.mxu0 %v1844
        %1864 = vmatpush.bf16.msra.mxu0 %v1843
        %1865 = vmatpush.bf16.msra.mxu0 %v1842
        %1866 = vmatmul.bf16.gmra.mxu0 %v1704
        %v1867 = vpop.f32.mrf.mxu0
        %v1868 = vadd.f32 %v1809, %v1867
        %v1869 = vpop.f32.mrf.mxu0
        %1870 = vdwg.mxu0
        %1871 = vst [vmem:[%s358 + $0x8] sm:$0xff] %v1868
        %1872 = vst [vmem:[%s351 + $0x10] sm:$0xff] %v1673
        %s1873 = scalar_lea.vmem [#allocation8], 128
        %v1874 = vld [vmem:[%s1873] sm:$0xf]
        %v1875 = vld [vmem:[%s1873 + $0x4] sm:$0xf]
        %v1876 = vld [vmem:[%s1873 + $0x8] sm:$0xf]
        %v1877 = vld [vmem:[%s1873 + $0xc] sm:$0xf]
        %v1878 = vld [vmem:[%s1873 + $0x10] sm:$0xf]
        %v1879 = vld [vmem:[%s1873 + $0x14] sm:$0xf]
        %v1880 = vld [vmem:[%s1873 + $0x18] sm:$0xf]
        %v1881 = vld [vmem:[%s1873 + $0x1c] sm:$0xf]
        %v1882 = vld [vmem:[%s1873 + $0x20] sm:$0xf]
        %v1883 = vld [vmem:[%s1873 + $0x24] sm:$0xf]
        %v1884 = vld [vmem:[%s1873 + $0x28] sm:$0xf]
        %v1885 = vld [vmem:[%s1873 + $0x2c] sm:$0xf]
        %v1886 = vld [vmem:[%s1873 + $0x30] sm:$0xf]
        %v1887 = vld [vmem:[%s1873 + $0x34] sm:$0xf]
        %v1888 = vld [vmem:[%s1873 + $0x38] sm:$0xf]
        %v1889 = vld [vmem:[%s1873 + $0x3c] sm:$0xf]
        %v1890 = vld [vmem:[#allocation9 + $0x2] sm:$0x1]
        %v1891 = vperm.slane %v1890, 0
        %v1908 = vunpack.c.l.b16 %v1874
        %v1909 = vunpack.c.l.b16 %v1875
        %v1910 = vunpack.c.l.b16 %v1876
        %v1911 = vunpack.c.l.b16 %v1877
        %v1912 = vunpack.c.l.b16 %v1878
        %v1913 = vunpack.c.l.b16 %v1879
        %v1914 = vunpack.c.l.b16 %v1880
        %v1915 = vunpack.c.l.b16 %v1881
        %v1916 = vunpack.c.l.b16 %v1882
        %v1917 = vunpack.c.l.b16 %v1883
        %v1918 = vunpack.c.l.b16 %v1884
        %v1919 = vunpack.c.l.b16 %v1885
        %v1920 = vunpack.c.l.b16 %v1886
        %v1921 = vunpack.c.l.b16 %v1887
        %v1922 = vunpack.c.l.b16 %v1888
        %v1923 = vunpack.c.l.b16 %v1889
        %v1924 = vpack.c.b16 %v1909, %v1908
        %v1925 = vpack.c.b16 %v1911, %v1910
        %v1926 = vpack.c.b16 %v1913, %v1912
        %v1927 = vpack.c.b16 %v1915, %v1914
        %v1928 = vpack.c.b16 %v1917, %v1916
        %v1929 = vpack.c.b16 %v1919, %v1918
        %v1930 = vpack.c.b16 %v1921, %v1920
        %v1931 = vpack.c.b16 %v1923, %v1922
        %1940 = vmatpush.bf16.msra.mxu0 %v1931
        %1941 = vmatpush.bf16.msra.mxu0 %v1930
        %1942 = vmatpush.bf16.msra.mxu0 %v1929
        %1943 = vmatpush.bf16.msra.mxu0 %v1928
        %1944 = vmatpush.bf16.msra.mxu0 %v1927
        %1945 = vmatpush.bf16.msra.mxu0 %v1926
        %1946 = vmatpush.bf16.msra.mxu0 %v1925
        %1947 = vmatpush.bf16.msra.mxu0 %v1924
        %1948 = vmatmul.bf16.gmra.mxu0 %v1705
        %v1949 = vpop.f32.mrf.mxu0
        %v1950 = vadd.f32 %v1891, %v1949
        %v1951 = vpop.f32.mrf.mxu0
        %1952 = vdwg.mxu0
        %1953 = vst [vmem:[%s358 + $0x10] sm:$0xff] %v1950
        %1954 = vst [vmem:[%s351 + $0x18] sm:$0xff] %v1674
        %s1955 = scalar_lea.vmem [#allocation8], 192
        %v1956 = vld [vmem:[%s1955] sm:$0xf]
        %v1957 = vld [vmem:[%s1955 + $0x4] sm:$0xf]
        %v1958 = vld [vmem:[%s1955 + $0x8] sm:$0xf]
        %v1959 = vld [vmem:[%s1955 + $0xc] sm:$0xf]
        %v1960 = vld [vmem:[%s1955 + $0x10] sm:$0xf]
        %v1961 = vld [vmem:[%s1955 + $0x14] sm:$0xf]
        %v1962 = vld [vmem:[%s1955 + $0x18] sm:$0xf]
        %v1963 = vld [vmem:[%s1955 + $0x1c] sm:$0xf]
        %v1964 = vld [vmem:[%s1955 + $0x20] sm:$0xf]
        %v1965 = vld [vmem:[%s1955 + $0x24] sm:$0xf]
        %v1966 = vld [vmem:[%s1955 + $0x28] sm:$0xf]
        %v1967 = vld [vmem:[%s1955 + $0x2c] sm:$0xf]
        %v1968 = vld [vmem:[%s1955 + $0x30] sm:$0xf]
        %v1969 = vld [vmem:[%s1955 + $0x34] sm:$0xf]
        %v1970 = vld [vmem:[%s1955 + $0x38] sm:$0xf]
        %v1971 = vld [vmem:[%s1955 + $0x3c] sm:$0xf]
        %v1972 = vld [vmem:[#allocation9 + $0x3] sm:$0x1]
        %v1973 = vperm.slane %v1972, 0
        %v1990 = vunpack.c.l.b16 %v1956
        %v1991 = vunpack.c.l.b16 %v1957
        %v1992 = vunpack.c.l.b16 %v1958
        %v1993 = vunpack.c.l.b16 %v1959
        %v1994 = vunpack.c.l.b16 %v1960
        %v1995 = vunpack.c.l.b16 %v1961
        %v1996 = vunpack.c.l.b16 %v1962
        %v1997 = vunpack.c.l.b16 %v1963
        %v1998 = vunpack.c.l.b16 %v1964
        %v1999 = vunpack.c.l.b16 %v1965
        %v2000 = vunpack.c.l.b16 %v1966
        %v2001 = vunpack.c.l.b16 %v1967
        %v2002 = vunpack.c.l.b16 %v1968
        %v2003 = vunpack.c.l.b16 %v1969
        %v2004 = vunpack.c.l.b16 %v1970
        %v2005 = vunpack.c.l.b16 %v1971
        %v2006 = vpack.c.b16 %v1991, %v1990
        %v2007 = vpack.c.b16 %v1993, %v1992
        %v2008 = vpack.c.b16 %v1995, %v1994
        %v2009 = vpack.c.b16 %v1997, %v1996
        %v2010 = vpack.c.b16 %v1999, %v1998
        %v2011 = vpack.c.b16 %v2001, %v2000
        %v2012 = vpack.c.b16 %v2003, %v2002
        %v2013 = vpack.c.b16 %v2005, %v2004
        %2022 = vmatpush.bf16.msra.mxu0 %v2013
        %2023 = vmatpush.bf16.msra.mxu0 %v2012
        %2024 = vmatpush.bf16.msra.mxu0 %v2011
        %2025 = vmatpush.bf16.msra.mxu0 %v2010
        %2026 = vmatpush.bf16.msra.mxu0 %v2009
        %2027 = vmatpush.bf16.msra.mxu0 %v2008
        %2028 = vmatpush.bf16.msra.mxu0 %v2007
        %2029 = vmatpush.bf16.msra.mxu0 %v2006
        %2030 = vmatmul.bf16.gmra.mxu0 %v1706
        %v2031 = vpop.f32.mrf.mxu0
        %v2032 = vadd.f32 %v1973, %v2031
        %v2033 = vpop.f32.mrf.mxu0
        %2034 = vdwg.mxu0
        %2035 = vst [vmem:[%s358 + $0x18] sm:$0xff] %v2032
        %2036 = vst [vmem:[%s351 + $0x20] sm:$0xff] %v1675
        %s2037 = scalar_lea.vmem [#allocation8], 256
        %v2038 = vld [vmem:[%s2037] sm:$0xf]
        %v2039 = vld [vmem:[%s2037 + $0x4] sm:$0xf]
        %v2040 = vld [vmem:[%s2037 + $0x8] sm:$0xf]
        %v2041 = vld [vmem:[%s2037 + $0xc] sm:$0xf]
        %v2042 = vld [vmem:[%s2037 + $0x10] sm:$0xf]
        %v2043 = vld [vmem:[%s2037 + $0x14] sm:$0xf]
        %v2044 = vld [vmem:[%s2037 + $0x18] sm:$0xf]
        %v2045 = vld [vmem:[%s2037 + $0x1c] sm:$0xf]
        %v2046 = vld [vmem:[%s2037 + $0x20] sm:$0xf]
        %v2047 = vld [vmem:[%s2037 + $0x24] sm:$0xf]
        %v2048 = vld [vmem:[%s2037 + $0x28] sm:$0xf]
        %v2049 = vld [vmem:[%s2037 + $0x2c] sm:$0xf]
        %v2050 = vld [vmem:[%s2037 + $0x30] sm:$0xf]
        %v2051 = vld [vmem:[%s2037 + $0x34] sm:$0xf]
        %v2052 = vld [vmem:[%s2037 + $0x38] sm:$0xf]
        %v2053 = vld [vmem:[%s2037 + $0x3c] sm:$0xf]
        %v2054 = vld [vmem:[#allocation9 + $0x4] sm:$0x1]
        %v2055 = vperm.slane %v2054, 0
        %v2072 = vunpack.c.l.b16 %v2038
        %v2073 = vunpack.c.l.b16 %v2039
        %v2074 = vunpack.c.l.b16 %v2040
        %v2075 = vunpack.c.l.b16 %v2041
        %v2076 = vunpack.c.l.b16 %v2042
        %v2077 = vunpack.c.l.b16 %v2043
        %v2078 = vunpack.c.l.b16 %v2044
        %v2079 = vunpack.c.l.b16 %v2045
        %v2080 = vunpack.c.l.b16 %v2046
        %v2081 = vunpack.c.l.b16 %v2047
        %v2082 = vunpack.c.l.b16 %v2048
        %v2083 = vunpack.c.l.b16 %v2049
        %v2084 = vunpack.c.l.b16 %v2050
        %v2085 = vunpack.c.l.b16 %v2051
        %v2086 = vunpack.c.l.b16 %v2052
        %v2087 = vunpack.c.l.b16 %v2053
        %v2088 = vpack.c.b16 %v2073, %v2072
        %v2089 = vpack.c.b16 %v2075, %v2074
        %v2090 = vpack.c.b16 %v2077, %v2076
        %v2091 = vpack.c.b16 %v2079, %v2078
        %v2092 = vpack.c.b16 %v2081, %v2080
        %v2093 = vpack.c.b16 %v2083, %v2082
        %v2094 = vpack.c.b16 %v2085, %v2084
        %v2095 = vpack.c.b16 %v2087, %v2086
        %2104 = vmatpush.bf16.msra.mxu0 %v2095
        %2105 = vmatpush.bf16.msra.mxu0 %v2094
        %2106 = vmatpush.bf16.msra.mxu0 %v2093
        %2107 = vmatpush.bf16.msra.mxu0 %v2092
        %2108 = vmatpush.bf16.msra.mxu0 %v2091
        %2109 = vmatpush.bf16.msra.mxu0 %v2090
        %2110 = vmatpush.bf16.msra.mxu0 %v2089
        %2111 = vmatpush.bf16.msra.mxu0 %v2088
        %2112 = vmatmul.bf16.gmra.mxu0 %v1707
        %v2113 = vpop.f32.mrf.mxu0
        %v2114 = vadd.f32 %v2055, %v2113
        %v2115 = vpop.f32.mrf.mxu0
        %2116 = vdwg.mxu0
        %2117 = vst [vmem:[%s358 + $0x20] sm:$0xff] %v2114
        %2118 = vst [vmem:[%s351 + $0x28] sm:$0xff] %v1676
        %s2119 = scalar_lea.vmem [#allocation8], 320
        %v2120 = vld [vmem:[%s2119] sm:$0xf]
        %v2121 = vld [vmem:[%s2119 + $0x4] sm:$0xf]
        %v2122 = vld [vmem:[%s2119 + $0x8] sm:$0xf]
        %v2123 = vld [vmem:[%s2119 + $0xc] sm:$0xf]
        %v2124 = vld [vmem:[%s2119 + $0x10] sm:$0xf]
        %v2125 = vld [vmem:[%s2119 + $0x14] sm:$0xf]
        %v2126 = vld [vmem:[%s2119 + $0x18] sm:$0xf]
        %v2127 = vld [vmem:[%s2119 + $0x1c] sm:$0xf]
        %v2128 = vld [vmem:[%s2119 + $0x20] sm:$0xf]
        %v2129 = vld [vmem:[%s2119 + $0x24] sm:$0xf]
        %v2130 = vld [vmem:[%s2119 + $0x28] sm:$0xf]
        %v2131 = vld [vmem:[%s2119 + $0x2c] sm:$0xf]
        %v2132 = vld [vmem:[%s2119 + $0x30] sm:$0xf]
        %v2133 = vld [vmem:[%s2119 + $0x34] sm:$0xf]
        %v2134 = vld [vmem:[%s2119 + $0x38] sm:$0xf]
        %v2135 = vld [vmem:[%s2119 + $0x3c] sm:$0xf]
        %v2136 = vld [vmem:[#allocation9 + $0x5] sm:$0x1]
        %v2137 = vperm.slane %v2136, 0
        %v2154 = vunpack.c.l.b16 %v2120
        %v2155 = vunpack.c.l.b16 %v2121
        %v2156 = vunpack.c.l.b16 %v2122
        %v2157 = vunpack.c.l.b16 %v2123
        %v2158 = vunpack.c.l.b16 %v2124
        %v2159 = vunpack.c.l.b16 %v2125
        %v2160 = vunpack.c.l.b16 %v2126
        %v2161 = vunpack.c.l.b16 %v2127
        %v2162 = vunpack.c.l.b16 %v2128
        %v2163 = vunpack.c.l.b16 %v2129
        %v2164 = vunpack.c.l.b16 %v2130
        %v2165 = vunpack.c.l.b16 %v2131
        %v2166 = vunpack.c.l.b16 %v2132
        %v2167 = vunpack.c.l.b16 %v2133
        %v2168 = vunpack.c.l.b16 %v2134
        %v2169 = vunpack.c.l.b16 %v2135
        %v2170 = vpack.c.b16 %v2155, %v2154
        %v2171 = vpack.c.b16 %v2157, %v2156
        %v2172 = vpack.c.b16 %v2159, %v2158
        %v2173 = vpack.c.b16 %v2161, %v2160
        %v2174 = vpack.c.b16 %v2163, %v2162
        %v2175 = vpack.c.b16 %v2165, %v2164
        %v2176 = vpack.c.b16 %v2167, %v2166
        %v2177 = vpack.c.b16 %v2169, %v2168
        %2186 = vmatpush.bf16.msra.mxu0 %v2177
        %2187 = vmatpush.bf16.msra.mxu0 %v2176
        %2188 = vmatpush.bf16.msra.mxu0 %v2175
        %2189 = vmatpush.bf16.msra.mxu0 %v2174
        %2190 = vmatpush.bf16.msra.mxu0 %v2173
        %2191 = vmatpush.bf16.msra.mxu0 %v2172
        %2192 = vmatpush.bf16.msra.mxu0 %v2171
        %2193 = vmatpush.bf16.msra.mxu0 %v2170
        %2194 = vmatmul.bf16.gmra.mxu0 %v1708
        %v2195 = vpop.f32.mrf.mxu0
        %v2196 = vadd.f32 %v2137, %v2195
        %v2197 = vpop.f32.mrf.mxu0
        %2198 = vdwg.mxu0
        %2199 = vst [vmem:[%s358 + $0x28] sm:$0xff] %v2196
        %s2200 = sand.u32 %s169, 1
        %s2201 = scalar_lea.sflag [#allocation5], %s2200
        %s2202 = sand.u32 %s169, 1
        %s2203 = smul.addr %s2202, 48
        %s2204 = scalar_lea.vmem [#allocation11], %s2203
        %s2205 = sand.u32 %s195, 1
        %s2206 = scalar_lea.sflag [#allocation13], %s2205
        %s2207 = sand.u32 %s195, 1
        %s2208 = smul.addr %s2207, 48
        %s2209 = scalar_lea.vmem [#allocation12], %s2208
        // Predicated region
        $region61: #{tpu_custom_call.1} parent=43 // pred_check
          %p2210 = pneg %p179
        $region62: #{tpu_custom_call.1} parent=43 // pred_check_branch
          %2212 = sbr.rel (%p2210) target = $region64
        $region63: #{tpu_custom_call.1} parent=43 // pred_region
          %2214 = vsyncadd %s2201, 0
          %s2215 = smul.addr %s30, 6
          %s2216 = smul.addr %s2215, 8
          %s2217 = scalar_lea.hbm %s6, %s2216
          %s2219 = sshll.u32 %s2204, 4
          %s2220 = int_to_ptr.vmem [resolvable:$true] %s2219
          %s2221 = sshll.u32 %s2217, 4
          %s2222 = int_to_ptr.hbm [resolvable:$true] %s2221
          %2224 = dma.vmem_to_hbm [thread:$0]  %s2220, 768, %s2222, %s2201
        $region64: #{tpu_custom_call.1} parent=43 // pred_fallthru
          _
        // Predicated region
        $region65: #{tpu_custom_call.1} parent=43 // pred_check
          %p2225 = pneg %p205
        $region66: #{tpu_custom_call.1} parent=43 // pred_check_branch
          %2227 = sbr.rel (%p2225) target = $region68
        $region67: #{tpu_custom_call.1} parent=43 // pred_region
          %2229 = vsyncadd %s2206, 0
          %s2230 = smul.addr %s30, 6
          %s2231 = smul.addr %s2230, 8
          %s2232 = scalar_lea.hbm %s7, %s2231
          %s2234 = sshll.u32 %s2209, 4
          %s2235 = int_to_ptr.vmem [resolvable:$true] %s2234
          %s2236 = sshll.u32 %s2232, 4
          %s2237 = int_to_ptr.hbm [resolvable:$true] %s2236
          %2239 = dma.vmem_to_hbm [thread:$0]  %s2235, 768, %s2237, %s2206
        $region68: #{tpu_custom_call.1} parent=43 // pred_fallthru
          _
      $region44: #{tpu_custom_call.1} parent=5 // pred_fallthru
        _
      %p2240 = scmp.le.s32.totalorder 2, %s25
      // Predicated region
      $region69: #{tpu_custom_call.1} parent=5 // pred_check
        %p2241 = pneg %p2240
      $region70: #{tpu_custom_call.1} parent=5 // pred_check_branch
        %2243 = sbr.rel (%p2241) target = $region72
      $region71: #{tpu_custom_call.1} parent=5 // pred_region
        %s2244 = ssub.s32 %s25, 2
        // Predicated region
        $region73: #{tpu_custom_call.1} parent=71 // pred_check
          %p2245 = pneg %p185
        $region74: #{tpu_custom_call.1} parent=71 // pred_check_branch
          %2247 = sbr.rel (%p2245) target = $region76
        $region75: #{tpu_custom_call.1} parent=71 // pred_region
          %s2248 = sand.u32 %s170, 1
          %s2249 = scalar_lea.sflag [#allocation5], %s2248
          %s2250 = sand.u32 %s170, 1
          %s2251 = smul.addr %s2250, 48
          %s2252 = scalar_lea.vmem [#allocation11], %s2251
          %2254 = dma.done %s2249, 768
        $region76: #{tpu_custom_call.1} parent=71 // pred_fallthru
          _
        // Predicated region
        $region77: #{tpu_custom_call.1} parent=71 // pred_check
          %p2255 = pneg %p211
        $region78: #{tpu_custom_call.1} parent=71 // pred_check_branch
          %2257 = sbr.rel (%p2255) target = $region80
        $region79: #{tpu_custom_call.1} parent=71 // pred_region
          %s2258 = sand.u32 %s196, 1
          %s2259 = scalar_lea.sflag [#allocation13], %s2258
          %s2260 = sand.u32 %s196, 1
          %s2261 = smul.addr %s2260, 48
          %s2262 = scalar_lea.vmem [#allocation12], %s2261
          %2264 = dma.done %s2259, 768
        $region80: #{tpu_custom_call.1} parent=71 // pred_fallthru
          _
      $region72: #{tpu_custom_call.1} parent=5 // pred_fallthru
        _
    $region6: #{tpu_custom_call.1} parent=1 // loop_footer
      %s29 = sadd.s32 1, %s25
    $region7: #{tpu_custom_call.1} parent=1 // loop_footer_branch
      %24 = sbr.rel target = $region3
    $region8: #{tpu_custom_call.1} parent=1 // loop_exit
      _
    %2265 = vsyncpa [#allocation4], 1
    %s2266 = scalar_lea.sflag [#allocation4], 1
    %2267 = vsyncpa %s2266, 1
    %2268 = vsyncpa [#allocation7], 1
    %2269 = vsyncpa [#allocation10], 1
    %2270 = vsyncpa [#allocation5], 1
    %s2271 = scalar_lea.sflag [#allocation5], 1
    %2272 = vsyncpa %s2271, 1
    %2273 = vsyncpa [#allocation13], 1
    %s2274 = scalar_lea.sflag [#allocation13], 1
    %2275 = vsyncpa %s2274, 1

// kernel: tpu_custom_call.1
$region0: #{tpu_custom_call.1}
  #allocation0 [shape = 'u32[]', space=smem, size = 0x4, offset = 0x4, fixed_abs, tag = 'smem constant byte address 0x4 - core index']
  #allocation1 [shape = 'u32[72,128]{1,0:T(1,128)}', space=vmem, size = 0x9000, scoped, tag = 'internal scratch']
  #allocation2 [shape = 'bf16[48,256]{1,0:T(8,128)(2,1)}', space=vmem, size = 0x6000, scoped, tag = 'scratch operand']
  %s0 = inlined_call_operand.hbm [shape: bf16[32,48,256], index: 0, kind: input, shape index: {}]
  %s1 = inlined_call_operand.hbm [shape: bf16[256,128], index: 1, kind: input, shape index: {}]
  %s2 = inlined_call_operand.vmem [shape: f32[1,128], index: 2, kind: input, shape index: {}]
  %s3 = inlined_call_operand.vmem [shape: f32[1,128], index: 3, kind: input, shape index: {}]
  %s4 = inlined_call_operand.hbm [shape: bf16[6,128,128], index: 4, kind: input, shape index: {}]
  %s5 = inlined_call_operand.hbm [shape: f32[6,128], index: 5, kind: input, shape index: {}]
  %s6 = inlined_call_operand.hbm [shape: f32[32,768], index: 6, kind: output, shape index: {0}]
  %s7 = inlined_call_operand.hbm [shape: f32[32,768], index: 7, kind: output, shape index: {1}]
  %8 = xla_tuple %s6, %s7
  %s9 = sld [smem:[#allocation0]]
  $region81: #{tpu_custom_call.1} parent=0
    _
  %s11 = ssub.s32 1, %s9
  %s12 = scalar_select 0, %s11, %s9
  $region1: #{tpu_custom_call.1} parent=0
    #allocation3 [shape = 'u8[393216]{0}', space=vmem, size = 0x60000, scoped, tag = 'input window, operand 0']
    #allocation4 [shape = 's32[2]{0}', space=sflag, size = 0x8, scoped, tag = 'scoped memory for tpu_custom_call.1']
    #allocation5 [shape = 's32[2]{0}', space=sflag, size = 0x8, scoped, tag = 'scoped memory for tpu_custom_call.1']
    #allocation6 [shape = 'u8[65536]{0}', space=vmem, size = 0x10000, scoped, tag = 'input window, operand 1, single buffered']
    #allocation7 [shape = 's32[1]{0}', space=sflag, size = 0x4, scoped, tag = 'scoped memory for tpu_custom_call.1']
    #allocation8 [shape = 'u8[196608]{0}', space=vmem, size = 0x30000, scoped, tag = 'input window, operand 4, single buffered']
    #allocation9 [shape = 'u8[4096]{0}', space=vmem, size = 0x1000, scoped, tag = 'input window, operand 5, single buffered']
    #allocation10 [shape = 's32[1]{0}', space=sflag, size = 0x4, scoped, tag = 'scoped memory for tpu_custom_call.1']
    #allocation11 [shape = 'u8[49152]{0}', space=vmem, size = 0xc000, scoped, tag = 'output window, operand 0']
    #allocation12 [shape = 'u8[49152]{0}', space=vmem, size = 0xc000, scoped, tag = 'output window, operand 1']
    #allocation13 [shape = 's32[2]{0}', space=sflag, size = 0x8, scoped, tag = 'scoped memory for tpu_custom_call.1']
    %13 = vsyncpa [#allocation4], 0
    %s14 = scalar_lea.sflag [#allocation4], 1
    %15 = vsyncpa %s14, 0
    %16 = vsyncpa [#allocation7], 0
    %17 = vsyncpa [#allocation10], 0
    %18 = vsyncpa [#allocation5], 0
    %s19 = scalar_lea.sflag [#allocation5], 1
    %20 = vsyncpa %s19, 0
    %21 = vsyncpa [#allocation13], 0
    %s22 = scalar_lea.sflag [#allocation13], 1
    %23 = vsyncpa %s22, 0
    loop: start=0, step=1, limit=6
    $region2: #{tpu_custom_call.1} parent=1 // loop_pre_header
      _
    $region3: #{tpu_custom_call.1} parent=1 // loop_header
      %s25 = sphi 0, %s29
      %p26 = scmp.ge.s32.totalorder %s25, 6
      %s35 = sphi 0, %s37
      %s38 = sphi 0, %s35
      %s39 = sphi 0, %s38
      %s55 = sphi 0, %s39
      %s59 = sphi 0, %s59
      %s61 = sphi 0, %s59
      %s62 = sphi 0, %s61
      %s76 = sphi 0, %s62
      %s80 = sphi 0, %s80
      %s82 = sphi 0, %s80
      %s83 = sphi 0, %s82
      %s97 = sphi 0, %s83
      %s101 = sphi 0, %s101
      %s103 = sphi 0, %s101
      %s104 = sphi 0, %s103
      %s118 = sphi 0, %s104
      %s122 = sphi 0, %s122
      %s124 = sphi 0, %s122
      %s125 = sphi 0, %s124
      %s139 = sphi 0, %s125
      %s143 = sphi 0, %s143
      %s145 = sphi 0, %s143
      %s146 = sphi 0, %s145
      %s160 = sphi 0, %s146
      %s166 = sphi 0, %s168
      %s169 = sphi 0, %s166
      %s170 = sphi 0, %s169
      %s186 = sphi 0, %s170
      %s192 = sphi 0, %s194
      %s195 = sphi 0, %s192
      %s196 = sphi 0, %s195
      %s212 = sphi 0, %s196
    $region4: #{tpu_custom_call.1} parent=1 // loop_header_branch
      %28 = sbr.rel (%p26) target = $region8
    $region5: #{tpu_custom_call.1} parent=1 // loop_body
      %s30 = ssub.s32 %s25, 1
      %s31 = ssub.s32 %s25, 2
      %s32 = sadd.s32 %s25, 1
      %s33 = ssub.s32 %s25, %s32
      %p34 = scmp.eq.s32.totalorder %s33, 0
      %s36 = sadd.s32 %s35, 1
      %s37 = scalar_select %p34, %s35, %s36
      %p40 = pneg %p34
      %p41 = scmp.eq.s32.totalorder %s25, 3
      %p42 = por %p40, %p41
      %p43 = scmp.ne.s32.totalorder %s35, %s38
      %p44 = scmp.eq.s32.totalorder %s25, 0
      %p45 = por %p43, %p44
      %p46 = scmp.ne.s32.totalorder %s35, %s38
      %p47 = scmp.eq.s32.totalorder %s30, 3
      %p48 = por %p46, %p47
      %p49 = scmp.ne.s32.totalorder %s38, %s39
      %p50 = scmp.eq.s32.totalorder %s30, 0
      %p51 = por %p49, %p50
      %p52 = scmp.ne.s32.totalorder %s38, %s39
      %p53 = scmp.eq.s32.totalorder %s31, 3
      %p54 = por %p52, %p53
      %p56 = scmp.ne.s32.totalorder %s39, %s55
      %p57 = scmp.eq.s32.totalorder %s31, 0
      %p58 = por %p56, %p57
      %s60 = sadd.s32 %s59, 1
      %p63 = scmp.eq.s32.totalorder %s25, 3
      %p64 = scmp.ne.s32.totalorder %s59, %s61
      %p65 = scmp.eq.s32.totalorder %s25, 0
      %p66 = por %p64, %p65
      %p67 = scmp.ne.s32.totalorder %s59, %s61
      %p68 = scmp.eq.s32.totalorder %s30, 3
      %p69 = por %p67, %p68
      %p70 = scmp.ne.s32.totalorder %s61, %s62
      %p71 = scmp.eq.s32.totalorder %s30, 0
      %p72 = por %p70, %p71
      %p73 = scmp.ne.s32.totalorder %s61, %s62
      %p74 = scmp.eq.s32.totalorder %s31, 3
      %p75 = por %p73, %p74
      %p77 = scmp.ne.s32.totalorder %s62, %s76
      %p78 = scmp.eq.s32.totalorder %s31, 0
      %p79 = por %p77, %p78
      %s81 = sadd.s32 %s80, 1
      %p84 = scmp.eq.s32.totalorder %s25, 3
      %p85 = scmp.ne.s32.totalorder %s80, %s82
      %p86 = scmp.eq.s32.totalorder %s25, 0
      %p87 = por %p85, %p86
      %p88 = scmp.ne.s32.totalorder %s80, %s82
      %p89 = scmp.eq.s32.totalorder %s30, 3
      %p90 = por %p88, %p89
      %p91 = scmp.ne.s32.totalorder %s82, %s83
      %p92 = scmp.eq.s32.totalorder %s30, 0
      %p93 = por %p91, %p92
      %p94 = scmp.ne.s32.totalorder %s82, %s83
      %p95 = scmp.eq.s32.totalorder %s31, 3
      %p96 = por %p94, %p95
      %p98 = scmp.ne.s32.totalorder %s83, %s97
      %p99 = scmp.eq.s32.totalorder %s31, 0
      %p100 = por %p98, %p99
      %s102 = sadd.s32 %s101, 1
      %p105 = scmp.eq.s32.totalorder %s25, 3
      %p106 = scmp.ne.s32.totalorder %s101, %s103
      %p107 = scmp.eq.s32.totalorder %s25, 0
      %p108 = por %p106, %p107
      %p109 = scmp.ne.s32.totalorder %s101, %s103
      %p110 = scmp.eq.s32.totalorder %s30, 3
      %p111 = por %p109, %p110
      %p112 = scmp.ne.s32.totalorder %s103, %s104
      %p113 = scmp.eq.s32.totalorder %s30, 0
      %p114 = por %p112, %p113
      %p115 = scmp.ne.s32.totalorder %s103, %s104
      %p116 = scmp.eq.s32.totalorder %s31, 3
      %p117 = por %p115, %p116
      %p119 = scmp.ne.s32.totalorder %s104, %s118
      %p120 = scmp.eq.s32.totalorder %s31, 0
      %p121 = por %p119, %p120
      %s123 = sadd.s32 %s122, 1
      %p126 = scmp.eq.s32.totalorder %s25, 3
      %p127 = scmp.ne.s32.totalorder %s122, %s124
      %p128 = scmp.eq.s32.totalorder %s25, 0
      %p129 = por %p127, %p128
      %p130 = scmp.ne.s32.totalorder %s122, %s124
      %p131 = scmp.eq.s32.totalorder %s30, 3
      %p132 = por %p130, %p131
      %p133 = scmp.ne.s32.totalorder %s124, %s125
      %p134 = scmp.eq.s32.totalorder %s30, 0
      %p135 = por %p133, %p134
      %p136 = scmp.ne.s32.totalorder %s124, %s125
      %p137 = scmp.eq.s32.totalorder %s31, 3
      %p138 = por %p136, %p137
      %p140 = scmp.ne.s32.totalorder %s125, %s139
      %p141 = scmp.eq.s32.totalorder %s31, 0
      %p142 = por %p140, %p141
      %s144 = sadd.s32 %s143, 1
      %p147 = scmp.eq.s32.totalorder %s25, 3
      %p148 = scmp.ne.s32.totalorder %s143, %s145
      %p149 = scmp.eq.s32.totalorder %s25, 0
      %p150 = por %p148, %p149
      %p151 = scmp.ne.s32.totalorder %s143, %s145
      %p152 = scmp.eq.s32.totalorder %s30, 3
      %p153 = por %p151, %p152
      %p154 = scmp.ne.s32.totalorder %s145, %s146
      %p155 = scmp.eq.s32.totalorder %s30, 0
      %p156 = por %p154, %p155
      %p157 = scmp.ne.s32.totalorder %s145, %s146
      %p158 = scmp.eq.s32.totalorder %s31, 3
      %p159 = por %p157, %p158
      %p161 = scmp.ne.s32.totalorder %s146, %s160
      %p162 = scmp.eq.s32.totalorder %s31, 0
      %p163 = por %p161, %p162
      %s164 = ssub.s32 %s25, %s32
      %p165 = scmp.eq.s32.totalorder %s164, 0
      %s167 = sadd.s32 %s166, 1
      %s168 = scalar_select %p165, %s166, %s167
      %p171 = pneg %p165
      %p172 = scmp.eq.s32.totalorder %s25, 3
      %p173 = por %p171, %p172
      %p174 = scmp.ne.s32.totalorder %s166, %s169
      %p175 = scmp.eq.s32.totalorder %s25, 0
      %p176 = por %p174, %p175
      %p177 = scmp.ne.s32.totalorder %s166, %s169
      %p178 = scmp.eq.s32.totalorder %s30, 3
      %p179 = por %p177, %p178
      %p180 = scmp.ne.s32.totalorder %s169, %s170
      %p181 = scmp.eq.s32.totalorder %s30, 0
      %p182 = por %p180, %p181
      %p183 = scmp.ne.s32.totalorder %s169, %s170
      %p184 = scmp.eq.s32.totalorder %s31, 3
      %p185 = por %p183, %p184
      %p187 = scmp.ne.s32.totalorder %s170, %s186
      %p188 = scmp.eq.s32.totalorder %s31, 0
      %p189 = por %p187, %p188
      %s190 = ssub.s32 %s25, %s32
      %p191 = scmp.eq.s32.totalorder %s190, 0
      %s193 = sadd.s32 %s192, 1
      %s194 = scalar_select %p191, %s192, %s193
      %p197 = pneg %p191
      %p198 = scmp.eq.s32.totalorder %s25, 3
      %p199 = por %p197, %p198
      %p200 = scmp.ne.s32.totalorder %s192, %s195
      %p201 = scmp.eq.s32.totalorder %s25, 0
      %p202 = por %p200, %p201
      %p203 = scmp.ne.s32.totalorder %s192, %s195
      %p204 = scmp.eq.s32.totalorder %s30, 3
      %p205 = por %p203, %p204
      %p206 = scmp.ne.s32.totalorder %s195, %s196
      %p207 = scmp.eq.s32.totalorder %s30, 0
      %p208 = por %p206, %p207
      %p209 = scmp.ne.s32.totalorder %s195, %s196
      %p210 = scmp.eq.s32.totalorder %s31, 3
      %p211 = por %p209, %p210
      %p213 = scmp.ne.s32.totalorder %s196, %s212
      %p214 = scmp.eq.s32.totalorder %s31, 0
      %p215 = por %p213, %p214
      %p216 = scmp.le.s32.totalorder 1, %s25
      %p217 = scmp.lt.s32.totalorder %s25, 5
      %p218 = pnand %p216, %p217
      %p219 = pneg %p218
      // Predicated region
      $region9: #{tpu_custom_call.1} parent=5 // pred_check
        _
      $region10: #{tpu_custom_call.1} parent=5 // pred_check_branch
        %221 = sbr.rel (%p218) target = $region12
      $region11: #{tpu_custom_call.1} parent=5 // pred_region
        %s222 = ssub.s32 %s25, 1
        // Predicated region
        $region13: #{tpu_custom_call.1} parent=11 // pred_check
          %p223 = pneg %p72
        $region14: #{tpu_custom_call.1} parent=11 // pred_check_branch
          %225 = sbr.rel (%p223) target = $region16
        $region15: #{tpu_custom_call.1} parent=11 // pred_region
          %227 = vsyncadd [#allocation7], 0
          %s228 = sshll.u32 %s1, 4
          %s229 = int_to_ptr.hbm [resolvable:$true] %s228
          %s230 = sshll.u32 [#allocation6], 4
          %s231 = int_to_ptr.vmem [resolvable:$true] %s230
          %236 = dma.hbm_to_vmem [thread:$0]  %s229, 2048, %s231, [#allocation7], 64, 64, 4
        $region16: #{tpu_custom_call.1} parent=11 // pred_fallthru
          _
        // Predicated region
        $region17: #{tpu_custom_call.1} parent=11 // pred_check
          %p237 = pneg %p93
        $region18: #{tpu_custom_call.1} parent=11 // pred_check_branch
          %239 = sbr.rel (%p237) target = $region20
        $region19: #{tpu_custom_call.1} parent=11 // pred_region
          _
        $region20: #{tpu_custom_call.1} parent=11 // pred_fallthru
          _
        // Predicated region
        $region21: #{tpu_custom_call.1} parent=11 // pred_check
          %p240 = pneg %p114
        $region22: #{tpu_custom_call.1} parent=11 // pred_check_branch
          %242 = sbr.rel (%p240) target = $region24
        $region23: #{tpu_custom_call.1} parent=11 // pred_region
          _
        $region24: #{tpu_custom_call.1} parent=11 // pred_fallthru
          _
        // Predicated region
        $region25: #{tpu_custom_call.1} parent=11 // pred_check
          %p243 = pneg %p135
        $region26: #{tpu_custom_call.1} parent=11 // pred_check_branch
          %245 = sbr.rel (%p243) target = $region28
        $region27: #{tpu_custom_call.1} parent=11 // pred_region
          %247 = vsyncadd [#allocation7], 0
          %s248 = sshll.u32 %s4, 4
          %s249 = int_to_ptr.hbm [resolvable:$true] %s248
          %s250 = sshll.u32 [#allocation8], 4
          %s251 = int_to_ptr.vmem [resolvable:$true] %s250
          %256 = dma.hbm_to_vmem [thread:$0]  %s249, 6144, %s251, [#allocation7], 64, 64, 4
        $region28: #{tpu_custom_call.1} parent=11 // pred_fallthru
          _
        // Predicated region
        $region29: #{tpu_custom_call.1} parent=11 // pred_check
          %p257 = pneg %p156
        $region30: #{tpu_custom_call.1} parent=11 // pred_check_branch
          %259 = sbr.rel (%p257) target = $region32
        $region31: #{tpu_custom_call.1} parent=11 // pred_region
          %261 = vsyncadd [#allocation10], 0
          %s263 = sshll.u32 %s5, 4
          %s264 = int_to_ptr.hbm [resolvable:$true] %s263
          %s265 = sshll.u32 [#allocation9], 4
          %s266 = int_to_ptr.vmem [resolvable:$true] %s265
          %268 = dma.hbm_to_vmem [thread:$0]  %s264, 128, %s266, [#allocation10]
        $region32: #{tpu_custom_call.1} parent=11 // pred_fallthru
          _
      $region12: #{tpu_custom_call.1} parent=5 // pred_fallthru
        _
      %p269 = scmp.lt.s32.totalorder %s25, 4
      // Predicated region
      $region33: #{tpu_custom_call.1} parent=5 // pred_check
        %p270 = pneg %p269
      $region34: #{tpu_custom_call.1} parent=5 // pred_check_branch
        %272 = sbr.rel (%p270) target = $region36
      $region35: #{tpu_custom_call.1} parent=5 // pred_region
        // Predicated region
        $region37: #{tpu_custom_call.1} parent=35 // pred_check
          %p273 = pneg %p45
        $region38: #{tpu_custom_call.1} parent=35 // pred_check_branch
          %275 = sbr.rel (%p273) target = $region40
        $region39: #{tpu_custom_call.1} parent=35 // pred_region
          %s276 = sand.u32 %s35, 1
          %s277 = scalar_lea.sflag [#allocation4], %s276
          %s278 = sand.u32 %s35, 1
          %s279 = smul.addr %s278, 384
          %s280 = scalar_lea.vmem [#allocation3], %s279
          %s281 = smul.u32 8, %s25
          %283 = vsyncadd %s277, 0
          %s284 = smul.addr %s281, 12
          %s285 = smul.addr %s284, 4
          %s286 = scalar_lea.hbm %s0, %s285
          %s287 = sshll.u32 %s286, 4
          %s288 = int_to_ptr.hbm [resolvable:$true] %s287
          %s289 = sshll.u32 %s280, 4
          %s290 = int_to_ptr.vmem [resolvable:$true] %s289
          %295 = dma.hbm_to_vmem [thread:$0]  %s288, 6144, %s290, %s277, 128, 128, 8
        $region40: #{tpu_custom_call.1} parent=35 // pred_fallthru
          _
      $region36: #{tpu_custom_call.1} parent=5 // pred_fallthru
        _
      %p296 = scmp.le.s32.totalorder 1, %s25
      %p297 = scmp.lt.s32.totalorder %s25, 5
      %p298 = pnand %p296, %p297
      %p299 = pneg %p298
      // Predicated region
      $region41: #{tpu_custom_call.1} parent=5 // pred_check
        _
      $region42: #{tpu_custom_call.1} parent=5 // pred_check_branch
        %301 = sbr.rel (%p298) target = $region44
      $region43: #{tpu_custom_call.1} parent=5 // pred_region
        %s302 = ssub.s32 %s25, 1
        %s303 = sand.u32 %s38, 1
        %s304 = scalar_lea.sflag [#allocation4], %s303
        %s305 = sand.u32 %s38, 1
        %s306 = smul.addr %s305, 384
        %s307 = scalar_lea.vmem [#allocation3], %s306
        // Predicated region
        $region45: #{tpu_custom_call.1} parent=43 // pred_check
          %p308 = pneg %p51
        $region46: #{tpu_custom_call.1} parent=43 // pred_check_branch
          %310 = sbr.rel (%p308) target = $region48
        $region47: #{tpu_custom_call.1} parent=43 // pred_region
          %312 = dma.done %s304, 6144
        $region48: #{tpu_custom_call.1} parent=43 // pred_fallthru
          _
        // Predicated region
        $region49: #{tpu_custom_call.1} parent=43 // pred_check
          %p313 = pneg %p72
        $region50: #{tpu_custom_call.1} parent=43 // pred_check_branch
          %315 = sbr.rel (%p313) target = $region52
        $region51: #{tpu_custom_call.1} parent=43 // pred_region
          %317 = dma.done [#allocation7], 2048
        $region52: #{tpu_custom_call.1} parent=43 // pred_fallthru
          _
        // Predicated region
        $region53: #{tpu_custom_call.1} parent=43 // pred_check
          %p318 = pneg %p135
        $region54: #{tpu_custom_call.1} parent=43 // pred_check_branch
          %320 = sbr.rel (%p318) target = $region56
        $region55: #{tpu_custom_call.1} parent=43 // pred_region
          %322 = dma.done [#allocation7], 6144
        $region56: #{tpu_custom_call.1} parent=43 // pred_fallthru
          _
        // Predicated region
        $region57: #{tpu_custom_call.1} parent=43 // pred_check
          %p323 = pneg %p156
        $region58: #{tpu_custom_call.1} parent=43 // pred_check_branch
          %325 = sbr.rel (%p323) target = $region60
        $region59: #{tpu_custom_call.1} parent=43 // pred_region
          %327 = dma.done [#allocation10], 128
        $region60: #{tpu_custom_call.1} parent=43 // pred_fallthru
          _
        %s328 = sand.u32 %s38, 1
        %s329 = scalar_lea.sflag [#allocation4], %s328
        %s330 = sand.u32 %s38, 1
        %s331 = smul.addr %s330, 384
        %s332 = scalar_lea.vmem [#allocation3], %s331
        %p333 = pneg %p51
        %p334 = pneg %p48
        %p335 = pneg %p72
        %p336 = pneg %p69
        %p337 = pneg %p93
        %p338 = pneg %p90
        %p339 = pneg %p114
        %p340 = pneg %p111
        %p341 = pneg %p135
        %p342 = pneg %p132
        %p343 = pneg %p156
        %p344 = pneg %p153
        %p345 = pneg %p182
        %p346 = pneg %p179
        %s347 = sand.u32 %s169, 1
        %s348 = scalar_lea.sflag [#allocation5], %s347
        %s349 = sand.u32 %s169, 1
        %s350 = smul.addr %s349, 48
        %s351 = scalar_lea.vmem [#allocation11], %s350
        %p352 = pneg %p208
        %p353 = pneg %p205
        %s354 = sand.u32 %s195, 1
        %s355 = scalar_lea.sflag [#allocation13], %s354
        %s356 = sand.u32 %s195, 1
        %s357 = smul.addr %s356, 48
        %s358 = scalar_lea.vmem [#allocation12], %s357
        %s359 = smul.u32 8, %s30
        %v360 = vld [vmem:[%s307] sm:$0xff]
        %v361 = vld [vmem:[%s307 + $0x30] sm:$0xff]
        %v362 = vld [vmem:[%s307 + $0x60] sm:$0xff]
        %v363 = vld [vmem:[%s307 + $0x90] sm:$0xff]
        %v364 = vld [vmem:[%s307 + $0xc0] sm:$0xff]
        %v365 = vld [vmem:[%s307 + $0xf0] sm:$0xff]
        %v366 = vld [vmem:[%s307 + $0x120] sm:$0xff]
        %v367 = vld [vmem:[%s307 + $0x150] sm:$0xff]
        %v368 = vunpack.c.l.bf16 %v360
        %v369 = vunpack.c.h.bf16 %v360
        %v370 = vunpack.c.l.bf16 %v361
        %v371 = vunpack.c.h.bf16 %v361
        %v372 = vunpack.c.l.bf16 %v362
        %v373 = vunpack.c.h.bf16 %v362
        %v374 = vunpack.c.l.bf16 %v363
        %v375 = vunpack.c.h.bf16 %v363
        %v376 = vunpack.c.l.bf16 %v364
        %v377 = vunpack.c.h.bf16 %v364
        %v378 = vunpack.c.l.bf16 %v365
        %v379 = vunpack.c.h.bf16 %v365
        %v380 = vunpack.c.l.bf16 %v366
        %v381 = vunpack.c.h.bf16 %v366
        %v382 = vunpack.c.l.bf16 %v367
        %v383 = vunpack.c.h.bf16 %v367
        %v384 = vrot.slane %v368, 4
        %v385 = vadd.f32 %v368, %v384
        %v386 = vrot.slane %v385, 2
        %v387 = vadd.f32 %v385, %v386
        %v388 = vrot.slane %v387, 1
        %v389 = vadd.f32 %v387, %v388
        %v390 = vrot.slane %v369, 4
        %v391 = vadd.f32 %v369, %v390
        %v392 = vrot.slane %v391, 2
        %v393 = vadd.f32 %v391, %v392
        %v394 = vrot.slane %v393, 1
        %v395 = vadd.f32 %v393, %v394
        %v396 = vrot.slane %v370, 4
        %v397 = vadd.f32 %v370, %v396
        %v398 = vrot.slane %v397, 2
        %v399 = vadd.f32 %v397, %v398
        %v400 = vrot.slane %v399, 1
        %v401 = vadd.f32 %v399, %v400
        %v402 = vrot.slane %v371, 4
        %v403 = vadd.f32 %v371, %v402
        %v404 = vrot.slane %v403, 2
        %v405 = vadd.f32 %v403, %v404
        %v406 = vrot.slane %v405, 1
        %v407 = vadd.f32 %v405, %v406
        %v408 = vrot.slane %v372, 4
        %v409 = vadd.f32 %v372, %v408
        %v410 = vrot.slane %v409, 2
        %v411 = vadd.f32 %v409, %v410
        %v412 = vrot.slane %v411, 1
        %v413 = vadd.f32 %v411, %v412
        %v414 = vrot.slane %v373, 4
        %v415 = vadd.f32 %v373, %v414
        %v416 = vrot.slane %v415, 2
        %v417 = vadd.f32 %v415, %v416
        %v418 = vrot.slane %v417, 1
        %v419 = vadd.f32 %v417, %v418
        %v420 = vrot.slane %v374, 4
        %v421 = vadd.f32 %v374, %v420
        %v422 = vrot.slane %v421, 2
        %v423 = vadd.f32 %v421, %v422
        %v424 = vrot.slane %v423, 1
        %v425 = vadd.f32 %v423, %v424
        %v426 = vrot.slane %v375, 4
        %v427 = vadd.f32 %v375, %v426
        %v428 = vrot.slane %v427, 2
        %v429 = vadd.f32 %v427, %v428
        %v430 = vrot.slane %v429, 1
        %v431 = vadd.f32 %v429, %v430
        %v432 = vrot.slane %v376, 4
        %v433 = vadd.f32 %v376, %v432
        %v434 = vrot.slane %v433, 2
        %v435 = vadd.f32 %v433, %v434
        %v436 = vrot.slane %v435, 1
        %v437 = vadd.f32 %v435, %v436
        %v438 = vrot.slane %v377, 4
        %v439 = vadd.f32 %v377, %v438
        %v440 = vrot.slane %v439, 2
        %v441 = vadd.f32 %v439, %v440
        %v442 = vrot.slane %v441, 1
        %v443 = vadd.f32 %v441, %v442
        %v444 = vrot.slane %v378, 4
        %v445 = vadd.f32 %v378, %v444
        %v446 = vrot.slane %v445, 2
        %v447 = vadd.f32 %v445, %v446
        %v448 = vrot.slane %v447, 1
        %v449 = vadd.f32 %v447, %v448
        %v450 = vrot.slane %v379, 4
        %v451 = vadd.f32 %v379, %v450
        %v452 = vrot.slane %v451, 2
        %v453 = vadd.f32 %v451, %v452
        %v454 = vrot.slane %v453, 1
        %v455 = vadd.f32 %v453, %v454
        %v456 = vrot.slane %v380, 4
        %v457 = vadd.f32 %v380, %v456
        %v458 = vrot.slane %v457, 2
        %v459 = vadd.f32 %v457, %v458
        %v460 = vrot.slane %v459, 1
        %v461 = vadd.f32 %v459, %v460
        %v462 = vrot.slane %v381, 4
        %v463 = vadd.f32 %v381, %v462
        %v464 = vrot.slane %v463, 2
        %v465 = vadd.f32 %v463, %v464
        %v466 = vrot.slane %v465, 1
        %v467 = vadd.f32 %v465, %v466
        %v468 = vrot.slane %v382, 4
        %v469 = vadd.f32 %v382, %v468
        %v470 = vrot.slane %v469, 2
        %v471 = vadd.f32 %v469, %v470
        %v472 = vrot.slane %v471, 1
        %v473 = vadd.f32 %v471, %v472
        %v474 = vrot.slane %v383, 4
        %v475 = vadd.f32 %v383, %v474
        %v476 = vrot.slane %v475, 2
        %v477 = vadd.f32 %v475, %v476
        %v478 = vrot.slane %v477, 1
        %v479 = vadd.f32 %v477, %v478
        %v480 = vpack.c.bf16 %v395, %v389
        %v481 = vpack.c.bf16 %v407, %v401
        %v482 = vpack.c.bf16 %v419, %v413
        %v483 = vpack.c.bf16 %v431, %v425
        %v484 = vpack.c.bf16 %v443, %v437
        %v485 = vpack.c.bf16 %v455, %v449
        %v486 = vpack.c.bf16 %v467, %v461
        %v487 = vpack.c.bf16 %v479, %v473
        %v496 = vunpack.c.l.b16 %v480
        %v497 = vunpack.c.h.b16 %v480
        %v498 = vunpack.c.l.b16 %v481
        %v499 = vunpack.c.h.b16 %v481
        %v500 = vunpack.c.l.b16 %v482
        %v501 = vunpack.c.h.b16 %v482
        %v502 = vunpack.c.l.b16 %v483
        %v503 = vunpack.c.h.b16 %v483
        %v504 = vunpack.c.l.b16 %v484
        %v505 = vunpack.c.h.b16 %v484
        %v506 = vunpack.c.l.b16 %v485
        %v507 = vunpack.c.h.b16 %v485
        %v508 = vunpack.c.l.b16 %v486
        %v509 = vunpack.c.h.b16 %v486
        %v510 = vunpack.c.l.b16 %v487
        %v511 = vunpack.c.h.b16 %v487
        %vm512 = vcmask 1041409
        %v513 = vsel %vm512, %v498, %v496
        %vm514 = vcmask 1042434
        %v515 = vsel %vm514, %v500, %v513
        %vm516 = vcmask 1043459
        %v517 = vsel %vm516, %v502, %v515
        %vm518 = vcmask 1044484
        %v519 = vsel %vm518, %v504, %v517
        %vm520 = vcmask 1045509
        %v521 = vsel %vm520, %v506, %v519
        %vm522 = vcmask 1046534
        %v523 = vsel %vm522, %v508, %v521
        %vm524 = vcmask 1047559
        %v525 = vsel %vm524, %v510, %v523
        %v526 = vsel %vm512, %v499, %v497
        %v527 = vsel %vm514, %v501, %v526
        %v528 = vsel %vm516, %v503, %v527
        %v529 = vsel %vm518, %v505, %v528
        %v530 = vsel %vm520, %v507, %v529
        %v531 = vsel %vm522, %v509, %v530
        %v532 = vsel %vm524, %v511, %v531
        %v533 = vpack.c.b16 %v532, %v525
        %535 = vst [vmem:[#allocation2] sm:$0xff] %v533
        %v536 = vld [vmem:[%s307 + $0x8] sm:$0xff]
        %v537 = vld [vmem:[%s307 + $0x38] sm:$0xff]
        %v538 = vld [vmem:[%s307 + $0x68] sm:$0xff]
        %v539 = vld [vmem:[%s307 + $0x98] sm:$0xff]
        %v540 = vld [vmem:[%s307 + $0xc8] sm:$0xff]
        %v541 = vld [vmem:[%s307 + $0xf8] sm:$0xff]
        %v542 = vld [vmem:[%s307 + $0x128] sm:$0xff]
        %v543 = vld [vmem:[%s307 + $0x158] sm:$0xff]
        %v544 = vunpack.c.l.bf16 %v536
        %v545 = vunpack.c.h.bf16 %v536
        %v546 = vunpack.c.l.bf16 %v537
        %v547 = vunpack.c.h.bf16 %v537
        %v548 = vunpack.c.l.bf16 %v538
        %v549 = vunpack.c.h.bf16 %v538
        %v550 = vunpack.c.l.bf16 %v539
        %v551 = vunpack.c.h.bf16 %v539
        %v552 = vunpack.c.l.bf16 %v540
        %v553 = vunpack.c.h.bf16 %v540
        %v554 = vunpack.c.l.bf16 %v541
        %v555 = vunpack.c.h.bf16 %v541
        %v556 = vunpack.c.l.bf16 %v542
        %v557 = vunpack.c.h.bf16 %v542
        %v558 = vunpack.c.l.bf16 %v543
        %v559 = vunpack.c.h.bf16 %v543
        %v560 = vrot.slane %v544, 4
        %v561 = vadd.f32 %v544, %v560
        %v562 = vrot.slane %v561, 2
        %v563 = vadd.f32 %v561, %v562
        %v564 = vrot.slane %v563, 1
        %v565 = vadd.f32 %v563, %v564
        %v566 = vrot.slane %v545, 4
        %v567 = vadd.f32 %v545, %v566
        %v568 = vrot.slane %v567, 2
        %v569 = vadd.f32 %v567, %v568
        %v570 = vrot.slane %v569, 1
        %v571 = vadd.f32 %v569, %v570
        %v572 = vrot.slane %v546, 4
        %v573 = vadd.f32 %v546, %v572
        %v574 = vrot.slane %v573, 2
        %v575 = vadd.f32 %v573, %v574
        %v576 = vrot.slane %v575, 1
        %v577 = vadd.f32 %v575, %v576
        %v578 = vrot.slane %v547, 4
        %v579 = vadd.f32 %v547, %v578
        %v580 = vrot.slane %v579, 2
        %v581 = vadd.f32 %v579, %v580
        %v582 = vrot.slane %v581, 1
        %v583 = vadd.f32 %v581, %v582
        %v584 = vrot.slane %v548, 4
        %v585 = vadd.f32 %v548, %v584
        %v586 = vrot.slane %v585, 2
        %v587 = vadd.f32 %v585, %v586
        %v588 = vrot.slane %v587, 1
        %v589 = vadd.f32 %v587, %v588
        %v590 = vrot.slane %v549, 4
        %v591 = vadd.f32 %v549, %v590
        %v592 = vrot.slane %v591, 2
        %v593 = vadd.f32 %v591, %v592
        %v594 = vrot.slane %v593, 1
        %v595 = vadd.f32 %v593, %v594
        %v596 = vrot.slane %v550, 4
        %v597 = vadd.f32 %v550, %v596
        %v598 = vrot.slane %v597, 2
        %v599 = vadd.f32 %v597, %v598
        %v600 = vrot.slane %v599, 1
        %v601 = vadd.f32 %v599, %v600
        %v602 = vrot.slane %v551, 4
        %v603 = vadd.f32 %v551, %v602
        %v604 = vrot.slane %v603, 2
        %v605 = vadd.f32 %v603, %v604
        %v606 = vrot.slane %v605, 1
        %v607 = vadd.f32 %v605, %v606
        %v608 = vrot.slane %v552, 4
        %v609 = vadd.f32 %v552, %v608
        %v610 = vrot.slane %v609, 2
        %v611 = vadd.f32 %v609, %v610
        %v612 = vrot.slane %v611, 1
        %v613 = vadd.f32 %v611, %v612
        %v614 = vrot.slane %v553, 4
        %v615 = vadd.f32 %v553, %v614
        %v616 = vrot.slane %v615, 2
        %v617 = vadd.f32 %v615, %v616
        %v618 = vrot.slane %v617, 1
        %v619 = vadd.f32 %v617, %v618
        %v620 = vrot.slane %v554, 4
        %v621 = vadd.f32 %v554, %v620
        %v622 = vrot.slane %v621, 2
        %v623 = vadd.f32 %v621, %v622
        %v624 = vrot.slane %v623, 1
        %v625 = vadd.f32 %v623, %v624
        %v626 = vrot.slane %v555, 4
        %v627 = vadd.f32 %v555, %v626
        %v628 = vrot.slane %v627, 2
        %v629 = vadd.f32 %v627, %v628
        %v630 = vrot.slane %v629, 1
        %v631 = vadd.f32 %v629, %v630
        %v632 = vrot.slane %v556, 4
        %v633 = vadd.f32 %v556, %v632
        %v634 = vrot.slane %v633, 2
        %v635 = vadd.f32 %v633, %v634
        %v636 = vrot.slane %v635, 1
        %v637 = vadd.f32 %v635, %v636
        %v638 = vrot.slane %v557, 4
        %v639 = vadd.f32 %v557, %v638
        %v640 = vrot.slane %v639, 2
        %v641 = vadd.f32 %v639, %v640
        %v642 = vrot.slane %v641, 1
        %v643 = vadd.f32 %v641, %v642
        %v644 = vrot.slane %v558, 4
        %v645 = vadd.f32 %v558, %v644
        %v646 = vrot.slane %v645, 2
        %v647 = vadd.f32 %v645, %v646
        %v648 = vrot.slane %v647, 1
        %v649 = vadd.f32 %v647, %v648
        %v650 = vrot.slane %v559, 4
        %v651 = vadd.f32 %v559, %v650
        %v652 = vrot.slane %v651, 2
        %v653 = vadd.f32 %v651, %v652
        %v654 = vrot.slane %v653, 1
        %v655 = vadd.f32 %v653, %v654
        %v656 = vpack.c.bf16 %v571, %v565
        %v657 = vpack.c.bf16 %v583, %v577
        %v658 = vpack.c.bf16 %v595, %v589
        %v659 = vpack.c.bf16 %v607, %v601
        %v660 = vpack.c.bf16 %v619, %v613
        %v661 = vpack.c.bf16 %v631, %v625
        %v662 = vpack.c.bf16 %v643, %v637
        %v663 = vpack.c.bf16 %v655, %v649
        %v672 = vunpack.c.l.b16 %v656
        %v673 = vunpack.c.h.b16 %v656
        %v674 = vunpack.c.l.b16 %v657
        %v675 = vunpack.c.h.b16 %v657
        %v676 = vunpack.c.l.b16 %v658
        %v677 = vunpack.c.h.b16 %v658
        %v678 = vunpack.c.l.b16 %v659
        %v679 = vunpack.c.h.b16 %v659
        %v680 = vunpack.c.l.b16 %v660
        %v681 = vunpack.c.h.b16 %v660
        %v682 = vunpack.c.l.b16 %v661
        %v683 = vunpack.c.h.b16 %v661
        %v684 = vunpack.c.l.b16 %v662
        %v685 = vunpack.c.h.b16 %v662
        %v686 = vunpack.c.l.b16 %v663
        %v687 = vunpack.c.h.b16 %v663
        %v688 = vsel %vm512, %v674, %v672
        %v689 = vsel %vm514, %v676, %v688
        %v690 = vsel %vm516, %v678, %v689
        %v691 = vsel %vm518, %v680, %v690
        %v692 = vsel %vm520, %v682, %v691
        %v693 = vsel %vm522, %v684, %v692
        %v694 = vsel %vm524, %v686, %v693
        %v695 = vsel %vm512, %v675, %v673
        %v696 = vsel %vm514, %v677, %v695
        %v697 = vsel %vm516, %v679, %v696
        %v698 = vsel %vm518, %v681, %v697
        %v699 = vsel %vm520, %v683, %v698
        %v700 = vsel %vm522, %v685, %v699
        %v701 = vsel %vm524, %v687, %v700
        %v702 = vpack.c.b16 %v701, %v694
        %704 = vst [vmem:[#allocation2 + $0x8] sm:$0xff] %v702
        %v705 = vld [vmem:[%s307 + $0x10] sm:$0xff]
        %v706 = vld [vmem:[%s307 + $0x40] sm:$0xff]
        %v707 = vld [vmem:[%s307 + $0x70] sm:$0xff]
        %v708 = vld [vmem:[%s307 + $0xa0] sm:$0xff]
        %v709 = vld [vmem:[%s307 + $0xd0] sm:$0xff]
        %v710 = vld [vmem:[%s307 + $0x100] sm:$0xff]
        %v711 = vld [vmem:[%s307 + $0x130] sm:$0xff]
        %v712 = vld [vmem:[%s307 + $0x160] sm:$0xff]
        %v713 = vunpack.c.l.bf16 %v705
        %v714 = vunpack.c.h.bf16 %v705
        %v715 = vunpack.c.l.bf16 %v706
        %v716 = vunpack.c.h.bf16 %v706
        %v717 = vunpack.c.l.bf16 %v707
        %v718 = vunpack.c.h.bf16 %v707
        %v719 = vunpack.c.l.bf16 %v708
        %v720 = vunpack.c.h.bf16 %v708
        %v721 = vunpack.c.l.bf16 %v709
        %v722 = vunpack.c.h.bf16 %v709
        %v723 = vunpack.c.l.bf16 %v710
        %v724 = vunpack.c.h.bf16 %v710
        %v725 = vunpack.c.l.bf16 %v711
        %v726 = vunpack.c.h.bf16 %v711
        %v727 = vunpack.c.l.bf16 %v712
        %v728 = vunpack.c.h.bf16 %v712
        %v729 = vrot.slane %v713, 4
        %v730 = vadd.f32 %v713, %v729
        %v731 = vrot.slane %v730, 2
        %v732 = vadd.f32 %v730, %v731
        %v733 = vrot.slane %v732, 1
        %v734 = vadd.f32 %v732, %v733
        %v735 = vrot.slane %v714, 4
        %v736 = vadd.f32 %v714, %v735
        %v737 = vrot.slane %v736, 2
        %v738 = vadd.f32 %v736, %v737
        %v739 = vrot.slane %v738, 1
        %v740 = vadd.f32 %v738, %v739
        %v741 = vrot.slane %v715, 4
        %v742 = vadd.f32 %v715, %v741
        %v743 = vrot.slane %v742, 2
        %v744 = vadd.f32 %v742, %v743
        %v745 = vrot.slane %v744, 1
        %v746 = vadd.f32 %v744, %v745
        %v747 = vrot.slane %v716, 4
        %v748 = vadd.f32 %v716, %v747
        %v749 = vrot.slane %v748, 2
        %v750 = vadd.f32 %v748, %v749
        %v751 = vrot.slane %v750, 1
        %v752 = vadd.f32 %v750, %v751
        %v753 = vrot.slane %v717, 4
        %v754 = vadd.f32 %v717, %v753
        %v755 = vrot.slane %v754, 2
        %v756 = vadd.f32 %v754, %v755
        %v757 = vrot.slane %v756, 1
        %v758 = vadd.f32 %v756, %v757
        %v759 = vrot.slane %v718, 4
        %v760 = vadd.f32 %v718, %v759
        %v761 = vrot.slane %v760, 2
        %v762 = vadd.f32 %v760, %v761
        %v763 = vrot.slane %v762, 1
        %v764 = vadd.f32 %v762, %v763
        %v765 = vrot.slane %v719, 4
        %v766 = vadd.f32 %v719, %v765
        %v767 = vrot.slane %v766, 2
        %v768 = vadd.f32 %v766, %v767
        %v769 = vrot.slane %v768, 1
        %v770 = vadd.f32 %v768, %v769
        %v771 = vrot.slane %v720, 4
        %v772 = vadd.f32 %v720, %v771
        %v773 = vrot.slane %v772, 2
        %v774 = vadd.f32 %v772, %v773
        %v775 = vrot.slane %v774, 1
        %v776 = vadd.f32 %v774, %v775
        %v777 = vrot.slane %v721, 4
        %v778 = vadd.f32 %v721, %v777
        %v779 = vrot.slane %v778, 2
        %v780 = vadd.f32 %v778, %v779
        %v781 = vrot.slane %v780, 1
        %v782 = vadd.f32 %v780, %v781
        %v783 = vrot.slane %v722, 4
        %v784 = vadd.f32 %v722, %v783
        %v785 = vrot.slane %v784, 2
        %v786 = vadd.f32 %v784, %v785
        %v787 = vrot.slane %v786, 1
        %v788 = vadd.f32 %v786, %v787
        %v789 = vrot.slane %v723, 4
        %v790 = vadd.f32 %v723, %v789
        %v791 = vrot.slane %v790, 2
        %v792 = vadd.f32 %v790, %v791
        %v793 = vrot.slane %v792, 1
        %v794 = vadd.f32 %v792, %v793
        %v795 = vrot.slane %v724, 4
        %v796 = vadd.f32 %v724, %v795
        %v797 = vrot.slane %v796, 2
        %v798 = vadd.f32 %v796, %v797
        %v799 = vrot.slane %v798, 1
        %v800 = vadd.f32 %v798, %v799
        %v801 = vrot.slane %v725, 4
        %v802 = vadd.f32 %v725, %v801
        %v803 = vrot.slane %v802, 2
        %v804 = vadd.f32 %v802, %v803
        %v805 = vrot.slane %v804, 1
        %v806 = vadd.f32 %v804, %v805
        %v807 = vrot.slane %v726, 4
        %v808 = vadd.f32 %v726, %v807
        %v809 = vrot.slane %v808, 2
        %v810 = vadd.f32 %v808, %v809
        %v811 = vrot.slane %v810, 1
        %v812 = vadd.f32 %v810, %v811
        %v813 = vrot.slane %v727, 4
        %v814 = vadd.f32 %v727, %v813
        %v815 = vrot.slane %v814, 2
        %v816 = vadd.f32 %v814, %v815
        %v817 = vrot.slane %v816, 1
        %v818 = vadd.f32 %v816, %v817
        %v819 = vrot.slane %v728, 4
        %v820 = vadd.f32 %v728, %v819
        %v821 = vrot.slane %v820, 2
        %v822 = vadd.f32 %v820, %v821
        %v823 = vrot.slane %v822, 1
        %v824 = vadd.f32 %v822, %v823
        %v825 = vpack.c.bf16 %v740, %v734
        %v826 = vpack.c.bf16 %v752, %v746
        %v827 = vpack.c.bf16 %v764, %v758
        %v828 = vpack.c.bf16 %v776, %v770
        %v829 = vpack.c.bf16 %v788, %v782
        %v830 = vpack.c.bf16 %v800, %v794
        %v831 = vpack.c.bf16 %v812, %v806
        %v832 = vpack.c.bf16 %v824, %v818
        %v841 = vunpack.c.l.b16 %v825
        %v842 = vunpack.c.h.b16 %v825
        %v843 = vunpack.c.l.b16 %v826
        %v844 = vunpack.c.h.b16 %v826
        %v845 = vunpack.c.l.b16 %v827
        %v846 = vunpack.c.h.b16 %v827
        %v847 = vunpack.c.l.b16 %v828
        %v848 = vunpack.c.h.b16 %v828
        %v849 = vunpack.c.l.b16 %v829
        %v850 = vunpack.c.h.b16 %v829
        %v851 = vunpack.c.l.b16 %v830
        %v852 = vunpack.c.h.b16 %v830
        %v853 = vunpack.c.l.b16 %v831
        %v854 = vunpack.c.h.b16 %v831
        %v855 = vunpack.c.l.b16 %v832
        %v856 = vunpack.c.h.b16 %v832
        %v857 = vsel %vm512, %v843, %v841
        %v858 = vsel %vm514, %v845, %v857
        %v859 = vsel %vm516, %v847, %v858
        %v860 = vsel %vm518, %v849, %v859
        %v861 = vsel %vm520, %v851, %v860
        %v862 = vsel %vm522, %v853, %v861
        %v863 = vsel %vm524, %v855, %v862
        %v864 = vsel %vm512, %v844, %v842
        %v865 = vsel %vm514, %v846, %v864
        %v866 = vsel %vm516, %v848, %v865
        %v867 = vsel %vm518, %v850, %v866
        %v868 = vsel %vm520, %v852, %v867
        %v869 = vsel %vm522, %v854, %v868
        %v870 = vsel %vm524, %v856, %v869
        %v871 = vpack.c.b16 %v870, %v863
        %873 = vst [vmem:[#allocation2 + $0x10] sm:$0xff] %v871
        %v874 = vld [vmem:[%s307 + $0x18] sm:$0xff]
        %v875 = vld [vmem:[%s307 + $0x48] sm:$0xff]
        %v876 = vld [vmem:[%s307 + $0x78] sm:$0xff]
        %v877 = vld [vmem:[%s307 + $0xa8] sm:$0xff]
        %v878 = vld [vmem:[%s307 + $0xd8] sm:$0xff]
        %v879 = vld [vmem:[%s307 + $0x108] sm:$0xff]
        %v880 = vld [vmem:[%s307 + $0x138] sm:$0xff]
        %v881 = vld [vmem:[%s307 + $0x168] sm:$0xff]
        %v882 = vunpack.c.l.bf16 %v874
        %v883 = vunpack.c.h.bf16 %v874
        %v884 = vunpack.c.l.bf16 %v875
        %v885 = vunpack.c.h.bf16 %v875
        %v886 = vunpack.c.l.bf16 %v876
        %v887 = vunpack.c.h.bf16 %v876
        %v888 = vunpack.c.l.bf16 %v877
        %v889 = vunpack.c.h.bf16 %v877
        %v890 = vunpack.c.l.bf16 %v878
        %v891 = vunpack.c.h.bf16 %v878
        %v892 = vunpack.c.l.bf16 %v879
        %v893 = vunpack.c.h.bf16 %v879
        %v894 = vunpack.c.l.bf16 %v880
        %v895 = vunpack.c.h.bf16 %v880
        %v896 = vunpack.c.l.bf16 %v881
        %v897 = vunpack.c.h.bf16 %v881
        %v898 = vrot.slane %v882, 4
        %v899 = vadd.f32 %v882, %v898
        %v900 = vrot.slane %v899, 2
        %v901 = vadd.f32 %v899, %v900
        %v902 = vrot.slane %v901, 1
        %v903 = vadd.f32 %v901, %v902
        %v904 = vrot.slane %v883, 4
        %v905 = vadd.f32 %v883, %v904
        %v906 = vrot.slane %v905, 2
        %v907 = vadd.f32 %v905, %v906
        %v908 = vrot.slane %v907, 1
        %v909 = vadd.f32 %v907, %v908
        %v910 = vrot.slane %v884, 4
        %v911 = vadd.f32 %v884, %v910
        %v912 = vrot.slane %v911, 2
        %v913 = vadd.f32 %v911, %v912
        %v914 = vrot.slane %v913, 1
        %v915 = vadd.f32 %v913, %v914
        %v916 = vrot.slane %v885, 4
        %v917 = vadd.f32 %v885, %v916
        %v918 = vrot.slane %v917, 2
        %v919 = vadd.f32 %v917, %v918
        %v920 = vrot.slane %v919, 1
        %v921 = vadd.f32 %v919, %v920
        %v922 = vrot.slane %v886, 4
        %v923 = vadd.f32 %v886, %v922
        %v924 = vrot.slane %v923, 2
        %v925 = vadd.f32 %v923, %v924
        %v926 = vrot.slane %v925, 1
        %v927 = vadd.f32 %v925, %v926
        %v928 = vrot.slane %v887, 4
        %v929 = vadd.f32 %v887, %v928
        %v930 = vrot.slane %v929, 2
        %v931 = vadd.f32 %v929, %v930
        %v932 = vrot.slane %v931, 1
        %v933 = vadd.f32 %v931, %v932
        %v934 = vrot.slane %v888, 4
        %v935 = vadd.f32 %v888, %v934
        %v936 = vrot.slane %v935, 2
        %v937 = vadd.f32 %v935, %v936
        %v938 = vrot.slane %v937, 1
        %v939 = vadd.f32 %v937, %v938
        %v940 = vrot.slane %v889, 4
        %v941 = vadd.f32 %v889, %v940
        %v942 = vrot.slane %v941, 2
        %v943 = vadd.f32 %v941, %v942
        %v944 = vrot.slane %v943, 1
        %v945 = vadd.f32 %v943, %v944
        %v946 = vrot.slane %v890, 4
        %v947 = vadd.f32 %v890, %v946
        %v948 = vrot.slane %v947, 2
        %v949 = vadd.f32 %v947, %v948
        %v950 = vrot.slane %v949, 1
        %v951 = vadd.f32 %v949, %v950
        %v952 = vrot.slane %v891, 4
        %v953 = vadd.f32 %v891, %v952
        %v954 = vrot.slane %v953, 2
        %v955 = vadd.f32 %v953, %v954
        %v956 = vrot.slane %v955, 1
        %v957 = vadd.f32 %v955, %v956
        %v958 = vrot.slane %v892, 4
        %v959 = vadd.f32 %v892, %v958
        %v960 = vrot.slane %v959, 2
        %v961 = vadd.f32 %v959, %v960
        %v962 = vrot.slane %v961, 1
        %v963 = vadd.f32 %v961, %v962
        %v964 = vrot.slane %v893, 4
        %v965 = vadd.f32 %v893, %v964
        %v966 = vrot.slane %v965, 2
        %v967 = vadd.f32 %v965, %v966
        %v968 = vrot.slane %v967, 1
        %v969 = vadd.f32 %v967, %v968
        %v970 = vrot.slane %v894, 4
        %v971 = vadd.f32 %v894, %v970
        %v972 = vrot.slane %v971, 2
        %v973 = vadd.f32 %v971, %v972
        %v974 = vrot.slane %v973, 1
        %v975 = vadd.f32 %v973, %v974
        %v976 = vrot.slane %v895, 4
        %v977 = vadd.f32 %v895, %v976
        %v978 = vrot.slane %v977, 2
        %v979 = vadd.f32 %v977, %v978
        %v980 = vrot.slane %v979, 1
        %v981 = vadd.f32 %v979, %v980
        %v982 = vrot.slane %v896, 4
        %v983 = vadd.f32 %v896, %v982
        %v984 = vrot.slane %v983, 2
        %v985 = vadd.f32 %v983, %v984
        %v986 = vrot.slane %v985, 1
        %v987 = vadd.f32 %v985, %v986
        %v988 = vrot.slane %v897, 4
        %v989 = vadd.f32 %v897, %v988
        %v990 = vrot.slane %v989, 2
        %v991 = vadd.f32 %v989, %v990
        %v992 = vrot.slane %v991, 1
        %v993 = vadd.f32 %v991, %v992
        %v994 = vpack.c.bf16 %v909, %v903
        %v995 = vpack.c.bf16 %v921, %v915
        %v996 = vpack.c.bf16 %v933, %v927
        %v997 = vpack.c.bf16 %v945, %v939
        %v998 = vpack.c.bf16 %v957, %v951
        %v999 = vpack.c.bf16 %v969, %v963
        %v1000 = vpack.c.bf16 %v981, %v975
        %v1001 = vpack.c.bf16 %v993, %v987
        %v1010 = vunpack.c.l.b16 %v994
        %v1011 = vunpack.c.h.b16 %v994
        %v1012 = vunpack.c.l.b16 %v995
        %v1013 = vunpack.c.h.b16 %v995
        %v1014 = vunpack.c.l.b16 %v996
        %v1015 = vunpack.c.h.b16 %v996
        %v1016 = vunpack.c.l.b16 %v997
        %v1017 = vunpack.c.h.b16 %v997
        %v1018 = vunpack.c.l.b16 %v998
        %v1019 = vunpack.c.h.b16 %v998
        %v1020 = vunpack.c.l.b16 %v999
        %v1021 = vunpack.c.h.b16 %v999
        %v1022 = vunpack.c.l.b16 %v1000
        %v1023 = vunpack.c.h.b16 %v1000
        %v1024 = vunpack.c.l.b16 %v1001
        %v1025 = vunpack.c.h.b16 %v1001
        %v1026 = vsel %vm512, %v1012, %v1010
        %v1027 = vsel %vm514, %v1014, %v1026
        %v1028 = vsel %vm516, %v1016, %v1027
        %v1029 = vsel %vm518, %v1018, %v1028
        %v1030 = vsel %vm520, %v1020, %v1029
        %v1031 = vsel %vm522, %v1022, %v1030
        %v1032 = vsel %vm524, %v1024, %v1031
        %v1033 = vsel %vm512, %v1013, %v1011
        %v1034 = vsel %vm514, %v1015, %v1033
        %v1035 = vsel %vm516, %v1017, %v1034
        %v1036 = vsel %vm518, %v1019, %v1035
        %v1037 = vsel %vm520, %v1021, %v1036
        %v1038 = vsel %vm522, %v1023, %v1037
        %v1039 = vsel %vm524, %v1025, %v1038
        %v1040 = vpack.c.b16 %v1039, %v1032
        %1042 = vst [vmem:[#allocation2 + $0x18] sm:$0xff] %v1040
        %v1043 = vld [vmem:[%s307 + $0x20] sm:$0xff]
        %v1044 = vld [vmem:[%s307 + $0x50] sm:$0xff]
        %v1045 = vld [vmem:[%s307 + $0x80] sm:$0xff]
        %v1046 = vld [vmem:[%s307 + $0xb0] sm:$0xff]
        %v1047 = vld [vmem:[%s307 + $0xe0] sm:$0xff]
        %v1048 = vld [vmem:[%s307 + $0x110] sm:$0xff]
        %v1049 = vld [vmem:[%s307 + $0x140] sm:$0xff]
        %v1050 = vld [vmem:[%s307 + $0x170] sm:$0xff]
        %v1051 = vunpack.c.l.bf16 %v1043
        %v1052 = vunpack.c.h.bf16 %v1043
        %v1053 = vunpack.c.l.bf16 %v1044
        %v1054 = vunpack.c.h.bf16 %v1044
        %v1055 = vunpack.c.l.bf16 %v1045
        %v1056 = vunpack.c.h.bf16 %v1045
        %v1057 = vunpack.c.l.bf16 %v1046
        %v1058 = vunpack.c.h.bf16 %v1046
        %v1059 = vunpack.c.l.bf16 %v1047
        %v1060 = vunpack.c.h.bf16 %v1047
        %v1061 = vunpack.c.l.bf16 %v1048
        %v1062 = vunpack.c.h.bf16 %v1048
        %v1063 = vunpack.c.l.bf16 %v1049
        %v1064 = vunpack.c.h.bf16 %v1049
        %v1065 = vunpack.c.l.bf16 %v1050
        %v1066 = vunpack.c.h.bf16 %v1050
        %v1067 = vrot.slane %v1051, 4
        %v1068 = vadd.f32 %v1051, %v1067
        %v1069 = vrot.slane %v1068, 2
        %v1070 = vadd.f32 %v1068, %v1069
        %v1071 = vrot.slane %v1070, 1
        %v1072 = vadd.f32 %v1070, %v1071
        %v1073 = vrot.slane %v1052, 4
        %v1074 = vadd.f32 %v1052, %v1073
        %v1075 = vrot.slane %v1074, 2
        %v1076 = vadd.f32 %v1074, %v1075
        %v1077 = vrot.slane %v1076, 1
        %v1078 = vadd.f32 %v1076, %v1077
        %v1079 = vrot.slane %v1053, 4
        %v1080 = vadd.f32 %v1053, %v1079
        %v1081 = vrot.slane %v1080, 2
        %v1082 = vadd.f32 %v1080, %v1081
        %v1083 = vrot.slane %v1082, 1
        %v1084 = vadd.f32 %v1082, %v1083
        %v1085 = vrot.slane %v1054, 4
        %v1086 = vadd.f32 %v1054, %v1085
        %v1087 = vrot.slane %v1086, 2
        %v1088 = vadd.f32 %v1086, %v1087
        %v1089 = vrot.slane %v1088, 1
        %v1090 = vadd.f32 %v1088, %v1089
        %v1091 = vrot.slane %v1055, 4
        %v1092 = vadd.f32 %v1055, %v1091
        %v1093 = vrot.slane %v1092, 2
        %v1094 = vadd.f32 %v1092, %v1093
        %v1095 = vrot.slane %v1094, 1
        %v1096 = vadd.f32 %v1094, %v1095
        %v1097 = vrot.slane %v1056, 4
        %v1098 = vadd.f32 %v1056, %v1097
        %v1099 = vrot.slane %v1098, 2
        %v1100 = vadd.f32 %v1098, %v1099
        %v1101 = vrot.slane %v1100, 1
        %v1102 = vadd.f32 %v1100, %v1101
        %v1103 = vrot.slane %v1057, 4
        %v1104 = vadd.f32 %v1057, %v1103
        %v1105 = vrot.slane %v1104, 2
        %v1106 = vadd.f32 %v1104, %v1105
        %v1107 = vrot.slane %v1106, 1
        %v1108 = vadd.f32 %v1106, %v1107
        %v1109 = vrot.slane %v1058, 4
        %v1110 = vadd.f32 %v1058, %v1109
        %v1111 = vrot.slane %v1110, 2
        %v1112 = vadd.f32 %v1110, %v1111
        %v1113 = vrot.slane %v1112, 1
        %v1114 = vadd.f32 %v1112, %v1113
        %v1115 = vrot.slane %v1059, 4
        %v1116 = vadd.f32 %v1059, %v1115
        %v1117 = vrot.slane %v1116, 2
        %v1118 = vadd.f32 %v1116, %v1117
        %v1119 = vrot.slane %v1118, 1
        %v1120 = vadd.f32 %v1118, %v1119
        %v1121 = vrot.slane %v1060, 4
        %v1122 = vadd.f32 %v1060, %v1121
        %v1123 = vrot.slane %v1122, 2
        %v1124 = vadd.f32 %v1122, %v1123
        %v1125 = vrot.slane %v1124, 1
        %v1126 = vadd.f32 %v1124, %v1125
        %v1127 = vrot.slane %v1061, 4
        %v1128 = vadd.f32 %v1061, %v1127
        %v1129 = vrot.slane %v1128, 2
        %v1130 = vadd.f32 %v1128, %v1129
        %v1131 = vrot.slane %v1130, 1
        %v1132 = vadd.f32 %v1130, %v1131
        %v1133 = vrot.slane %v1062, 4
        %v1134 = vadd.f32 %v1062, %v1133
        %v1135 = vrot.slane %v1134, 2
        %v1136 = vadd.f32 %v1134, %v1135
        %v1137 = vrot.slane %v1136, 1
        %v1138 = vadd.f32 %v1136, %v1137
        %v1139 = vrot.slane %v1063, 4
        %v1140 = vadd.f32 %v1063, %v1139
        %v1141 = vrot.slane %v1140, 2
        %v1142 = vadd.f32 %v1140, %v1141
        %v1143 = vrot.slane %v1142, 1
        %v1144 = vadd.f32 %v1142, %v1143
        %v1145 = vrot.slane %v1064, 4
        %v1146 = vadd.f32 %v1064, %v1145
        %v1147 = vrot.slane %v1146, 2
        %v1148 = vadd.f32 %v1146, %v1147
        %v1149 = vrot.slane %v1148, 1
        %v1150 = vadd.f32 %v1148, %v1149
        %v1151 = vrot.slane %v1065, 4
        %v1152 = vadd.f32 %v1065, %v1151
        %v1153 = vrot.slane %v1152, 2
        %v1154 = vadd.f32 %v1152, %v1153
        %v1155 = vrot.slane %v1154, 1
        %v1156 = vadd.f32 %v1154, %v1155
        %v1157 = vrot.slane %v1066, 4
        %v1158 = vadd.f32 %v1066, %v1157
        %v1159 = vrot.slane %v1158, 2
        %v1160 = vadd.f32 %v1158, %v1159
        %v1161 = vrot.slane %v1160, 1
        %v1162 = vadd.f32 %v1160, %v1161
        %v1163 = vpack.c.bf16 %v1078, %v1072
        %v1164 = vpack.c.bf16 %v1090, %v1084
        %v1165 = vpack.c.bf16 %v1102, %v1096
        %v1166 = vpack.c.bf16 %v1114, %v1108
        %v1167 = vpack.c.bf16 %v1126, %v1120
        %v1168 = vpack.c.bf16 %v1138, %v1132
        %v1169 = vpack.c.bf16 %v1150, %v1144
        %v1170 = vpack.c.bf16 %v1162, %v1156
        %v1179 = vunpack.c.l.b16 %v1163
        %v1180 = vunpack.c.h.b16 %v1163
        %v1181 = vunpack.c.l.b16 %v1164
        %v1182 = vunpack.c.h.b16 %v1164
        %v1183 = vunpack.c.l.b16 %v1165
        %v1184 = vunpack.c.h.b16 %v1165
        %v1185 = vunpack.c.l.b16 %v1166
        %v1186 = vunpack.c.h.b16 %v1166
        %v1187 = vunpack.c.l.b16 %v1167
        %v1188 = vunpack.c.h.b16 %v1167
        %v1189 = vunpack.c.l.b16 %v1168
        %v1190 = vunpack.c.h.b16 %v1168
        %v1191 = vunpack.c.l.b16 %v1169
        %v1192 = vunpack.c.h.b16 %v1169
        %v1193 = vunpack.c.l.b16 %v1170
        %v1194 = vunpack.c.h.b16 %v1170
        %v1195 = vsel %vm512, %v1181, %v1179
        %v1196 = vsel %vm514, %v1183, %v1195
        %v1197 = vsel %vm516, %v1185, %v1196
        %v1198 = vsel %vm518, %v1187, %v1197
        %v1199 = vsel %vm520, %v1189, %v1198
        %v1200 = vsel %vm522, %v1191, %v1199
        %v1201 = vsel %vm524, %v1193, %v1200
        %v1202 = vsel %vm512, %v1182, %v1180
        %v1203 = vsel %vm514, %v1184, %v1202
        %v1204 = vsel %vm516, %v1186, %v1203
        %v1205 = vsel %vm518, %v1188, %v1204
        %v1206 = vsel %vm520, %v1190, %v1205
        %v1207 = vsel %vm522, %v1192, %v1206
        %v1208 = vsel %vm524, %v1194, %v1207
        %v1209 = vpack.c.b16 %v1208, %v1201
        %1211 = vst [vmem:[#allocation2 + $0x20] sm:$0xff] %v1209
        %v1212 = vld [vmem:[%s307 + $0x28] sm:$0xff]
        %v1213 = vld [vmem:[%s307 + $0x58] sm:$0xff]
        %v1214 = vld [vmem:[%s307 + $0x88] sm:$0xff]
        %v1215 = vld [vmem:[%s307 + $0xb8] sm:$0xff]
        %v1216 = vld [vmem:[%s307 + $0xe8] sm:$0xff]
        %v1217 = vld [vmem:[%s307 + $0x118] sm:$0xff]
        %v1218 = vld [vmem:[%s307 + $0x148] sm:$0xff]
        %v1219 = vld [vmem:[%s307 + $0x178] sm:$0xff]
        %v1220 = vunpack.c.l.bf16 %v1212
        %v1221 = vunpack.c.h.bf16 %v1212
        %v1222 = vunpack.c.l.bf16 %v1213
        %v1223 = vunpack.c.h.bf16 %v1213
        %v1224 = vunpack.c.l.bf16 %v1214
        %v1225 = vunpack.c.h.bf16 %v1214
        %v1226 = vunpack.c.l.bf16 %v1215
        %v1227 = vunpack.c.h.bf16 %v1215
        %v1228 = vunpack.c.l.bf16 %v1216
        %v1229 = vunpack.c.h.bf16 %v1216
        %v1230 = vunpack.c.l.bf16 %v1217
        %v1231 = vunpack.c.h.bf16 %v1217
        %v1232 = vunpack.c.l.bf16 %v1218
        %v1233 = vunpack.c.h.bf16 %v1218
        %v1234 = vunpack.c.l.bf16 %v1219
        %v1235 = vunpack.c.h.bf16 %v1219
        %v1236 = vrot.slane %v1220, 4
        %v1237 = vadd.f32 %v1220, %v1236
        %v1238 = vrot.slane %v1237, 2
        %v1239 = vadd.f32 %v1237, %v1238
        %v1240 = vrot.slane %v1239, 1
        %v1241 = vadd.f32 %v1239, %v1240
        %v1242 = vrot.slane %v1221, 4
        %v1243 = vadd.f32 %v1221, %v1242
        %v1244 = vrot.slane %v1243, 2
        %v1245 = vadd.f32 %v1243, %v1244
        %v1246 = vrot.slane %v1245, 1
        %v1247 = vadd.f32 %v1245, %v1246
        %v1248 = vrot.slane %v1222, 4
        %v1249 = vadd.f32 %v1222, %v1248
        %v1250 = vrot.slane %v1249, 2
        %v1251 = vadd.f32 %v1249, %v1250
        %v1252 = vrot.slane %v1251, 1
        %v1253 = vadd.f32 %v1251, %v1252
        %v1254 = vrot.slane %v1223, 4
        %v1255 = vadd.f32 %v1223, %v1254
        %v1256 = vrot.slane %v1255, 2
        %v1257 = vadd.f32 %v1255, %v1256
        %v1258 = vrot.slane %v1257, 1
        %v1259 = vadd.f32 %v1257, %v1258
        %v1260 = vrot.slane %v1224, 4
        %v1261 = vadd.f32 %v1224, %v1260
        %v1262 = vrot.slane %v1261, 2
        %v1263 = vadd.f32 %v1261, %v1262
        %v1264 = vrot.slane %v1263, 1
        %v1265 = vadd.f32 %v1263, %v1264
        %v1266 = vrot.slane %v1225, 4
        %v1267 = vadd.f32 %v1225, %v1266
        %v1268 = vrot.slane %v1267, 2
        %v1269 = vadd.f32 %v1267, %v1268
        %v1270 = vrot.slane %v1269, 1
        %v1271 = vadd.f32 %v1269, %v1270
        %v1272 = vrot.slane %v1226, 4
        %v1273 = vadd.f32 %v1226, %v1272
        %v1274 = vrot.slane %v1273, 2
        %v1275 = vadd.f32 %v1273, %v1274
        %v1276 = vrot.slane %v1275, 1
        %v1277 = vadd.f32 %v1275, %v1276
        %v1278 = vrot.slane %v1227, 4
        %v1279 = vadd.f32 %v1227, %v1278
        %v1280 = vrot.slane %v1279, 2
        %v1281 = vadd.f32 %v1279, %v1280
        %v1282 = vrot.slane %v1281, 1
        %v1283 = vadd.f32 %v1281, %v1282
        %v1284 = vrot.slane %v1228, 4
        %v1285 = vadd.f32 %v1228, %v1284
        %v1286 = vrot.slane %v1285, 2
        %v1287 = vadd.f32 %v1285, %v1286
        %v1288 = vrot.slane %v1287, 1
        %v1289 = vadd.f32 %v1287, %v1288
        %v1290 = vrot.slane %v1229, 4
        %v1291 = vadd.f32 %v1229, %v1290
        %v1292 = vrot.slane %v1291, 2
        %v1293 = vadd.f32 %v1291, %v1292
        %v1294 = vrot.slane %v1293, 1
        %v1295 = vadd.f32 %v1293, %v1294
        %v1296 = vrot.slane %v1230, 4
        %v1297 = vadd.f32 %v1230, %v1296
        %v1298 = vrot.slane %v1297, 2
        %v1299 = vadd.f32 %v1297, %v1298
        %v1300 = vrot.slane %v1299, 1
        %v1301 = vadd.f32 %v1299, %v1300
        %v1302 = vrot.slane %v1231, 4
        %v1303 = vadd.f32 %v1231, %v1302
        %v1304 = vrot.slane %v1303, 2
        %v1305 = vadd.f32 %v1303, %v1304
        %v1306 = vrot.slane %v1305, 1
        %v1307 = vadd.f32 %v1305, %v1306
        %v1308 = vrot.slane %v1232, 4
        %v1309 = vadd.f32 %v1232, %v1308
        %v1310 = vrot.slane %v1309, 2
        %v1311 = vadd.f32 %v1309, %v1310
        %v1312 = vrot.slane %v1311, 1
        %v1313 = vadd.f32 %v1311, %v1312
        %v1314 = vrot.slane %v1233, 4
        %v1315 = vadd.f32 %v1233, %v1314
        %v1316 = vrot.slane %v1315, 2
        %v1317 = vadd.f32 %v1315, %v1316
        %v1318 = vrot.slane %v1317, 1
        %v1319 = vadd.f32 %v1317, %v1318
        %v1320 = vrot.slane %v1234, 4
        %v1321 = vadd.f32 %v1234, %v1320
        %v1322 = vrot.slane %v1321, 2
        %v1323 = vadd.f32 %v1321, %v1322
        %v1324 = vrot.slane %v1323, 1
        %v1325 = vadd.f32 %v1323, %v1324
        %v1326 = vrot.slane %v1235, 4
        %v1327 = vadd.f32 %v1235, %v1326
        %v1328 = vrot.slane %v1327, 2
        %v1329 = vadd.f32 %v1327, %v1328
        %v1330 = vrot.slane %v1329, 1
        %v1331 = vadd.f32 %v1329, %v1330
        %v1332 = vpack.c.bf16 %v1247, %v1241
        %v1333 = vpack.c.bf16 %v1259, %v1253
        %v1334 = vpack.c.bf16 %v1271, %v1265
        %v1335 = vpack.c.bf16 %v1283, %v1277
        %v1336 = vpack.c.bf16 %v1295, %v1289
        %v1337 = vpack.c.bf16 %v1307, %v1301
        %v1338 = vpack.c.bf16 %v1319, %v1313
        %v1339 = vpack.c.bf16 %v1331, %v1325
        %v1348 = vunpack.c.l.b16 %v1332
        %v1349 = vunpack.c.h.b16 %v1332
        %v1350 = vunpack.c.l.b16 %v1333
        %v1351 = vunpack.c.h.b16 %v1333
        %v1352 = vunpack.c.l.b16 %v1334
        %v1353 = vunpack.c.h.b16 %v1334
        %v1354 = vunpack.c.l.b16 %v1335
        %v1355 = vunpack.c.h.b16 %v1335
        %v1356 = vunpack.c.l.b16 %v1336
        %v1357 = vunpack.c.h.b16 %v1336
        %v1358 = vunpack.c.l.b16 %v1337
        %v1359 = vunpack.c.h.b16 %v1337
        %v1360 = vunpack.c.l.b16 %v1338
        %v1361 = vunpack.c.h.b16 %v1338
        %v1362 = vunpack.c.l.b16 %v1339
        %v1363 = vunpack.c.h.b16 %v1339
        %v1364 = vsel %vm512, %v1350, %v1348
        %v1365 = vsel %vm514, %v1352, %v1364
        %v1366 = vsel %vm516, %v1354, %v1365
        %v1367 = vsel %vm518, %v1356, %v1366
        %v1368 = vsel %vm520, %v1358, %v1367
        %v1369 = vsel %vm522, %v1360, %v1368
        %v1370 = vsel %vm524, %v1362, %v1369
        %v1371 = vsel %vm512, %v1351, %v1349
        %v1372 = vsel %vm514, %v1353, %v1371
        %v1373 = vsel %vm516, %v1355, %v1372
        %v1374 = vsel %vm518, %v1357, %v1373
        %v1375 = vsel %vm520, %v1359, %v1374
        %v1376 = vsel %vm522, %v1361, %v1375
        %v1377 = vsel %vm524, %v1363, %v1376
        %v1378 = vpack.c.b16 %v1377, %v1370
        %1380 = vst [vmem:[#allocation2 + $0x28] sm:$0xff] %v1378
        %v1381 = vld [vmem:[#allocation2] sm:$0xff]
        %v1382 = vld [vmem:[#allocation2 + $0x8] sm:$0xff]
        %v1383 = vld [vmem:[#allocation2 + $0x10] sm:$0xff]
        %v1384 = vld [vmem:[#allocation2 + $0x18] sm:$0xff]
        %v1385 = vld [vmem:[#allocation2 + $0x20] sm:$0xff]
        %v1386 = vld [vmem:[#allocation2 + $0x28] sm:$0xff]
        %v1387 = vld [vmem:[#allocation6] sm:$0xf]
        %v1388 = vld [vmem:[#allocation6 + $0x4] sm:$0xf]
        %v1389 = vld [vmem:[#allocation6 + $0x8] sm:$0xf]
        %v1390 = vld [vmem:[#allocation6 + $0xc] sm:$0xf]
        %v1391 = vld [vmem:[#allocation6 + $0x10] sm:$0xf]
        %v1392 = vld [vmem:[#allocation6 + $0x14] sm:$0xf]
        %v1393 = vld [vmem:[#allocation6 + $0x18] sm:$0xf]
        %v1394 = vld [vmem:[#allocation6 + $0x1c] sm:$0xf]
        %v1395 = vld [vmem:[#allocation6 + $0x20] sm:$0xf]
        %v1396 = vld [vmem:[#allocation6 + $0x24] sm:$0xf]
        %v1397 = vld [vmem:[#allocation6 + $0x28] sm:$0xf]
        %v1398 = vld [vmem:[#allocation6 + $0x2c] sm:$0xf]
        %v1399 = vld [vmem:[#allocation6 + $0x30] sm:$0xf]
        %v1400 = vld [vmem:[#allocation6 + $0x34] sm:$0xf]
        %v1401 = vld [vmem:[#allocation6 + $0x38] sm:$0xf]
        %v1402 = vld [vmem:[#allocation6 + $0x3c] sm:$0xf]
        %v1403 = vld [vmem:[#allocation6 + $0x40] sm:$0xf]
        %v1404 = vld [vmem:[#allocation6 + $0x44] sm:$0xf]
        %v1405 = vld [vmem:[#allocation6 + $0x48] sm:$0xf]
        %v1406 = vld [vmem:[#allocation6 + $0x4c] sm:$0xf]
        %v1407 = vld [vmem:[#allocation6 + $0x50] sm:$0xf]
        %v1408 = vld [vmem:[#allocation6 + $0x54] sm:$0xf]
        %v1409 = vld [vmem:[#allocation6 + $0x58] sm:$0xf]
        %v1410 = vld [vmem:[#allocation6 + $0x5c] sm:$0xf]
        %v1411 = vld [vmem:[#allocation6 + $0x60] sm:$0xf]
        %v1412 = vld [vmem:[#allocation6 + $0x64] sm:$0xf]
        %v1413 = vld [vmem:[#allocation6 + $0x68] sm:$0xf]
        %v1414 = vld [vmem:[#allocation6 + $0x6c] sm:$0xf]
        %v1415 = vld [vmem:[#allocation6 + $0x70] sm:$0xf]
        %v1416 = vld [vmem:[#allocation6 + $0x74] sm:$0xf]
        %v1417 = vld [vmem:[#allocation6 + $0x78] sm:$0xf]
        %v1418 = vld [vmem:[#allocation6 + $0x7c] sm:$0xf]
        %v1425 = vunpack.c.l.b16 %v1381
        %v1426 = vunpack.c.h.b16 %v1381
        %v1427 = vunpack.c.l.b16 %v1382
        %v1428 = vunpack.c.h.b16 %v1382
        %v1429 = vunpack.c.l.b16 %v1383
        %v1430 = vunpack.c.h.b16 %v1383
        %v1431 = vunpack.c.l.b16 %v1384
        %v1432 = vunpack.c.h.b16 %v1384
        %v1433 = vunpack.c.l.b16 %v1385
        %v1434 = vunpack.c.h.b16 %v1385
        %v1435 = vunpack.c.l.b16 %v1386
        %v1436 = vunpack.c.h.b16 %v1386
        %v1437 = vpack.c.b16 %v1427, %v1425
        %v1438 = vpack.c.b16 %v1428, %v1426
        %v1439 = vpack.c.b16 %v1431, %v1429
        %v1440 = vpack.c.b16 %v1432, %v1430
        %v1441 = vpack.c.b16 %v1435, %v1433
        %v1442 = vpack.c.b16 %v1436, %v1434
        %v1481 = vunpack.c.l.b16 %v1387
        %v1482 = vunpack.c.l.b16 %v1388
        %v1483 = vunpack.c.l.b16 %v1389
        %v1484 = vunpack.c.l.b16 %v1390
        %v1485 = vunpack.c.l.b16 %v1391
        %v1486 = vunpack.c.l.b16 %v1392
        %v1487 = vunpack.c.l.b16 %v1393
        %v1488 = vunpack.c.l.b16 %v1394
        %v1489 = vunpack.c.l.b16 %v1395
        %v1490 = vunpack.c.l.b16 %v1396
        %v1491 = vunpack.c.l.b16 %v1397
        %v1492 = vunpack.c.l.b16 %v1398
        %v1493 = vunpack.c.l.b16 %v1399
        %v1494 = vunpack.c.l.b16 %v1400
        %v1495 = vunpack.c.l.b16 %v1401
        %v1496 = vunpack.c.l.b16 %v1402
        %v1497 = vunpack.c.l.b16 %v1403
        %v1498 = vunpack.c.l.b16 %v1404
        %v1499 = vunpack.c.l.b16 %v1405
        %v1500 = vunpack.c.l.b16 %v1406
        %v1501 = vunpack.c.l.b16 %v1407
        %v1502 = vunpack.c.l.b16 %v1408
        %v1503 = vunpack.c.l.b16 %v1409
        %v1504 = vunpack.c.l.b16 %v1410
        %v1505 = vunpack.c.l.b16 %v1411
        %v1506 = vunpack.c.l.b16 %v1412
        %v1507 = vunpack.c.l.b16 %v1413
        %v1508 = vunpack.c.l.b16 %v1414
        %v1509 = vunpack.c.l.b16 %v1415
        %v1510 = vunpack.c.l.b16 %v1416
        %v1511 = vunpack.c.l.b16 %v1417
        %v1512 = vunpack.c.l.b16 %v1418
        %v1513 = vpack.c.b16 %v1482, %v1481
        %v1514 = vpack.c.b16 %v1484, %v1483
        %v1515 = vpack.c.b16 %v1486, %v1485
        %v1516 = vpack.c.b16 %v1488, %v1487
        %v1517 = vpack.c.b16 %v1490, %v1489
        %v1518 = vpack.c.b16 %v1492, %v1491
        %v1519 = vpack.c.b16 %v1494, %v1493
        %v1520 = vpack.c.b16 %v1496, %v1495
        %v1521 = vpack.c.b16 %v1498, %v1497
        %v1522 = vpack.c.b16 %v1500, %v1499
        %v1523 = vpack.c.b16 %v1502, %v1501
        %v1524 = vpack.c.b16 %v1504, %v1503
        %v1525 = vpack.c.b16 %v1506, %v1505
        %v1526 = vpack.c.b16 %v1508, %v1507
        %v1527 = vpack.c.b16 %v1510, %v1509
        %v1528 = vpack.c.b16 %v1512, %v1511
        %1545 = vmatpush.bf16.msra.mxu0 %v1520
        %1546 = vmatpush.bf16.msra.mxu0 %v1519
        %1547 = vmatpush.bf16.msra.mxu0 %v1518
        %1548 = vmatpush.bf16.msra.mxu0 %v1517
        %1549 = vmatpush.bf16.msra.mxu0 %v1516
        %1550 = vmatpush.bf16.msra.mxu0 %v1515
        %1551 = vmatpush.bf16.msra.mxu0 %v1514
        %1552 = vmatpush.bf16.msra.mxu0 %v1513
        %1553 = vmatmul.bf16.gmra.mxu0 %v1437
        %v1554 = vpop.f32.mrf.mxu0
        %v1555 = vadd.f32 0.0, %v1554
        %v1556 = vpop.f32.mrf.mxu0
        %v1557 = vadd.f32 0.0, %v1556
        %1558 = vmatmul.bf16.gmra.mxu0 %v1439
        %v1559 = vpop.f32.mrf.mxu0
        %v1560 = vadd.f32 0.0, %v1559
        %v1561 = vpop.f32.mrf.mxu0
        %v1562 = vadd.f32 0.0, %v1561
        %1563 = vmatmul.bf16.gmra.mxu0 %v1441
        %v1564 = vpop.f32.mrf.mxu0
        %v1565 = vadd.f32 0.0, %v1564
        %v1566 = vpop.f32.mrf.mxu0
        %v1567 = vadd.f32 0.0, %v1566
        %1568 = vdwg.mxu0
        %1569 = vmatpush.bf16.msra.mxu0 %v1528
        %1570 = vmatpush.bf16.msra.mxu0 %v1527
        %1571 = vmatpush.bf16.msra.mxu0 %v1526
        %1572 = vmatpush.bf16.msra.mxu0 %v1525
        %1573 = vmatpush.bf16.msra.mxu0 %v1524
        %1574 = vmatpush.bf16.msra.mxu0 %v1523
        %1575 = vmatpush.bf16.msra.mxu0 %v1522
        %1576 = vmatpush.bf16.msra.mxu0 %v1521
        %1577 = vmatmul.bf16.gmra.mxu0 %v1438
        %v1578 = vpop.f32.mrf.mxu0
        %v1579 = vadd.f32 %v1555, %v1578
        %v1580 = vpop.f32.mrf.mxu0
        %v1581 = vadd.f32 %v1557, %v1580
        %1582 = vmatmul.bf16.gmra.mxu0 %v1440
        %v1583 = vpop.f32.mrf.mxu0
        %v1584 = vadd.f32 %v1560, %v1583
        %v1585 = vpop.f32.mrf.mxu0
        %v1586 = vadd.f32 %v1562, %v1585
        %1587 = vmatmul.bf16.gmra.mxu0 %v1442
        %v1588 = vpop.f32.mrf.mxu0
        %v1589 = vadd.f32 %v1565, %v1588
        %v1590 = vpop.f32.mrf.mxu0
        %v1591 = vadd.f32 %v1567, %v1590
        %1592 = vdwg.mxu0
        %v1593 = vmul.f32 %v1579, %v1579
        %v1594 = vmul.f32 %v1581, %v1581
        %v1595 = vmul.f32 %v1584, %v1584
        %v1596 = vmul.f32 %v1586, %v1586
        %v1597 = vmul.f32 %v1589, %v1589
        %v1598 = vmul.f32 %v1591, %v1591
        %1599 = vadd.xlane.f32.xlu0 %v1593
        %v1600 = vpop.xlane.xlu0 %1599
        %1601 = vadd.xlane.f32.xlu0 %v1594
        %v1602 = vpop.xlane.xlu0 %1601
        %1603 = vadd.xlane.f32.xlu0 %v1595
        %v1604 = vpop.xlane.xlu0 %1603
        %1605 = vadd.xlane.f32.xlu0 %v1596
        %v1606 = vpop.xlane.xlu0 %1605
        %1607 = vadd.xlane.f32.xlu0 %v1597
        %v1608 = vpop.xlane.xlu0 %1607
        %1609 = vadd.xlane.f32.xlu0 %v1598
        %v1610 = vpop.xlane.xlu0 %1609
        %v1611 = vrsqrt.pop %v1600
        %v1612 = vmul.f32 %v1611, %v1600
        %v1613 = vmul.f32 %v1612, %v1611
        %v1614 = vmul.f32 0.5, %v1613
        %v1615 = vsub.f32 1.5, %v1614
        %v1616 = vmul.f32 %v1611, %v1615
        %vm1617 = vweird.f32 %v1600
        %vm1618 = vweird.f32 %v1611
        %vm1619 = vmor %vm1617, %vm1618
        %v1620 = vsel %vm1619, %v1611, %v1616
        %v1621 = vrsqrt.pop %v1602
        %v1622 = vmul.f32 %v1621, %v1602
        %v1623 = vmul.f32 %v1622, %v1621
        %v1624 = vmul.f32 0.5, %v1623
        %v1625 = vsub.f32 1.5, %v1624
        %v1626 = vmul.f32 %v1621, %v1625
        %vm1627 = vweird.f32 %v1602
        %vm1628 = vweird.f32 %v1621
        %vm1629 = vmor %vm1627, %vm1628
        %v1630 = vsel %vm1629, %v1621, %v1626
        %v1631 = vrsqrt.pop %v1604
        %v1632 = vmul.f32 %v1631, %v1604
        %v1633 = vmul.f32 %v1632, %v1631
        %v1634 = vmul.f32 0.5, %v1633
        %v1635 = vsub.f32 1.5, %v1634
        %v1636 = vmul.f32 %v1631, %v1635
        %vm1637 = vweird.f32 %v1604
        %vm1638 = vweird.f32 %v1631
        %vm1639 = vmor %vm1637, %vm1638
        %v1640 = vsel %vm1639, %v1631, %v1636
        %v1641 = vrsqrt.pop %v1606
        %v1642 = vmul.f32 %v1641, %v1606
        %v1643 = vmul.f32 %v1642, %v1641
        %v1644 = vmul.f32 0.5, %v1643
        %v1645 = vsub.f32 1.5, %v1644
        %v1646 = vmul.f32 %v1641, %v1645
        %vm1647 = vweird.f32 %v1606
        %vm1648 = vweird.f32 %v1641
        %vm1649 = vmor %vm1647, %vm1648
        %v1650 = vsel %vm1649, %v1641, %v1646
        %v1651 = vrsqrt.pop %v1608
        %v1652 = vmul.f32 %v1651, %v1608
        %v1653 = vmul.f32 %v1652, %v1651
        %v1654 = vmul.f32 0.5, %v1653
        %v1655 = vsub.f32 1.5, %v1654
        %v1656 = vmul.f32 %v1651, %v1655
        %vm1657 = vweird.f32 %v1608
        %vm1658 = vweird.f32 %v1651
        %vm1659 = vmor %vm1657, %vm1658
        %v1660 = vsel %vm1659, %v1651, %v1656
        %v1661 = vrsqrt.pop %v1610
        %v1662 = vmul.f32 %v1661, %v1610
        %v1663 = vmul.f32 %v1662, %v1661
        %v1664 = vmul.f32 0.5, %v1663
        %v1665 = vsub.f32 1.5, %v1664
        %v1666 = vmul.f32 %v1661, %v1665
        %vm1667 = vweird.f32 %v1610
        %vm1668 = vweird.f32 %v1661
        %vm1669 = vmor %vm1667, %vm1668
        %v1670 = vsel %vm1669, %v1661, %v1666
        %v1671 = vmul.f32 %v1579, %v1620
        %v1672 = vmul.f32 %v1581, %v1630
        %v1673 = vmul.f32 %v1584, %v1640
        %v1674 = vmul.f32 %v1586, %v1650
        %v1675 = vmul.f32 %v1589, %v1660
        %v1676 = vmul.f32 %v1591, %v1670
        %v1677 = vld [vmem:[%s2] sm:$0x1]
        %v1679 = vperm.slane %v1677, 0
        %v1681 = vmul.f32 %v1579, %v1679
        %v1682 = vmul.f32 %v1581, %v1679
        %v1683 = vmul.f32 %v1584, %v1679
        %v1684 = vmul.f32 %v1586, %v1679
        %v1685 = vmul.f32 %v1589, %v1679
        %v1686 = vmul.f32 %v1591, %v1679
        %v1687 = vld [vmem:[%s3] sm:$0x1]
        %v1689 = vperm.slane %v1687, 0
        %v1691 = vadd.f32 %v1681, %v1689
        %v1692 = vadd.f32 %v1682, %v1689
        %v1693 = vadd.f32 %v1683, %v1689
        %v1694 = vadd.f32 %v1684, %v1689
        %v1695 = vadd.f32 %v1685, %v1689
        %v1696 = vadd.f32 %v1686, %v1689
        %v1697 = vmax.f32 %v1691, 0.0
        %v1698 = vmax.f32 %v1692, 0.0
        %v1699 = vmax.f32 %v1693, 0.0
        %v1700 = vmax.f32 %v1694, 0.0
        %v1701 = vmax.f32 %v1695, 0.0
        %v1702 = vmax.f32 %v1696, 0.0
        %v1703 = vpack.c.bf16 %v1697, %v1697
        %v1704 = vpack.c.bf16 %v1698, %v1698
        %v1705 = vpack.c.bf16 %v1699, %v1699
        %v1706 = vpack.c.bf16 %v1700, %v1700
        %v1707 = vpack.c.bf16 %v1701, %v1701
        %v1708 = vpack.c.bf16 %v1702, %v1702
        %1709 = vst [vmem:[%s351] sm:$0xff] %v1671
        %v1710 = vld [vmem:[#allocation8] sm:$0xf]
        %v1711 = vld [vmem:[#allocation8 + $0x4] sm:$0xf]
        %v1712 = vld [vmem:[#allocation8 + $0x8] sm:$0xf]
        %v1713 = vld [vmem:[#allocation8 + $0xc] sm:$0xf]
        %v1714 = vld [vmem:[#allocation8 + $0x10] sm:$0xf]
        %v1715 = vld [vmem:[#allocation8 + $0x14] sm:$0xf]
        %v1716 = vld [vmem:[#allocation8 + $0x18] sm:$0xf]
        %v1717 = vld [vmem:[#allocation8 + $0x1c] sm:$0xf]
        %v1718 = vld [vmem:[#allocation8 + $0x20] sm:$0xf]
        %v1719 = vld [vmem:[#allocation8 + $0x24] sm:$0xf]
        %v1720 = vld [vmem:[#allocation8 + $0x28] sm:$0xf]
        %v1721 = vld [vmem:[#allocation8 + $0x2c] sm:$0xf]
        %v1722 = vld [vmem:[#allocation8 + $0x30] sm:$0xf]
        %v1723 = vld [vmem:[#allocation8 + $0x34] sm:$0xf]
        %v1724 = vld [vmem:[#allocation8 + $0x38] sm:$0xf]
        %v1725 = vld [vmem:[#allocation8 + $0x3c] sm:$0xf]
        %v1726 = vld [vmem:[#allocation9] sm:$0x1]
        %v1727 = vperm.slane %v1726, 0
        %v1744 = vunpack.c.l.b16 %v1710
        %v1745 = vunpack.c.l.b16 %v1711
        %v1746 = vunpack.c.l.b16 %v1712
        %v1747 = vunpack.c.l.b16 %v1713
        %v1748 = vunpack.c.l.b16 %v1714
        %v1749 = vunpack.c.l.b16 %v1715
        %v1750 = vunpack.c.l.b16 %v1716
        %v1751 = vunpack.c.l.b16 %v1717
        %v1752 = vunpack.c.l.b16 %v1718
        %v1753 = vunpack.c.l.b16 %v1719
        %v1754 = vunpack.c.l.b16 %v1720
        %v1755 = vunpack.c.l.b16 %v1721
        %v1756 = vunpack.c.l.b16 %v1722
        %v1757 = vunpack.c.l.b16 %v1723
        %v1758 = vunpack.c.l.b16 %v1724
        %v1759 = vunpack.c.l.b16 %v1725
        %v1760 = vpack.c.b16 %v1745, %v1744
        %v1761 = vpack.c.b16 %v1747, %v1746
        %v1762 = vpack.c.b16 %v1749, %v1748
        %v1763 = vpack.c.b16 %v1751, %v1750
        %v1764 = vpack.c.b16 %v1753, %v1752
        %v1765 = vpack.c.b16 %v1755, %v1754
        %v1766 = vpack.c.b16 %v1757, %v1756
        %v1767 = vpack.c.b16 %v1759, %v1758
        %1776 = vmatpush.bf16.msra.mxu0 %v1767
        %1777 = vmatpush.bf16.msra.mxu0 %v1766
        %1778 = vmatpush.bf16.msra.mxu0 %v1765
        %1779 = vmatpush.bf16.msra.mxu0 %v1764
        %1780 = vmatpush.bf16.msra.mxu0 %v1763
        %1781 = vmatpush.bf16.msra.mxu0 %v1762
        %1782 = vmatpush.bf16.msra.mxu0 %v1761
        %1783 = vmatpush.bf16.msra.mxu0 %v1760
        %1784 = vmatmul.bf16.gmra.mxu0 %v1703
        %v1785 = vpop.f32.mrf.mxu0
        %v1786 = vadd.f32 %v1727, %v1785
        %v1787 = vpop.f32.mrf.mxu0
        %1788 = vdwg.mxu0
        %1789 = vst [vmem:[%s358] sm:$0xff] %v1786
        %1790 = vst [vmem:[%s351 + $0x8] sm:$0xff] %v1672
        %s1791 = scalar_lea.vmem [#allocation8], 64
        %v1792 = vld [vmem:[%s1791] sm:$0xf]
        %v1793 = vld [vmem:[%s1791 + $0x4] sm:$0xf]
        %v1794 = vld [vmem:[%s1791 + $0x8] sm:$0xf]
        %v1795 = vld [vmem:[%s1791 + $0xc] sm:$0xf]
        %v1796 = vld [vmem:[%s1791 + $0x10] sm:$0xf]
        %v1797 = vld [vmem:[%s1791 + $0x14] sm:$0xf]
        %v1798 = vld [vmem:[%s1791 + $0x18] sm:$0xf]
        %v1799 = vld [vmem:[%s1791 + $0x1c] sm:$0xf]
        %v1800 = vld [vmem:[%s1791 + $0x20] sm:$0xf]
        %v1801 = vld [vmem:[%s1791 + $0x24] sm:$0xf]
        %v1802 = vld [vmem:[%s1791 + $0x28] sm:$0xf]
        %v1803 = vld [vmem:[%s1791 + $0x2c] sm:$0xf]
        %v1804 = vld [vmem:[%s1791 + $0x30] sm:$0xf]
        %v1805 = vld [vmem:[%s1791 + $0x34] sm:$0xf]
        %v1806 = vld [vmem:[%s1791 + $0x38] sm:$0xf]
        %v1807 = vld [vmem:[%s1791 + $0x3c] sm:$0xf]
        %v1808 = vld [vmem:[#allocation9 + $0x1] sm:$0x1]
        %v1809 = vperm.slane %v1808, 0
        %v1826 = vunpack.c.l.b16 %v1792
        %v1827 = vunpack.c.l.b16 %v1793
        %v1828 = vunpack.c.l.b16 %v1794
        %v1829 = vunpack.c.l.b16 %v1795
        %v1830 = vunpack.c.l.b16 %v1796
        %v1831 = vunpack.c.l.b16 %v1797
        %v1832 = vunpack.c.l.b16 %v1798
        %v1833 = vunpack.c.l.b16 %v1799
        %v1834 = vunpack.c.l.b16 %v1800
        %v1835 = vunpack.c.l.b16 %v1801
        %v1836 = vunpack.c.l.b16 %v1802
        %v1837 = vunpack.c.l.b16 %v1803
        %v1838 = vunpack.c.l.b16 %v1804
        %v1839 = vunpack.c.l.b16 %v1805
        %v1840 = vunpack.c.l.b16 %v1806
        %v1841 = vunpack.c.l.b16 %v1807
        %v1842 = vpack.c.b16 %v1827, %v1826
        %v1843 = vpack.c.b16 %v1829, %v1828
        %v1844 = vpack.c.b16 %v1831, %v1830
        %v1845 = vpack.c.b16 %v1833, %v1832
        %v1846 = vpack.c.b16 %v1835, %v1834
        %v1847 = vpack.c.b16 %v1837, %v1836
        %v1848 = vpack.c.b16 %v1839, %v1838
        %v1849 = vpack.c.b16 %v1841, %v1840
        %1858 = vmatpush.bf16.msra.mxu0 %v1849
        %1859 = vmatpush.bf16.msra.mxu0 %v1848
        %1860 = vmatpush.bf16.msra.mxu0 %v1847
        %1861 = vmatpush.bf16.msra.mxu0 %v1846
        %1862 = vmatpush.bf16.msra.mxu0 %v1845
        %1863 = vmatpush.bf16.msra.mxu0 %v1844
        %1864 = vmatpush.bf16.msra.mxu0 %v1843
        %1865 = vmatpush.bf16.msra.mxu0 %v1842
        %1866 = vmatmul.bf16.gmra.mxu0 %v1704
        %v1867 = vpop.f32.mrf.mxu0
        %v1868 = vadd.f32 %v1809, %v1867
        %v1869 = vpop.f32.mrf.mxu0
        %1870 = vdwg.mxu0
        %1871 = vst [vmem:[%s358 + $0x8] sm:$0xff] %v1868
        %1872 = vst [vmem:[%s351 + $0x10] sm:$0xff] %v1673
        %s1873 = scalar_lea.vmem [#allocation8], 128
        %v1874 = vld [vmem:[%s1873] sm:$0xf]
        %v1875 = vld [vmem:[%s1873 + $0x4] sm:$0xf]
        %v1876 = vld [vmem:[%s1873 + $0x8] sm:$0xf]
        %v1877 = vld [vmem:[%s1873 + $0xc] sm:$0xf]
        %v1878 = vld [vmem:[%s1873 + $0x10] sm:$0xf]
        %v1879 = vld [vmem:[%s1873 + $0x14] sm:$0xf]
        %v1880 = vld [vmem:[%s1873 + $0x18] sm:$0xf]
        %v1881 = vld [vmem:[%s1873 + $0x1c] sm:$0xf]
        %v1882 = vld [vmem:[%s1873 + $0x20] sm:$0xf]
        %v1883 = vld [vmem:[%s1873 + $0x24] sm:$0xf]
        %v1884 = vld [vmem:[%s1873 + $0x28] sm:$0xf]
        %v1885 = vld [vmem:[%s1873 + $0x2c] sm:$0xf]
        %v1886 = vld [vmem:[%s1873 + $0x30] sm:$0xf]
        %v1887 = vld [vmem:[%s1873 + $0x34] sm:$0xf]
        %v1888 = vld [vmem:[%s1873 + $0x38] sm:$0xf]
        %v1889 = vld [vmem:[%s1873 + $0x3c] sm:$0xf]
        %v1890 = vld [vmem:[#allocation9 + $0x2] sm:$0x1]
        %v1891 = vperm.slane %v1890, 0
        %v1908 = vunpack.c.l.b16 %v1874
        %v1909 = vunpack.c.l.b16 %v1875
        %v1910 = vunpack.c.l.b16 %v1876
        %v1911 = vunpack.c.l.b16 %v1877
        %v1912 = vunpack.c.l.b16 %v1878
        %v1913 = vunpack.c.l.b16 %v1879
        %v1914 = vunpack.c.l.b16 %v1880
        %v1915 = vunpack.c.l.b16 %v1881
        %v1916 = vunpack.c.l.b16 %v1882
        %v1917 = vunpack.c.l.b16 %v1883
        %v1918 = vunpack.c.l.b16 %v1884
        %v1919 = vunpack.c.l.b16 %v1885
        %v1920 = vunpack.c.l.b16 %v1886
        %v1921 = vunpack.c.l.b16 %v1887
        %v1922 = vunpack.c.l.b16 %v1888
        %v1923 = vunpack.c.l.b16 %v1889
        %v1924 = vpack.c.b16 %v1909, %v1908
        %v1925 = vpack.c.b16 %v1911, %v1910
        %v1926 = vpack.c.b16 %v1913, %v1912
        %v1927 = vpack.c.b16 %v1915, %v1914
        %v1928 = vpack.c.b16 %v1917, %v1916
        %v1929 = vpack.c.b16 %v1919, %v1918
        %v1930 = vpack.c.b16 %v1921, %v1920
        %v1931 = vpack.c.b16 %v1923, %v1922
        %1940 = vmatpush.bf16.msra.mxu0 %v1931
        %1941 = vmatpush.bf16.msra.mxu0 %v1930
        %1942 = vmatpush.bf16.msra.mxu0 %v1929
        %1943 = vmatpush.bf16.msra.mxu0 %v1928
        %1944 = vmatpush.bf16.msra.mxu0 %v1927
        %1945 = vmatpush.bf16.msra.mxu0 %v1926
        %1946 = vmatpush.bf16.msra.mxu0 %v1925
        %1947 = vmatpush.bf16.msra.mxu0 %v1924
        %1948 = vmatmul.bf16.gmra.mxu0 %v1705
        %v1949 = vpop.f32.mrf.mxu0
        %v1950 = vadd.f32 %v1891, %v1949
        %v1951 = vpop.f32.mrf.mxu0
        %1952 = vdwg.mxu0
        %1953 = vst [vmem:[%s358 + $0x10] sm:$0xff] %v1950
        %1954 = vst [vmem:[%s351 + $0x18] sm:$0xff] %v1674
        %s1955 = scalar_lea.vmem [#allocation8], 192
        %v1956 = vld [vmem:[%s1955] sm:$0xf]
        %v1957 = vld [vmem:[%s1955 + $0x4] sm:$0xf]
        %v1958 = vld [vmem:[%s1955 + $0x8] sm:$0xf]
        %v1959 = vld [vmem:[%s1955 + $0xc] sm:$0xf]
        %v1960 = vld [vmem:[%s1955 + $0x10] sm:$0xf]
        %v1961 = vld [vmem:[%s1955 + $0x14] sm:$0xf]
        %v1962 = vld [vmem:[%s1955 + $0x18] sm:$0xf]
        %v1963 = vld [vmem:[%s1955 + $0x1c] sm:$0xf]
        %v1964 = vld [vmem:[%s1955 + $0x20] sm:$0xf]
        %v1965 = vld [vmem:[%s1955 + $0x24] sm:$0xf]
        %v1966 = vld [vmem:[%s1955 + $0x28] sm:$0xf]
        %v1967 = vld [vmem:[%s1955 + $0x2c] sm:$0xf]
        %v1968 = vld [vmem:[%s1955 + $0x30] sm:$0xf]
        %v1969 = vld [vmem:[%s1955 + $0x34] sm:$0xf]
        %v1970 = vld [vmem:[%s1955 + $0x38] sm:$0xf]
        %v1971 = vld [vmem:[%s1955 + $0x3c] sm:$0xf]
        %v1972 = vld [vmem:[#allocation9 + $0x3] sm:$0x1]
        %v1973 = vperm.slane %v1972, 0
        %v1990 = vunpack.c.l.b16 %v1956
        %v1991 = vunpack.c.l.b16 %v1957
        %v1992 = vunpack.c.l.b16 %v1958
        %v1993 = vunpack.c.l.b16 %v1959
        %v1994 = vunpack.c.l.b16 %v1960
        %v1995 = vunpack.c.l.b16 %v1961
        %v1996 = vunpack.c.l.b16 %v1962
        %v1997 = vunpack.c.l.b16 %v1963
        %v1998 = vunpack.c.l.b16 %v1964
        %v1999 = vunpack.c.l.b16 %v1965
        %v2000 = vunpack.c.l.b16 %v1966
        %v2001 = vunpack.c.l.b16 %v1967
        %v2002 = vunpack.c.l.b16 %v1968
        %v2003 = vunpack.c.l.b16 %v1969
        %v2004 = vunpack.c.l.b16 %v1970
        %v2005 = vunpack.c.l.b16 %v1971
        %v2006 = vpack.c.b16 %v1991, %v1990
        %v2007 = vpack.c.b16 %v1993, %v1992
        %v2008 = vpack.c.b16 %v1995, %v1994
        %v2009 = vpack.c.b16 %v1997, %v1996
        %v2010 = vpack.c.b16 %v1999, %v1998
        %v2011 = vpack.c.b16 %v2001, %v2000
        %v2012 = vpack.c.b16 %v2003, %v2002
        %v2013 = vpack.c.b16 %v2005, %v2004
        %2022 = vmatpush.bf16.msra.mxu0 %v2013
        %2023 = vmatpush.bf16.msra.mxu0 %v2012
        %2024 = vmatpush.bf16.msra.mxu0 %v2011
        %2025 = vmatpush.bf16.msra.mxu0 %v2010
        %2026 = vmatpush.bf16.msra.mxu0 %v2009
        %2027 = vmatpush.bf16.msra.mxu0 %v2008
        %2028 = vmatpush.bf16.msra.mxu0 %v2007
        %2029 = vmatpush.bf16.msra.mxu0 %v2006
        %2030 = vmatmul.bf16.gmra.mxu0 %v1706
        %v2031 = vpop.f32.mrf.mxu0
        %v2032 = vadd.f32 %v1973, %v2031
        %v2033 = vpop.f32.mrf.mxu0
        %2034 = vdwg.mxu0
        %2035 = vst [vmem:[%s358 + $0x18] sm:$0xff] %v2032
        %2036 = vst [vmem:[%s351 + $0x20] sm:$0xff] %v1675
        %s2037 = scalar_lea.vmem [#allocation8], 256
        %v2038 = vld [vmem:[%s2037] sm:$0xf]
        %v2039 = vld [vmem:[%s2037 + $0x4] sm:$0xf]
        %v2040 = vld [vmem:[%s2037 + $0x8] sm:$0xf]
        %v2041 = vld [vmem:[%s2037 + $0xc] sm:$0xf]
        %v2042 = vld [vmem:[%s2037 + $0x10] sm:$0xf]
        %v2043 = vld [vmem:[%s2037 + $0x14] sm:$0xf]
        %v2044 = vld [vmem:[%s2037 + $0x18] sm:$0xf]
        %v2045 = vld [vmem:[%s2037 + $0x1c] sm:$0xf]
        %v2046 = vld [vmem:[%s2037 + $0x20] sm:$0xf]
        %v2047 = vld [vmem:[%s2037 + $0x24] sm:$0xf]
        %v2048 = vld [vmem:[%s2037 + $0x28] sm:$0xf]
        %v2049 = vld [vmem:[%s2037 + $0x2c] sm:$0xf]
        %v2050 = vld [vmem:[%s2037 + $0x30] sm:$0xf]
        %v2051 = vld [vmem:[%s2037 + $0x34] sm:$0xf]
        %v2052 = vld [vmem:[%s2037 + $0x38] sm:$0xf]
        %v2053 = vld [vmem:[%s2037 + $0x3c] sm:$0xf]
        %v2054 = vld [vmem:[#allocation9 + $0x4] sm:$0x1]
        %v2055 = vperm.slane %v2054, 0
        %v2072 = vunpack.c.l.b16 %v2038
        %v2073 = vunpack.c.l.b16 %v2039
        %v2074 = vunpack.c.l.b16 %v2040
        %v2075 = vunpack.c.l.b16 %v2041
        %v2076 = vunpack.c.l.b16 %v2042
        %v2077 = vunpack.c.l.b16 %v2043
        %v2078 = vunpack.c.l.b16 %v2044
        %v2079 = vunpack.c.l.b16 %v2045
        %v2080 = vunpack.c.l.b16 %v2046
        %v2081 = vunpack.c.l.b16 %v2047
        %v2082 = vunpack.c.l.b16 %v2048
        %v2083 = vunpack.c.l.b16 %v2049
        %v2084 = vunpack.c.l.b16 %v2050
        %v2085 = vunpack.c.l.b16 %v2051
        %v2086 = vunpack.c.l.b16 %v2052
        %v2087 = vunpack.c.l.b16 %v2053
        %v2088 = vpack.c.b16 %v2073, %v2072
        %v2089 = vpack.c.b16 %v2075, %v2074
        %v2090 = vpack.c.b16 %v2077, %v2076
        %v2091 = vpack.c.b16 %v2079, %v2078
        %v2092 = vpack.c.b16 %v2081, %v2080
        %v2093 = vpack.c.b16 %v2083, %v2082
        %v2094 = vpack.c.b16 %v2085, %v2084
        %v2095 = vpack.c.b16 %v2087, %v2086
        %2104 = vmatpush.bf16.msra.mxu0 %v2095
        %2105 = vmatpush.bf16.msra.mxu0 %v2094
        %2106 = vmatpush.bf16.msra.mxu0 %v2093
        %2107 = vmatpush.bf16.msra.mxu0 %v2092
        %2108 = vmatpush.bf16.msra.mxu0 %v2091
        %2109 = vmatpush.bf16.msra.mxu0 %v2090
        %2110 = vmatpush.bf16.msra.mxu0 %v2089
        %2111 = vmatpush.bf16.msra.mxu0 %v2088
        %2112 = vmatmul.bf16.gmra.mxu0 %v1707
        %v2113 = vpop.f32.mrf.mxu0
        %v2114 = vadd.f32 %v2055, %v2113
        %v2115 = vpop.f32.mrf.mxu0
        %2116 = vdwg.mxu0
        %2117 = vst [vmem:[%s358 + $0x20] sm:$0xff] %v2114
        %2118 = vst [vmem:[%s351 + $0x28] sm:$0xff] %v1676
        %s2119 = scalar_lea.vmem [#allocation8], 320
        %v2120 = vld [vmem:[%s2119] sm:$0xf]
        %v2121 = vld [vmem:[%s2119 + $0x4] sm:$0xf]
        %v2122 = vld [vmem:[%s2119 + $0x8] sm:$0xf]
        %v2123 = vld [vmem:[%s2119 + $0xc] sm:$0xf]
        %v2124 = vld [vmem:[%s2119 + $0x10] sm:$0xf]
        %v2125 = vld [vmem:[%s2119 + $0x14] sm:$0xf]
        %v2126 = vld [vmem:[%s2119 + $0x18] sm:$0xf]
        %v2127 = vld [vmem:[%s2119 + $0x1c] sm:$0xf]
        %v2128 = vld [vmem:[%s2119 + $0x20] sm:$0xf]
        %v2129 = vld [vmem:[%s2119 + $0x24] sm:$0xf]
        %v2130 = vld [vmem:[%s2119 + $0x28] sm:$0xf]
        %v2131 = vld [vmem:[%s2119 + $0x2c] sm:$0xf]
        %v2132 = vld [vmem:[%s2119 + $0x30] sm:$0xf]
        %v2133 = vld [vmem:[%s2119 + $0x34] sm:$0xf]
        %v2134 = vld [vmem:[%s2119 + $0x38] sm:$0xf]
        %v2135 = vld [vmem:[%s2119 + $0x3c] sm:$0xf]
        %v2136 = vld [vmem:[#allocation9 + $0x5] sm:$0x1]
        %v2137 = vperm.slane %v2136, 0
        %v2154 = vunpack.c.l.b16 %v2120
        %v2155 = vunpack.c.l.b16 %v2121
        %v2156 = vunpack.c.l.b16 %v2122
        %v2157 = vunpack.c.l.b16 %v2123
        %v2158 = vunpack.c.l.b16 %v2124
        %v2159 = vunpack.c.l.b16 %v2125
        %v2160 = vunpack.c.l.b16 %v2126
        %v2161 = vunpack.c.l.b16 %v2127
        %v2162 = vunpack.c.l.b16 %v2128
        %v2163 = vunpack.c.l.b16 %v2129
        %v2164 = vunpack.c.l.b16 %v2130
        %v2165 = vunpack.c.l.b16 %v2131
        %v2166 = vunpack.c.l.b16 %v2132
        %v2167 = vunpack.c.l.b16 %v2133
        %v2168 = vunpack.c.l.b16 %v2134
        %v2169 = vunpack.c.l.b16 %v2135
        %v2170 = vpack.c.b16 %v2155, %v2154
        %v2171 = vpack.c.b16 %v2157, %v2156
        %v2172 = vpack.c.b16 %v2159, %v2158
        %v2173 = vpack.c.b16 %v2161, %v2160
        %v2174 = vpack.c.b16 %v2163, %v2162
        %v2175 = vpack.c.b16 %v2165, %v2164
        %v2176 = vpack.c.b16 %v2167, %v2166
        %v2177 = vpack.c.b16 %v2169, %v2168
        %2186 = vmatpush.bf16.msra.mxu0 %v2177
        %2187 = vmatpush.bf16.msra.mxu0 %v2176
        %2188 = vmatpush.bf16.msra.mxu0 %v2175
        %2189 = vmatpush.bf16.msra.mxu0 %v2174
        %2190 = vmatpush.bf16.msra.mxu0 %v2173
        %2191 = vmatpush.bf16.msra.mxu0 %v2172
        %2192 = vmatpush.bf16.msra.mxu0 %v2171
        %2193 = vmatpush.bf16.msra.mxu0 %v2170
        %2194 = vmatmul.bf16.gmra.mxu0 %v1708
        %v2195 = vpop.f32.mrf.mxu0
        %v2196 = vadd.f32 %v2137, %v2195
        %v2197 = vpop.f32.mrf.mxu0
        %2198 = vdwg.mxu0
        %2199 = vst [vmem:[%s358 + $0x28] sm:$0xff] %v2196
        %s2200 = sand.u32 %s169, 1
        %s2201 = scalar_lea.sflag [#allocation5], %s2200
        %s2202 = sand.u32 %s169, 1
        %s2203 = smul.addr %s2202, 48
        %s2204 = scalar_lea.vmem [#allocation11], %s2203
        %s2205 = sand.u32 %s195, 1
        %s2206 = scalar_lea.sflag [#allocation13], %s2205
        %s2207 = sand.u32 %s195, 1
        %s2208 = smul.addr %s2207, 48
        %s2209 = scalar_lea.vmem [#allocation12], %s2208
        // Predicated region
        $region61: #{tpu_custom_call.1} parent=43 // pred_check
          %p2210 = pneg %p179
        $region62: #{tpu_custom_call.1} parent=43 // pred_check_branch
          %2212 = sbr.rel (%p2210) target = $region64
        $region63: #{tpu_custom_call.1} parent=43 // pred_region
          %2214 = vsyncadd %s2201, 0
          %s2215 = smul.addr %s30, 6
          %s2216 = smul.addr %s2215, 8
          %s2217 = scalar_lea.hbm %s6, %s2216
          %s2219 = sshll.u32 %s2204, 4
          %s2220 = int_to_ptr.vmem [resolvable:$true] %s2219
          %s2221 = sshll.u32 %s2217, 4
          %s2222 = int_to_ptr.hbm [resolvable:$true] %s2221
          %2224 = dma.vmem_to_hbm [thread:$0]  %s2220, 768, %s2222, %s2201
        $region64: #{tpu_custom_call.1} parent=43 // pred_fallthru
          _
        // Predicated region
        $region65: #{tpu_custom_call.1} parent=43 // pred_check
          %p2225 = pneg %p205
        $region66: #{tpu_custom_call.1} parent=43 // pred_check_branch
          %2227 = sbr.rel (%p2225) target = $region68
        $region67: #{tpu_custom_call.1} parent=43 // pred_region
          %2229 = vsyncadd %s2206, 0
          %s2230 = smul.addr %s30, 6
          %s2231 = smul.addr %s2230, 8
          %s2232 = scalar_lea.hbm %s7, %s2231
          %s2234 = sshll.u32 %s2209, 4
          %s2235 = int_to_ptr.vmem [resolvable:$true] %s2234
          %s2236 = sshll.u32 %s2232, 4
          %s2237 = int_to_ptr.hbm [resolvable:$true] %s2236
          %2239 = dma.vmem_to_hbm [thread:$0]  %s2235, 768, %s2237, %s2206
        $region68: #{tpu_custom_call.1} parent=43 // pred_fallthru
          _
      $region44: #{tpu_custom_call.1} parent=5 // pred_fallthru
        _
      %p2240 = scmp.le.s32.totalorder 2, %s25
      // Predicated region
      $region69: #{tpu_custom_call.1} parent=5 // pred_check
        %p2241 = pneg %p2240
      $region70: #{tpu_custom_call.1} parent=5 // pred_check_branch
        %2243 = sbr.rel (%p2241) target = $region72
      $region71: #{tpu_custom_call.1} parent=5 // pred_region
        %s2244 = ssub.s32 %s25, 2
        // Predicated region
        $region73: #{tpu_custom_call.1} parent=71 // pred_check
          %p2245 = pneg %p185
        $region74: #{tpu_custom_call.1} parent=71 // pred_check_branch
          %2247 = sbr.rel (%p2245) target = $region76
        $region75: #{tpu_custom_call.1} parent=71 // pred_region
          %s2248 = sand.u32 %s170, 1
          %s2249 = scalar_lea.sflag [#allocation5], %s2248
          %s2250 = sand.u32 %s170, 1
          %s2251 = smul.addr %s2250, 48
          %s2252 = scalar_lea.vmem [#allocation11], %s2251
          %2254 = dma.done %s2249, 768
        $region76: #{tpu_custom_call.1} parent=71 // pred_fallthru
          _
        // Predicated region
        $region77: #{tpu_custom_call.1} parent=71 // pred_check
          %p2255 = pneg %p211
        $region78: #{tpu_custom_call.1} parent=71 // pred_check_branch
          %2257 = sbr.rel (%p2255) target = $region80
        $region79: #{tpu_custom_call.1} parent=71 // pred_region
          %s2258 = sand.u32 %s196, 1
          %s2259 = scalar_lea.sflag [#allocation13], %s2258
          %s2260 = sand.u32 %s196, 1
          %s2261 = smul.addr %s2260, 48
          %s2262 = scalar_lea.vmem [#allocation12], %s2261
          %2264 = dma.done %s2259, 768
        $region80: #{tpu_custom_call.1} parent=71 // pred_fallthru
          _
      $region72: #{tpu_custom_call.1} parent=5 // pred_fallthru
        _
    $region6: #{tpu_custom_call.1} parent=1 // loop_footer
      %s29 = sadd.s32 1, %s25
    $region7: #{tpu_custom_call.1} parent=1 // loop_footer_branch
      %24 = sbr.rel target = $region3
    $region8: #{tpu_custom_call.1} parent=1 // loop_exit
      _
    %2265 = vsyncpa [#allocation4], 1
    %s2266 = scalar_lea.sflag [#allocation4], 1
    %2267 = vsyncpa %s2266, 1
    %2268 = vsyncpa [#allocation7], 1
    %2269 = vsyncpa [#allocation10], 1
    %2270 = vsyncpa [#allocation5], 1
    %s2271 = scalar_lea.sflag [#allocation5], 1
    %2272 = vsyncpa %s2271, 1
    %2273 = vsyncpa [#allocation13], 1
    %s2274 = scalar_lea.sflag [#allocation13], 1
    %2275 = vsyncpa %s2274, 1

</llo_original>
